<compile_context>
chip_gen: v7x
topology: tpu7x:2x2x1
jax: 0.10.0
libtpu: 0.0.40
codegen_flags: <defaults>
</compile_context>

<pallas_src>
import math

import jax
import jax.numpy as jnp
import numpy as np
from jax.experimental import pallas as pl
from jax.experimental.pallas import tpu as pltpu


# ---------------------------------------------------------------------------
# Pallas kernel: whole GRU sequence in one invocation
# ---------------------------------------------------------------------------
def _gru_kernel(x_ref, h0_ref, wx_ref, wzr_h_ref, wn_h_ref, wy_ref, pp_ref,
                h_out_ref, y_out_ref, xzr_scr, xn_scr):
    TB, E = x_ref.shape
    B, H = h0_ref.shape
    T = TB // B
    Vp = wy_ref.shape[1]
    eps = 1e-5  # torch LayerNorm default

    # ---- Packed LayerNorm / bias params: one (8, 128) slab, loaded once.
    pp = pp_ref[...]
    gz, gr = pp[0:1, :H], pp[1:2, :H]
    betz, betr = pp[2:3, :H], pp[3:4, :H]
    gn, betn = pp[4:5, :H], pp[5:6, :H]
    by = pp[6:7, :Vp]                      # logits bias, already lane-padded
    bzrn = pp[7:8, :3 * H]                 # [bz | br | bn]

    # ---- Phase 1: hoisted input projection, ONE fused (E, 3H) matmul with the
    #      gate biases folded in; split once into the two VMEM scratches.
    xproj = (jnp.dot(x_ref[...], wx_ref[...],
                     preferred_element_type=jnp.float32) + bzrn)     # (T*B, 3H)
    xzr_scr[...] = xproj[:, :2 * H]
    xn_scr[...] = xproj[:, 2 * H:]

    # Loop-invariant weights hoisted (no per-iteration reloads/broadcasts).
    wzr_h = wzr_h_ref[...]                                            # (H, 2H) bf16
    wn_h = wn_h_ref[...]                                              # (H, H)  bf16

    # ---- Phase 2: serial recurrence; only h-dependent matmuls remain here.
    def step(t, h_prev):
        row = pl.multiple_of(t * B, 8)
        zr_pre = (jnp.dot(h_prev.astype(jnp.bfloat16), wzr_h,
                          preferred_element_type=jnp.float32)
                  + xzr_scr[pl.ds(row, B), :])                        # (B, 2H)
        z_pre = zr_pre[:, :H]
        r_pre = zr_pre[:, H:]

        # Fused z/r LayerNorm stats: ONE reduction yields mean and
        # mean-of-squares for both gates (single-pass variance; the clamp
        # guards the E[x^2]-E[x]^2 cancellation -- fine at these magnitudes).
        stats = jnp.mean(
            jnp.concatenate([z_pre, r_pre, z_pre * z_pre, r_pre * r_pre],
                            axis=0),
            axis=-1, keepdims=True)                                   # (4B, 1)
        mu_z, mu_r = stats[0:B], stats[B:2 * B]
        e2_z, e2_r = stats[2 * B:3 * B], stats[3 * B:4 * B]
        rs_z = jax.lax.rsqrt(jnp.maximum(e2_z - mu_z * mu_z, 0.0) + eps)
        rs_r = jax.lax.rsqrt(jnp.maximum(e2_r - mu_r * mu_r, 0.0) + eps)
        z = jax.nn.sigmoid((z_pre - mu_z) * rs_z * gz + betz)
        r = jax.nn.sigmoid((r_pre - mu_r) * rs_r * gr + betr)

        n_pre = (jnp.dot((h_prev * r).astype(jnp.bfloat16), wn_h,
                         preferred_element_type=jnp.float32)
                 + xn_scr[pl.ds(row, B), :])                          # (B, H)
        sn = jnp.mean(jnp.concatenate([n_pre, n_pre * n_pre], axis=0),
                      axis=-1, keepdims=True)                         # (2B, 1)
        mu_n, e2_n = sn[0:B], sn[B:2 * B]
        rs_n = jax.lax.rsqrt(jnp.maximum(e2_n - mu_n * mu_n, 0.0) + eps)
        n = jnp.tanh((n_pre - mu_n) * rs_n * gn + betn)

        h_t = h_prev + z * (n - h_prev)       # == (1-z)*h_prev + z*n
        # Per-step store hits only the VMEM output buffer; the HBM writeback of
        # the whole (T*B, H) slab happens once after the kernel body.
        h_out_ref[pl.ds(row, B), :] = h_t
        return h_t

    jax.lax.fori_loop(0, T, step, h0_ref[...], unroll=True)

    # ---- Phase 3: logits off the critical path -- one wide matmul against the
    #      lane-padded (H, Vp=128) weight; fully dense (unmasked) slab store.
    h_all = h_out_ref[...]                                            # (T*B, H)
    y = (jnp.dot(h_all.astype(jnp.bfloat16), wy_ref[...],
                 preferred_element_type=jnp.float32) + by)            # (T*B, Vp)
    y_out_ref[...] = y


# ---------------------------------------------------------------------------
# Wrapper: embedding lookup (glue) + single pallas_call (no grid)
# ---------------------------------------------------------------------------
def gru_forward(tokens, params, h_init=None):
    B, T = tokens.shape
    E = params["embed"].shape[1]
    H = params["wy"].shape[0]
    V = params["wy"].shape[1]
    Vp = ((V + 127) // 128) * 128            # lane-dense logits width
    slab_w = max(Vp, 3 * H, 128)

    # Embedding lookup is glue (gather); the hot path is in-kernel.
    x_emb = jnp.take(params["embed"], tokens, axis=0)                 # (B, T, E)
    # Time-major, pre-flattened (T*B, E) so no in-kernel relayout; bf16 operand.
    x_tm = (jnp.transpose(x_emb, (1, 0, 2))
            .reshape(T * B, E).astype(jnp.bfloat16))

    if h_init is None:
        h_init = jnp.zeros((B, H), dtype=jnp.float32)

    # Fused weights (glue, once per call). wz/wr/wn are stored pre-transposed
    # as (H+E, H); first H rows hit h_prev, remaining E rows hit x.
    wzr_h = jnp.concatenate([params["wz"][:H], params["wr"][:H]],
                            axis=1).astype(jnp.bfloat16)              # (H, 2H)
    wn_h = params["wn"][:H].astype(jnp.bfloat16)                      # (H, H)
    wx = jnp.concatenate([params["wz"][H:], params["wr"][H:],
                          params["wn"][H:]], axis=1).astype(jnp.bfloat16)  # (E, 3H)
    wy_p = (jnp.zeros((H, Vp), jnp.float32)
            .at[:, :V].set(params["wy"]).astype(jnp.bfloat16))        # (H, Vp)

    # Pack every tiny LayerNorm/bias param into one (8, slab_w) f32 slab.
    pp = jnp.zeros((8, slab_w), jnp.float32)
    pp = pp.at[0, :H].set(params["gz"][0])
    pp = pp.at[1, :H].set(params["gr"][0])
    pp = pp.at[2, :H].set(params["betz"][0])
    pp = pp.at[3, :H].set(params["betr"][0])
    pp = pp.at[4, :H].set(params["gn"][0])
    pp = pp.at[5, :H].set(params["betn"][0])
    pp = pp.at[6, :V].set(params["by"][0])
    pp = pp.at[7, :H].set(params["bz"][0])
    pp = pp.at[7, H:2 * H].set(params["br"][0])
    pp = pp.at[7, 2 * H:3 * H].set(params["bn"][0])

    h_slab, y_slab = pl.pallas_call(
        _gru_kernel,
        out_shape=(jax.ShapeDtypeStruct((T * B, H), jnp.float32),
                   jax.ShapeDtypeStruct((T * B, Vp), jnp.float32)),
        # No grid: weights + activations are a few hundred KiB -> VMEM-resident
        # on all of v5e / v6e / v7x.
        scratch_shapes=[
            pltpu.VMEM((T * B, 2 * H), jnp.float32),   # hoisted x-proj (z|r)
            pltpu.VMEM((T * B, H), jnp.float32),       # hoisted x-proj (n)
        ],
        compiler_params=pltpu.CompilerParams(
            vmem_limit_bytes=32 * 1024 * 1024),
    )(x_tm, h_init, wx, wzr_h, wn_h, wy_p, pp)

    # Back to PyTorch (B, T, ...) ordering; strip the logits lane padding.
    h_out = h_slab.reshape(T, B, H).transpose(1, 0, 2)
    y_out = y_slab.reshape(T, B, Vp)[:, :, :V].transpose(1, 0, 2)
    return h_out, y_out


# ---------------------------------------------------------------------------
# Pure-JAX f32 reference (mirrors the PyTorch forward exactly)
# ---------------------------------------------------------------------------
def gru_reference(tokens, params, h_init=None):
    B, T = tokens.shape
    H = params["wy"].shape[0]
    x_emb = jnp.take(params["embed"], tokens, axis=0)
    if h_init is None:
        h_init = jnp.zeros((B, H), dtype=jnp.float32)

    def ln(v, g, b):
        mu = jnp.mean(v, axis=-1, keepdims=True)
        var = jnp.mean((v - mu) ** 2, axis=-1, keepdims=True)
        return (v - mu) * jax.lax.rsqrt(var + 1e-5) * g + b

    h = h_init
    hs, ys = [], []
    for t in range(T):
        x_t = x_emb[:, t, :]
        gru_in = jnp.concatenate([h, x_t], axis=-1)
        z = jax.nn.sigmoid(ln(gru_in @ params["wz"] + params["bz"],
                              params["gz"], params["betz"]))
        r = jax.nn.sigmoid(ln(gru_in @ params["wr"] + params["br"],
                              params["gr"], params["betr"]))
        n_in = jnp.concatenate([h * r, x_t], axis=-1)
        n = jnp.tanh(ln(n_in @ params["wn"] + params["bn"],
                        params["gn"], params["betn"]))
        h = (1.0 - z) * h + z * n
        y = h @ params["wy"] + params["by"]
        hs.append(h)
        ys.append(y)
    return jnp.stack(hs, axis=1), jnp.stack(ys, axis=1)


# ---------------------------------------------------------------------------
# Deterministic parameter init (shapes from the module __init__)
# ---------------------------------------------------------------------------
def make_params(vocab_size, embed_dim, hidden_dim, key):
    E, H, V = embed_dim, hidden_dim, vocab_size
    ks = jax.random.split(key, 9)
    b_in = 1.0 / math.sqrt(E + H)    # Linear(E+H -> H) init bound
    b_out = 1.0 / math.sqrt(H)       # Linear(H -> V) init bound
    u = lambda k, shape, b: jax.random.uniform(
        k, shape, dtype=jnp.float32, minval=-b, maxval=b)
    return {
        "embed": jax.random.normal(ks[0], (V, E), dtype=jnp.float32),
        # gate weights stored pre-transposed: (H+E, H), first H rows hit h_prev
        "wz": u(ks[1], (H + E, H), b_in), "bz": u(ks[2], (1, H), b_in),
        "gz": jnp.ones((1, H), jnp.float32), "betz": jnp.zeros((1, H), jnp.float32),
        "wr": u(ks[3], (H + E, H), b_in), "br": u(ks[4], (1, H), b_in),
        "gr": jnp.ones((1, H), jnp.float32), "betr": jnp.zeros((1, H), jnp.float32),
        "wn": u(ks[5], (H + E, H), b_in), "bn": u(ks[6], (1, H), b_in),
        "gn": jnp.ones((1, H), jnp.float32), "betn": jnp.zeros((1, H), jnp.float32),
        "wy": u(ks[7], (H, V), b_out), "by": u(ks[8], (1, V), b_out),
    }


if __name__ == "__main__":
    # Small shapes consistent with the module: embed_dim == hidden_embed_dim
    # (the PyTorch code stores h into a buffer shaped like the embeddings).
    B, T, E, H, V = 8, 16, 32, 32, 16

    key = jax.random.PRNGKey(0)
    pkey, tkey = jax.random.split(key)
    params = make_params(vocab_size=V, embed_dim=E, hidden_dim=H, key=pkey)
    tokens = jax.random.randint(tkey, (B, T), 0, V, dtype=jnp.int32)

    h_out, y_out = jax.jit(gru_forward)(tokens, params)
    jax.block_until_ready((h_out, y_out))

    # bf16 matmul operands (per the perf review) change numerics slightly vs.
    # the f32 reference -> relaxed tolerance.
    h_ref, y_ref = gru_reference(tokens, params)
    np.testing.assert_allclose(np.asarray(h_out), np.asarray(h_ref),
                               rtol=5e-2, atol=5e-2)
    np.testing.assert_allclose(np.asarray(y_out), np.asarray(y_ref),
                               rtol=5e-2, atol=5e-2)

    assert h_out.shape == (B, T, H) and y_out.shape == (B, T, V)
    print("KERNEL_OK")
</pallas_src>

<mosaic_0001>
module attributes {stable_mosaic.version = 11 : i64} {
  func.func @_gru_kernel(%arg0: memref<128x32xbf16, #tpu.memory_space<vmem>>, %arg1: memref<8x32xf32, #tpu.memory_space<vmem>>, %arg2: memref<32x96xbf16, #tpu.memory_space<vmem>>, %arg3: memref<32x64xbf16, #tpu.memory_space<vmem>>, %arg4: memref<32x32xbf16, #tpu.memory_space<vmem>>, %arg5: memref<32x128xbf16, #tpu.memory_space<vmem>>, %arg6: memref<8x128xf32, #tpu.memory_space<vmem>>, %arg7: memref<128x32xf32, #tpu.memory_space<vmem>>, %arg8: memref<128x128xf32, #tpu.memory_space<vmem>>, %arg9: memref<128x64xf32, #tpu.memory_space<vmem>>, %arg10: memref<128x32xf32, #tpu.memory_space<vmem>>) attributes {dimension_semantics = [], scalar_prefetch = 0 : i64, scratch_operands = 2 : i64, tpu.core_type = #tpu.core_type<tc>} {
    %c0 = arith.constant 0 : index
    %c0_0 = arith.constant 0 : index
    %0 = vector.load %arg6[%c0, %c0_0] : memref<8x128xf32, #tpu.memory_space<vmem>>, vector<8x128xf32>
    %1 = vector.extract_strided_slice %0 {offsets = [0, 0], sizes = [1, 32], strides = [1, 1]} : vector<8x128xf32> to vector<1x32xf32>
    %2 = vector.extract_strided_slice %0 {offsets = [1, 0], sizes = [1, 32], strides = [1, 1]} : vector<8x128xf32> to vector<1x32xf32>
    %3 = vector.extract_strided_slice %0 {offsets = [2, 0], sizes = [1, 32], strides = [1, 1]} : vector<8x128xf32> to vector<1x32xf32>
    %4 = vector.extract_strided_slice %0 {offsets = [3, 0], sizes = [1, 32], strides = [1, 1]} : vector<8x128xf32> to vector<1x32xf32>
    %5 = vector.extract_strided_slice %0 {offsets = [4, 0], sizes = [1, 32], strides = [1, 1]} : vector<8x128xf32> to vector<1x32xf32>
    %6 = vector.extract_strided_slice %0 {offsets = [5, 0], sizes = [1, 32], strides = [1, 1]} : vector<8x128xf32> to vector<1x32xf32>
    %7 = vector.extract_strided_slice %0 {offsets = [6, 0], sizes = [1, 128], strides = [1, 1]} : vector<8x128xf32> to vector<1x128xf32>
    %8 = vector.extract_strided_slice %0 {offsets = [7, 0], sizes = [1, 96], strides = [1, 1]} : vector<8x128xf32> to vector<1x96xf32>
    %c0_1 = arith.constant 0 : index
    %c0_2 = arith.constant 0 : index
    %9 = vector.load %arg0[%c0_1, %c0_2] : memref<128x32xbf16, #tpu.memory_space<vmem>>, vector<128x32xbf16>
    %c0_3 = arith.constant 0 : index
    %c0_4 = arith.constant 0 : index
    %10 = vector.load %arg2[%c0_3, %c0_4] : memref<32x96xbf16, #tpu.memory_space<vmem>>, vector<32x96xbf16>
    %cst = arith.constant dense<0.000000e+00> : vector<128x96xf32>
    %11 = tpu.matmul %9, %10, %cst {dimension_numbers = #tpu.dot_dimension_numbers<[1], [0], [0], [1], [0, 0, 1, 1], [], []>} : vector<128x32xbf16>, vector<32x96xbf16>, vector<128x96xf32> -> vector<128x96xf32>
    %12 = vector.broadcast %8 : vector<1x96xf32> to vector<128x96xf32>
    %13 = arith.addf %11, %12 : vector<128x96xf32>
    %14 = vector.extract_strided_slice %13 {offsets = [0, 0], sizes = [128, 64], strides = [1, 1]} : vector<128x96xf32> to vector<128x64xf32>
    %c0_5 = arith.constant 0 : index
    %c0_6 = arith.constant 0 : index
    %15 = vector.load %arg9[%c0_5, %c0_6] : memref<128x64xf32, #tpu.memory_space<vmem>>, vector<128x64xf32>
    tpu.vector_store %arg9[%c0_5, %c0_6], %14 {strides = array<i32>} : memref<128x64xf32, #tpu.memory_space<vmem>>, vector<128x64xf32>,
    %16 = vector.extract_strided_slice %13 {offsets = [0, 64], sizes = [128, 32], strides = [1, 1]} : vector<128x96xf32> to vector<128x32xf32>
    %c0_7 = arith.constant 0 : index
    %c0_8 = arith.constant 0 : index
    %17 = vector.load %arg10[%c0_7, %c0_8] : memref<128x32xf32, #tpu.memory_space<vmem>>, vector<128x32xf32>
    tpu.vector_store %arg10[%c0_7, %c0_8], %16 {strides = array<i32>} : memref<128x32xf32, #tpu.memory_space<vmem>>, vector<128x32xf32>,
    %c0_9 = arith.constant 0 : index
    %c0_10 = arith.constant 0 : index
    %18 = vector.load %arg3[%c0_9, %c0_10] : memref<32x64xbf16, #tpu.memory_space<vmem>>, vector<32x64xbf16>
    %c0_11 = arith.constant 0 : index
    %c0_12 = arith.constant 0 : index
    %19 = vector.load %arg4[%c0_11, %c0_12] : memref<32x32xbf16, #tpu.memory_space<vmem>>, vector<32x32xbf16>
    %c0_13 = arith.constant 0 : index
    %c0_14 = arith.constant 0 : index
    %20 = vector.load %arg1[%c0_13, %c0_14] : memref<8x32xf32, #tpu.memory_space<vmem>>, vector<8x32xf32>
    %c0_i32 = arith.constant 0 : i32
    %c8_i32 = arith.constant 8 : i32
    %21 = arith.muli %c0_i32, %c8_i32 : i32
    %22 = tpu.assume_multiple %21, 8 : i32
    %23 = arith.truncf %20 : vector<8x32xf32> to vector<8x32xbf16>
    %cst_15 = arith.constant dense<0.000000e+00> : vector<8x64xf32>
    %24 = tpu.matmul %23, %18, %cst_15 {dimension_numbers = #tpu.dot_dimension_numbers<[1], [0], [0], [1], [0, 0, 1, 1], [], []>} : vector<8x32xbf16>, vector<32x64xbf16>, vector<8x64xf32> -> vector<8x64xf32>
    %25 = arith.index_cast %22 : i32 to index
    %c0_16 = arith.constant 0 : index
    %26 = vector.load %arg9[%25, %c0_16] : memref<128x64xf32, #tpu.memory_space<vmem>>, vector<8x64xf32>
    %27 = arith.addf %24, %26 : vector<8x64xf32>
    %28 = vector.extract_strided_slice %27 {offsets = [0, 0], sizes = [8, 32], strides = [1, 1]} : vector<8x64xf32> to vector<8x32xf32>
    %29 = vector.extract_strided_slice %27 {offsets = [0, 32], sizes = [8, 32], strides = [1, 1]} : vector<8x64xf32> to vector<8x32xf32>
    %30 = arith.mulf %28, %28 : vector<8x32xf32>
    %31 = arith.mulf %29, %29 : vector<8x32xf32>
    %32 = tpu.concatenate %28, %29, %30, %31 in 0 : vector<8x32xf32>, vector<8x32xf32>, vector<8x32xf32>, vector<8x32xf32> -> vector<32x32xf32>
    %cst_17 = arith.constant dense<0.000000e+00> : vector<32xf32>
    %33 = vector.multi_reduction <add>, %32, %cst_17 [1] : vector<32x32xf32> to vector<32xf32>
    %34 = vector.shape_cast %33 : vector<32xf32> to vector<32x1xf32>
    %cst_18 = arith.constant 3.200000e+01 : f32
    %35 = vector.broadcast %cst_18 : f32 to vector<32x1xf32>
    %36 = arith.divf %34, %35 : vector<32x1xf32>
    %37 = vector.extract_strided_slice %36 {offsets = [0, 0], sizes = [8, 1], strides = [1, 1]} : vector<32x1xf32> to vector<8x1xf32>
    %38 = vector.extract_strided_slice %36 {offsets = [8, 0], sizes = [8, 1], strides = [1, 1]} : vector<32x1xf32> to vector<8x1xf32>
    %39 = vector.extract_strided_slice %36 {offsets = [16, 0], sizes = [8, 1], strides = [1, 1]} : vector<32x1xf32> to vector<8x1xf32>
    %40 = vector.extract_strided_slice %36 {offsets = [24, 0], sizes = [8, 1], strides = [1, 1]} : vector<32x1xf32> to vector<8x1xf32>
    %41 = arith.mulf %37, %37 : vector<8x1xf32>
    %42 = arith.subf %39, %41 : vector<8x1xf32>
    %cst_19 = arith.constant 0.000000e+00 : f32
    %43 = vector.broadcast %cst_19 : f32 to vector<8x1xf32>
    %44 = arith.maximumf %42, %43 : vector<8x1xf32>
    %cst_20 = arith.constant 9.99999974E-6 : f32
    %45 = vector.broadcast %cst_20 : f32 to vector<8x1xf32>
    %46 = arith.addf %44, %45 : vector<8x1xf32>
    %47 = math.rsqrt %46 : vector<8x1xf32>
    %48 = arith.mulf %38, %38 : vector<8x1xf32>
    %49 = arith.subf %40, %48 : vector<8x1xf32>
    %cst_21 = arith.constant 0.000000e+00 : f32
    %50 = vector.broadcast %cst_21 : f32 to vector<8x1xf32>
    %51 = arith.maximumf %49, %50 : vector<8x1xf32>
    %cst_22 = arith.constant 9.99999974E-6 : f32
    %52 = vector.broadcast %cst_22 : f32 to vector<8x1xf32>
    %53 = arith.addf %51, %52 : vector<8x1xf32>
    %54 = math.rsqrt %53 : vector<8x1xf32>
    %55 = vector.broadcast %37 : vector<8x1xf32> to vector<8x32xf32>
    %56 = arith.subf %28, %55 : vector<8x32xf32>
    %57 = vector.broadcast %47 : vector<8x1xf32> to vector<8x32xf32>
    %58 = arith.mulf %56, %57 : vector<8x32xf32>
    %59 = vector.broadcast %1 : vector<1x32xf32> to vector<8x32xf32>
    %60 = arith.mulf %58, %59 : vector<8x32xf32>
    %61 = vector.broadcast %3 : vector<1x32xf32> to vector<8x32xf32>
    %62 = arith.addf %60, %61 : vector<8x32xf32>
    %63 = arith.negf %62 : vector<8x32xf32>
    %64 = math.exp %63 : vector<8x32xf32>
    %cst_23 = arith.constant 1.000000e+00 : f32
    %65 = vector.broadcast %cst_23 : f32 to vector<8x32xf32>
    %66 = arith.addf %65, %64 : vector<8x32xf32>
    %67 = arith.divf %65, %66 : vector<8x32xf32>
    %68 = vector.broadcast %38 : vector<8x1xf32> to vector<8x32xf32>
    %69 = arith.subf %29, %68 : vector<8x32xf32>
    %70 = vector.broadcast %54 : vector<8x1xf32> to vector<8x32xf32>
    %71 = arith.mulf %69, %70 : vector<8x32xf32>
    %72 = vector.broadcast %2 : vector<1x32xf32> to vector<8x32xf32>
    %73 = arith.mulf %71, %72 : vector<8x32xf32>
    %74 = vector.broadcast %4 : vector<1x32xf32> to vector<8x32xf32>
    %75 = arith.addf %73, %74 : vector<8x32xf32>
    %76 = arith.negf %75 : vector<8x32xf32>
    %77 = math.exp %76 : vector<8x32xf32>
    %cst_24 = arith.constant 1.000000e+00 : f32
    %78 = vector.broadcast %cst_24 : f32 to vector<8x32xf32>
    %79 = arith.addf %78, %77 : vector<8x32xf32>
    %80 = arith.divf %78, %79 : vector<8x32xf32>
    %81 = arith.mulf %20, %80 : vector<8x32xf32>
    %82 = arith.truncf %81 : vector<8x32xf32> to vector<8x32xbf16>
    %cst_25 = arith.constant dense<0.000000e+00> : vector<8x32xf32>
    %83 = tpu.matmul %82, %19, %cst_25 {dimension_numbers = #tpu.dot_dimension_numbers<[1], [0], [0], [1], [0, 0, 1, 1], [], []>} : vector<8x32xbf16>, vector<32x32xbf16>, vector<8x32xf32> -> vector<8x32xf32>
    %84 = arith.index_cast %22 : i32 to index
    %c0_26 = arith.constant 0 : index
    %85 = vector.load %arg10[%84, %c0_26] : memref<128x32xf32, #tpu.memory_space<vmem>>, vector<8x32xf32>
    %86 = arith.addf %83, %85 : vector<8x32xf32>
    %87 = arith.mulf %86, %86 : vector<8x32xf32>
    %88 = tpu.concatenate %86, %87 in 0 : vector<8x32xf32>, vector<8x32xf32> -> vector<16x32xf32>
    %cst_27 = arith.constant dense<0.000000e+00> : vector<16xf32>
    %89 = vector.multi_reduction <add>, %88, %cst_27 [1] : vector<16x32xf32> to vector<16xf32>
    %90 = vector.shape_cast %89 : vector<16xf32> to vector<16x1xf32>
    %cst_28 = arith.constant 3.200000e+01 : f32
    %91 = vector.broadcast %cst_28 : f32 to vector<16x1xf32>
    %92 = arith.divf %90, %91 : vector<16x1xf32>
    %93 = vector.extract_strided_slice %92 {offsets = [0, 0], sizes = [8, 1], strides = [1, 1]} : vector<16x1xf32> to vector<8x1xf32>
    %94 = vector.extract_strided_slice %92 {offsets = [8, 0], sizes = [8, 1], strides = [1, 1]} : vector<16x1xf32> to vector<8x1xf32>
    %95 = arith.mulf %93, %93 : vector<8x1xf32>
    %96 = arith.subf %94, %95 : vector<8x1xf32>
    %cst_29 = arith.constant 0.000000e+00 : f32
    %97 = vector.broadcast %cst_29 : f32 to vector<8x1xf32>
    %98 = arith.maximumf %96, %97 : vector<8x1xf32>
    %cst_30 = arith.constant 9.99999974E-6 : f32
    %99 = vector.broadcast %cst_30 : f32 to vector<8x1xf32>
    %100 = arith.addf %98, %99 : vector<8x1xf32>
    %101 = math.rsqrt %100 : vector<8x1xf32>
    %102 = vector.broadcast %93 : vector<8x1xf32> to vector<8x32xf32>
    %103 = arith.subf %86, %102 : vector<8x32xf32>
    %104 = vector.broadcast %101 : vector<8x1xf32> to vector<8x32xf32>
    %105 = arith.mulf %103, %104 : vector<8x32xf32>
    %106 = vector.broadcast %5 : vector<1x32xf32> to vector<8x32xf32>
    %107 = arith.mulf %105, %106 : vector<8x32xf32>
    %108 = vector.broadcast %6 : vector<1x32xf32> to vector<8x32xf32>
    %109 = arith.addf %107, %108 : vector<8x32xf32>
    %110 = math.tanh %109 : vector<8x32xf32>
    %111 = arith.subf %110, %20 : vector<8x32xf32>
    %112 = arith.mulf %67, %111 : vector<8x32xf32>
    %113 = arith.addf %20, %112 : vector<8x32xf32>
    %114 = arith.index_cast %22 : i32 to index
    %c0_31 = arith.constant 0 : index
    %115 = vector.load %arg7[%114, %c0_31] : memref<128x32xf32, #tpu.memory_space<vmem>>, vector<8x32xf32>
    tpu.vector_store %arg7[%114, %c0_31], %113 {strides = array<i32>} : memref<128x32xf32, #tpu.memory_space<vmem>>, vector<8x32xf32>,
    %c1_i32 = arith.constant 1 : i32
    %c8_i32_32 = arith.constant 8 : i32
    %116 = arith.muli %c1_i32, %c8_i32_32 : i32
    %117 = tpu.assume_multiple %116, 8 : i32
    %118 = arith.truncf %113 : vector<8x32xf32> to vector<8x32xbf16>
    %cst_33 = arith.constant dense<0.000000e+00> : vector<8x64xf32>
    %119 = tpu.matmul %118, %18, %cst_33 {dimension_numbers = #tpu.dot_dimension_numbers<[1], [0], [0], [1], [0, 0, 1, 1], [], []>} : vector<8x32xbf16>, vector<32x64xbf16>, vector<8x64xf32> -> vector<8x64xf32>
    %120 = arith.index_cast %117 : i32 to index
    %c0_34 = arith.constant 0 : index
    %121 = vector.load %arg9[%120, %c0_34] : memref<128x64xf32, #tpu.memory_space<vmem>>, vector<8x64xf32>
    %122 = arith.addf %119, %121 : vector<8x64xf32>
    %123 = vector.extract_strided_slice %122 {offsets = [0, 0], sizes = [8, 32], strides = [1, 1]} : vector<8x64xf32> to vector<8x32xf32>
    %124 = vector.extract_strided_slice %122 {offsets = [0, 32], sizes = [8, 32], strides = [1, 1]} : vector<8x64xf32> to vector<8x32xf32>
    %125 = arith.mulf %123, %123 : vector<8x32xf32>
    %126 = arith.mulf %124, %124 : vector<8x32xf32>
    %127 = tpu.concatenate %123, %124, %125, %126 in 0 : vector<8x32xf32>, vector<8x32xf32>, vector<8x32xf32>, vector<8x32xf32> -> vector<32x32xf32>
    %cst_35 = arith.constant dense<0.000000e+00> : vector<32xf32>
    %128 = vector.multi_reduction <add>, %127, %cst_35 [1] : vector<32x32xf32> to vector<32xf32>
    %129 = vector.shape_cast %128 : vector<32xf32> to vector<32x1xf32>
    %cst_36 = arith.constant 3.200000e+01 : f32
    %130 = vector.broadcast %cst_36 : f32 to vector<32x1xf32>
    %131 = arith.divf %129, %130 : vector<32x1xf32>
    %132 = vector.extract_strided_slice %131 {offsets = [0, 0], sizes = [8, 1], strides = [1, 1]} : vector<32x1xf32> to vector<8x1xf32>
    %133 = vector.extract_strided_slice %131 {offsets = [8, 0], sizes = [8, 1], strides = [1, 1]} : vector<32x1xf32> to vector<8x1xf32>
    %134 = vector.extract_strided_slice %131 {offsets = [16, 0], sizes = [8, 1], strides = [1, 1]} : vector<32x1xf32> to vector<8x1xf32>
    %135 = vector.extract_strided_slice %131 {offsets = [24, 0], sizes = [8, 1], strides = [1, 1]} : vector<32x1xf32> to vector<8x1xf32>
    %136 = arith.mulf %132, %132 : vector<8x1xf32>
    %137 = arith.subf %134, %136 : vector<8x1xf32>
    %cst_37 = arith.constant 0.000000e+00 : f32
    %138 = vector.broadcast %cst_37 : f32 to vector<8x1xf32>
    %139 = arith.maximumf %137, %138 : vector<8x1xf32>
    %cst_38 = arith.constant 9.99999974E-6 : f32
    %140 = vector.broadcast %cst_38 : f32 to vector<8x1xf32>
    %141 = arith.addf %139, %140 : vector<8x1xf32>
    %142 = math.rsqrt %141 : vector<8x1xf32>
    %143 = arith.mulf %133, %133 : vector<8x1xf32>
    %144 = arith.subf %135, %143 : vector<8x1xf32>
    %cst_39 = arith.constant 0.000000e+00 : f32
    %145 = vector.broadcast %cst_39 : f32 to vector<8x1xf32>
    %146 = arith.maximumf %144, %145 : vector<8x1xf32>
    %cst_40 = arith.constant 9.99999974E-6 : f32
    %147 = vector.broadcast %cst_40 : f32 to vector<8x1xf32>
    %148 = arith.addf %146, %147 : vector<8x1xf32>
    %149 = math.rsqrt %148 : vector<8x1xf32>
    %150 = vector.broadcast %132 : vector<8x1xf32> to vector<8x32xf32>
    %151 = arith.subf %123, %150 : vector<8x32xf32>
    %152 = vector.broadcast %142 : vector<8x1xf32> to vector<8x32xf32>
    %153 = arith.mulf %151, %152 : vector<8x32xf32>
    %154 = vector.broadcast %1 : vector<1x32xf32> to vector<8x32xf32>
    %155 = arith.mulf %153, %154 : vector<8x32xf32>
    %156 = vector.broadcast %3 : vector<1x32xf32> to vector<8x32xf32>
    %157 = arith.addf %155, %156 : vector<8x32xf32>
    %158 = arith.negf %157 : vector<8x32xf32>
    %159 = math.exp %158 : vector<8x32xf32>
    %cst_41 = arith.constant 1.000000e+00 : f32
    %160 = vector.broadcast %cst_41 : f32 to vector<8x32xf32>
    %161 = arith.addf %160, %159 : vector<8x32xf32>
    %162 = arith.divf %160, %161 : vector<8x32xf32>
    %163 = vector.broadcast %133 : vector<8x1xf32> to vector<8x32xf32>
    %164 = arith.subf %124, %163 : vector<8x32xf32>
    %165 = vector.broadcast %149 : vector<8x1xf32> to vector<8x32xf32>
    %166 = arith.mulf %164, %165 : vector<8x32xf32>
    %167 = vector.broadcast %2 : vector<1x32xf32> to vector<8x32xf32>
    %168 = arith.mulf %166, %167 : vector<8x32xf32>
    %169 = vector.broadcast %4 : vector<1x32xf32> to vector<8x32xf32>
    %170 = arith.addf %168, %169 : vector<8x32xf32>
    %171 = arith.negf %170 : vector<8x32xf32>
    %172 = math.exp %171 : vector<8x32xf32>
    %cst_42 = arith.constant 1.000000e+00 : f32
    %173 = vector.broadcast %cst_42 : f32 to vector<8x32xf32>
    %174 = arith.addf %173, %172 : vector<8x32xf32>
    %175 = arith.divf %173, %174 : vector<8x32xf32>
    %176 = arith.mulf %113, %175 : vector<8x32xf32>
    %177 = arith.truncf %176 : vector<8x32xf32> to vector<8x32xbf16>
    %cst_43 = arith.constant dense<0.000000e+00> : vector<8x32xf32>
    %178 = tpu.matmul %177, %19, %cst_43 {dimension_numbers = #tpu.dot_dimension_numbers<[1], [0], [0], [1], [0, 0, 1, 1], [], []>} : vector<8x32xbf16>, vector<32x32xbf16>, vector<8x32xf32> -> vector<8x32xf32>
    %179 = arith.index_cast %117 : i32 to index
    %c0_44 = arith.constant 0 : index
    %180 = vector.load %arg10[%179, %c0_44] : memref<128x32xf32, #tpu.memory_space<vmem>>, vector<8x32xf32>
    %181 = arith.addf %178, %180 : vector<8x32xf32>
    %182 = arith.mulf %181, %181 : vector<8x32xf32>
    %183 = tpu.concatenate %181, %182 in 0 : vector<8x32xf32>, vector<8x32xf32> -> vector<16x32xf32>
    %cst_45 = arith.constant dense<0.000000e+00> : vector<16xf32>
    %184 = vector.multi_reduction <add>, %183, %cst_45 [1] : vector<16x32xf32> to vector<16xf32>
    %185 = vector.shape_cast %184 : vector<16xf32> to vector<16x1xf32>
    %cst_46 = arith.constant 3.200000e+01 : f32
    %186 = vector.broadcast %cst_46 : f32 to vector<16x1xf32>
    %187 = arith.divf %185, %186 : vector<16x1xf32>
    %188 = vector.extract_strided_slice %187 {offsets = [0, 0], sizes = [8, 1], strides = [1, 1]} : vector<16x1xf32> to vector<8x1xf32>
    %189 = vector.extract_strided_slice %187 {offsets = [8, 0], sizes = [8, 1], strides = [1, 1]} : vector<16x1xf32> to vector<8x1xf32>
    %190 = arith.mulf %188, %188 : vector<8x1xf32>
    %191 = arith.subf %189, %190 : vector<8x1xf32>
    %cst_47 = arith.constant 0.000000e+00 : f32
    %192 = vector.broadcast %cst_47 : f32 to vector<8x1xf32>
    %193 = arith.maximumf %191, %192 : vector<8x1xf32>
    %cst_48 = arith.constant 9.99999974E-6 : f32
    %194 = vector.broadcast %cst_48 : f32 to vector<8x1xf32>
    %195 = arith.addf %193, %194 : vector<8x1xf32>
    %196 = math.rsqrt %195 : vector<8x1xf32>
    %197 = vector.broadcast %188 : vector<8x1xf32> to vector<8x32xf32>
    %198 = arith.subf %181, %197 : vector<8x32xf32>
    %199 = vector.broadcast %196 : vector<8x1xf32> to vector<8x32xf32>
    %200 = arith.mulf %198, %199 : vector<8x32xf32>
    %201 = vector.broadcast %5 : vector<1x32xf32> to vector<8x32xf32>
    %202 = arith.mulf %200, %201 : vector<8x32xf32>
    %203 = vector.broadcast %6 : vector<1x32xf32> to vector<8x32xf32>
    %204 = arith.addf %202, %203 : vector<8x32xf32>
    %205 = math.tanh %204 : vector<8x32xf32>
    %206 = arith.subf %205, %113 : vector<8x32xf32>
    %207 = arith.mulf %162, %206 : vector<8x32xf32>
    %208 = arith.addf %113, %207 : vector<8x32xf32>
    %209 = arith.index_cast %117 : i32 to index
    %c0_49 = arith.constant 0 : index
    %210 = vector.load %arg7[%209, %c0_49] : memref<128x32xf32, #tpu.memory_space<vmem>>, vector<8x32xf32>
    tpu.vector_store %arg7[%209, %c0_49], %208 {strides = array<i32>} : memref<128x32xf32, #tpu.memory_space<vmem>>, vector<8x32xf32>,
    %c2_i32 = arith.constant 2 : i32
    %c8_i32_50 = arith.constant 8 : i32
    %211 = arith.muli %c2_i32, %c8_i32_50 : i32
    %212 = tpu.assume_multiple %211, 8 : i32
    %213 = arith.truncf %208 : vector<8x32xf32> to vector<8x32xbf16>
    %cst_51 = arith.constant dense<0.000000e+00> : vector<8x64xf32>
    %214 = tpu.matmul %213, %18, %cst_51 {dimension_numbers = #tpu.dot_dimension_numbers<[1], [0], [0], [1], [0, 0, 1, 1], [], []>} : vector<8x32xbf16>, vector<32x64xbf16>, vector<8x64xf32> -> vector<8x64xf32>
    %215 = arith.index_cast %212 : i32 to index
    %c0_52 = arith.constant 0 : index
    %216 = vector.load %arg9[%215, %c0_52] : memref<128x64xf32, #tpu.memory_space<vmem>>, vector<8x64xf32>
    %217 = arith.addf %214, %216 : vector<8x64xf32>
    %218 = vector.extract_strided_slice %217 {offsets = [0, 0], sizes = [8, 32], strides = [1, 1]} : vector<8x64xf32> to vector<8x32xf32>
    %219 = vector.extract_strided_slice %217 {offsets = [0, 32], sizes = [8, 32], strides = [1, 1]} : vector<8x64xf32> to vector<8x32xf32>
    %220 = arith.mulf %218, %218 : vector<8x32xf32>
    %221 = arith.mulf %219, %219 : vector<8x32xf32>
    %222 = tpu.concatenate %218, %219, %220, %221 in 0 : vector<8x32xf32>, vector<8x32xf32>, vector<8x32xf32>, vector<8x32xf32> -> vector<32x32xf32>
    %cst_53 = arith.constant dense<0.000000e+00> : vector<32xf32>
    %223 = vector.multi_reduction <add>, %222, %cst_53 [1] : vector<32x32xf32> to vector<32xf32>
    %224 = vector.shape_cast %223 : vector<32xf32> to vector<32x1xf32>
    %cst_54 = arith.constant 3.200000e+01 : f32
    %225 = vector.broadcast %cst_54 : f32 to vector<32x1xf32>
    %226 = arith.divf %224, %225 : vector<32x1xf32>
    %227 = vector.extract_strided_slice %226 {offsets = [0, 0], sizes = [8, 1], strides = [1, 1]} : vector<32x1xf32> to vector<8x1xf32>
    %228 = vector.extract_strided_slice %226 {offsets = [8, 0], sizes = [8, 1], strides = [1, 1]} : vector<32x1xf32> to vector<8x1xf32>
    %229 = vector.extract_strided_slice %226 {offsets = [16, 0], sizes = [8, 1], strides = [1, 1]} : vector<32x1xf32> to vector<8x1xf32>
    %230 = vector.extract_strided_slice %226 {offsets = [24, 0], sizes = [8, 1], strides = [1, 1]} : vector<32x1xf32> to vector<8x1xf32>
    %231 = arith.mulf %227, %227 : vector<8x1xf32>
    %232 = arith.subf %229, %231 : vector<8x1xf32>
    %cst_55 = arith.constant 0.000000e+00 : f32
    %233 = vector.broadcast %cst_55 : f32 to vector<8x1xf32>
    %234 = arith.maximumf %232, %233 : vector<8x1xf32>
    %cst_56 = arith.constant 9.99999974E-6 : f32
    %235 = vector.broadcast %cst_56 : f32 to vector<8x1xf32>
    %236 = arith.addf %234, %235 : vector<8x1xf32>
    %237 = math.rsqrt %236 : vector<8x1xf32>
    %238 = arith.mulf %228, %228 : vector<8x1xf32>
    %239 = arith.subf %230, %238 : vector<8x1xf32>
    %cst_57 = arith.constant 0.000000e+00 : f32
    %240 = vector.broadcast %cst_57 : f32 to vector<8x1xf32>
    %241 = arith.maximumf %239, %240 : vector<8x1xf32>
    %cst_58 = arith.constant 9.99999974E-6 : f32
    %242 = vector.broadcast %cst_58 : f32 to vector<8x1xf32>
    %243 = arith.addf %241, %242 : vector<8x1xf32>
    %244 = math.rsqrt %243 : vector<8x1xf32>
    %245 = vector.broadcast %227 : vector<8x1xf32> to vector<8x32xf32>
    %246 = arith.subf %218, %245 : vector<8x32xf32>
    %247 = vector.broadcast %237 : vector<8x1xf32> to vector<8x32xf32>
    %248 = arith.mulf %246, %247 : vector<8x32xf32>
    %249 = vector.broadcast %1 : vector<1x32xf32> to vector<8x32xf32>
    %250 = arith.mulf %248, %249 : vector<8x32xf32>
    %251 = vector.broadcast %3 : vector<1x32xf32> to vector<8x32xf32>
    %252 = arith.addf %250, %251 : vector<8x32xf32>
    %253 = arith.negf %252 : vector<8x32xf32>
    %254 = math.exp %253 : vector<8x32xf32>
    %cst_59 = arith.constant 1.000000e+00 : f32
    %255 = vector.broadcast %cst_59 : f32 to vector<8x32xf32>
    %256 = arith.addf %255, %254 : vector<8x32xf32>
    %257 = arith.divf %255, %256 : vector<8x32xf32>
    %258 = vector.broadcast %228 : vector<8x1xf32> to vector<8x32xf32>
    %259 = arith.subf %219, %258 : vector<8x32xf32>
    %260 = vector.broadcast %244 : vector<8x1xf32> to vector<8x32xf32>
    %261 = arith.mulf %259, %260 : vector<8x32xf32>
    %262 = vector.broadcast %2 : vector<1x32xf32> to vector<8x32xf32>
    %263 = arith.mulf %261, %262 : vector<8x32xf32>
    %264 = vector.broadcast %4 : vector<1x32xf32> to vector<8x32xf32>
    %265 = arith.addf %263, %264 : vector<8x32xf32>
    %266 = arith.negf %265 : vector<8x32xf32>
    %267 = math.exp %266 : vector<8x32xf32>
    %cst_60 = arith.constant 1.000000e+00 : f32
    %268 = vector.broadcast %cst_60 : f32 to vector<8x32xf32>
    %269 = arith.addf %268, %267 : vector<8x32xf32>
    %270 = arith.divf %268, %269 : vector<8x32xf32>
    %271 = arith.mulf %208, %270 : vector<8x32xf32>
    %272 = arith.truncf %271 : vector<8x32xf32> to vector<8x32xbf16>
    %cst_61 = arith.constant dense<0.000000e+00> : vector<8x32xf32>
    %273 = tpu.matmul %272, %19, %cst_61 {dimension_numbers = #tpu.dot_dimension_numbers<[1], [0], [0], [1], [0, 0, 1, 1], [], []>} : vector<8x32xbf16>, vector<32x32xbf16>, vector<8x32xf32> -> vector<8x32xf32>
    %274 = arith.index_cast %212 : i32 to index
    %c0_62 = arith.constant 0 : index
    %275 = vector.load %arg10[%274, %c0_62] : memref<128x32xf32, #tpu.memory_space<vmem>>, vector<8x32xf32>
    %276 = arith.addf %273, %275 : vector<8x32xf32>
    %277 = arith.mulf %276, %276 : vector<8x32xf32>
    %278 = tpu.concatenate %276, %277 in 0 : vector<8x32xf32>, vector<8x32xf32> -> vector<16x32xf32>
    %cst_63 = arith.constant dense<0.000000e+00> : vector<16xf32>
    %279 = vector.multi_reduction <add>, %278, %cst_63 [1] : vector<16x32xf32> to vector<16xf32>
    %280 = vector.shape_cast %279 : vector<16xf32> to vector<16x1xf32>
    %cst_64 = arith.constant 3.200000e+01 : f32
    %281 = vector.broadcast %cst_64 : f32 to vector<16x1xf32>
    %282 = arith.divf %280, %281 : vector<16x1xf32>
    %283 = vector.extract_strided_slice %282 {offsets = [0, 0], sizes = [8, 1], strides = [1, 1]} : vector<16x1xf32> to vector<8x1xf32>
    %284 = vector.extract_strided_slice %282 {offsets = [8, 0], sizes = [8, 1], strides = [1, 1]} : vector<16x1xf32> to vector<8x1xf32>
    %285 = arith.mulf %283, %283 : vector<8x1xf32>
    %286 = arith.subf %284, %285 : vector<8x1xf32>
    %cst_65 = arith.constant 0.000000e+00 : f32
    %287 = vector.broadcast %cst_65 : f32 to vector<8x1xf32>
    %288 = arith.maximumf %286, %287 : vector<8x1xf32>
    %cst_66 = arith.constant 9.99999974E-6 : f32
    %289 = vector.broadcast %cst_66 : f32 to vector<8x1xf32>
    %290 = arith.addf %288, %289 : vector<8x1xf32>
    %291 = math.rsqrt %290 : vector<8x1xf32>
    %292 = vector.broadcast %283 : vector<8x1xf32> to vector<8x32xf32>
    %293 = arith.subf %276, %292 : vector<8x32xf32>
    %294 = vector.broadcast %291 : vector<8x1xf32> to vector<8x32xf32>
    %295 = arith.mulf %293, %294 : vector<8x32xf32>
    %296 = vector.broadcast %5 : vector<1x32xf32> to vector<8x32xf32>
    %297 = arith.mulf %295, %296 : vector<8x32xf32>
    %298 = vector.broadcast %6 : vector<1x32xf32> to vector<8x32xf32>
    %299 = arith.addf %297, %298 : vector<8x32xf32>
    %300 = math.tanh %299 : vector<8x32xf32>
    %301 = arith.subf %300, %208 : vector<8x32xf32>
    %302 = arith.mulf %257, %301 : vector<8x32xf32>
    %303 = arith.addf %208, %302 : vector<8x32xf32>
    %304 = arith.index_cast %212 : i32 to index
    %c0_67 = arith.constant 0 : index
    %305 = vector.load %arg7[%304, %c0_67] : memref<128x32xf32, #tpu.memory_space<vmem>>, vector<8x32xf32>
    tpu.vector_store %arg7[%304, %c0_67], %303 {strides = array<i32>} : memref<128x32xf32, #tpu.memory_space<vmem>>, vector<8x32xf32>,
    %c3_i32 = arith.constant 3 : i32
    %c8_i32_68 = arith.constant 8 : i32
    %306 = arith.muli %c3_i32, %c8_i32_68 : i32
    %307 = tpu.assume_multiple %306, 8 : i32
    %308 = arith.truncf %303 : vector<8x32xf32> to vector<8x32xbf16>
    %cst_69 = arith.constant dense<0.000000e+00> : vector<8x64xf32>
    %309 = tpu.matmul %308, %18, %cst_69 {dimension_numbers = #tpu.dot_dimension_numbers<[1], [0], [0], [1], [0, 0, 1, 1], [], []>} : vector<8x32xbf16>, vector<32x64xbf16>, vector<8x64xf32> -> vector<8x64xf32>
    %310 = arith.index_cast %307 : i32 to index
    %c0_70 = arith.constant 0 : index
    %311 = vector.load %arg9[%310, %c0_70] : memref<128x64xf32, #tpu.memory_space<vmem>>, vector<8x64xf32>
    %312 = arith.addf %309, %311 : vector<8x64xf32>
    %313 = vector.extract_strided_slice %312 {offsets = [0, 0], sizes = [8, 32], strides = [1, 1]} : vector<8x64xf32> to vector<8x32xf32>
    %314 = vector.extract_strided_slice %312 {offsets = [0, 32], sizes = [8, 32], strides = [1, 1]} : vector<8x64xf32> to vector<8x32xf32>
    %315 = arith.mulf %313, %313 : vector<8x32xf32>
    %316 = arith.mulf %314, %314 : vector<8x32xf32>
    %317 = tpu.concatenate %313, %314, %315, %316 in 0 : vector<8x32xf32>, vector<8x32xf32>, vector<8x32xf32>, vector<8x32xf32> -> vector<32x32xf32>
    %cst_71 = arith.constant dense<0.000000e+00> : vector<32xf32>
    %318 = vector.multi_reduction <add>, %317, %cst_71 [1] : vector<32x32xf32> to vector<32xf32>
    %319 = vector.shape_cast %318 : vector<32xf32> to vector<32x1xf32>
    %cst_72 = arith.constant 3.200000e+01 : f32
    %320 = vector.broadcast %cst_72 : f32 to vector<32x1xf32>
    %321 = arith.divf %319, %320 : vector<32x1xf32>
    %322 = vector.extract_strided_slice %321 {offsets = [0, 0], sizes = [8, 1], strides = [1, 1]} : vector<32x1xf32> to vector<8x1xf32>
    %323 = vector.extract_strided_slice %321 {offsets = [8, 0], sizes = [8, 1], strides = [1, 1]} : vector<32x1xf32> to vector<8x1xf32>
    %324 = vector.extract_strided_slice %321 {offsets = [16, 0], sizes = [8, 1], strides = [1, 1]} : vector<32x1xf32> to vector<8x1xf32>
    %325 = vector.extract_strided_slice %321 {offsets = [24, 0], sizes = [8, 1], strides = [1, 1]} : vector<32x1xf32> to vector<8x1xf32>
    %326 = arith.mulf %322, %322 : vector<8x1xf32>
    %327 = arith.subf %324, %326 : vector<8x1xf32>
    %cst_73 = arith.constant 0.000000e+00 : f32
    %328 = vector.broadcast %cst_73 : f32 to vector<8x1xf32>
    %329 = arith.maximumf %327, %328 : vector<8x1xf32>
    %cst_74 = arith.constant 9.99999974E-6 : f32
    %330 = vector.broadcast %cst_74 : f32 to vector<8x1xf32>
    %331 = arith.addf %329, %330 : vector<8x1xf32>
    %332 = math.rsqrt %331 : vector<8x1xf32>
    %333 = arith.mulf %323, %323 : vector<8x1xf32>
    %334 = arith.subf %325, %333 : vector<8x1xf32>
    %cst_75 = arith.constant 0.000000e+00 : f32
    %335 = vector.broadcast %cst_75 : f32 to vector<8x1xf32>
    %336 = arith.maximumf %334, %335 : vector<8x1xf32>
    %cst_76 = arith.constant 9.99999974E-6 : f32
    %337 = vector.broadcast %cst_76 : f32 to vector<8x1xf32>
    %338 = arith.addf %336, %337 : vector<8x1xf32>
    %339 = math.rsqrt %338 : vector<8x1xf32>
    %340 = vector.broadcast %322 : vector<8x1xf32> to vector<8x32xf32>
    %341 = arith.subf %313, %340 : vector<8x32xf32>
    %342 = vector.broadcast %332 : vector<8x1xf32> to vector<8x32xf32>
    %343 = arith.mulf %341, %342 : vector<8x32xf32>
    %344 = vector.broadcast %1 : vector<1x32xf32> to vector<8x32xf32>
    %345 = arith.mulf %343, %344 : vector<8x32xf32>
    %346 = vector.broadcast %3 : vector<1x32xf32> to vector<8x32xf32>
    %347 = arith.addf %345, %346 : vector<8x32xf32>
    %348 = arith.negf %347 : vector<8x32xf32>
    %349 = math.exp %348 : vector<8x32xf32>
    %cst_77 = arith.constant 1.000000e+00 : f32
    %350 = vector.broadcast %cst_77 : f32 to vector<8x32xf32>
    %351 = arith.addf %350, %349 : vector<8x32xf32>
    %352 = arith.divf %350, %351 : vector<8x32xf32>
    %353 = vector.broadcast %323 : vector<8x1xf32> to vector<8x32xf32>
    %354 = arith.subf %314, %353 : vector<8x32xf32>
    %355 = vector.broadcast %339 : vector<8x1xf32> to vector<8x32xf32>
    %356 = arith.mulf %354, %355 : vector<8x32xf32>
    %357 = vector.broadcast %2 : vector<1x32xf32> to vector<8x32xf32>
    %358 = arith.mulf %356, %357 : vector<8x32xf32>
    %359 = vector.broadcast %4 : vector<1x32xf32> to vector<8x32xf32>
    %360 = arith.addf %358, %359 : vector<8x32xf32>
    %361 = arith.negf %360 : vector<8x32xf32>
    %362 = math.exp %361 : vector<8x32xf32>
    %cst_78 = arith.constant 1.000000e+00 : f32
    %363 = vector.broadcast %cst_78 : f32 to vector<8x32xf32>
    %364 = arith.addf %363, %362 : vector<8x32xf32>
    %365 = arith.divf %363, %364 : vector<8x32xf32>
    %366 = arith.mulf %303, %365 : vector<8x32xf32>
    %367 = arith.truncf %366 : vector<8x32xf32> to vector<8x32xbf16>
    %cst_79 = arith.constant dense<0.000000e+00> : vector<8x32xf32>
    %368 = tpu.matmul %367, %19, %cst_79 {dimension_numbers = #tpu.dot_dimension_numbers<[1], [0], [0], [1], [0, 0, 1, 1], [], []>} : vector<8x32xbf16>, vector<32x32xbf16>, vector<8x32xf32> -> vector<8x32xf32>
    %369 = arith.index_cast %307 : i32 to index
    %c0_80 = arith.constant 0 : index
    %370 = vector.load %arg10[%369, %c0_80] : memref<128x32xf32, #tpu.memory_space<vmem>>, vector<8x32xf32>
    %371 = arith.addf %368, %370 : vector<8x32xf32>
    %372 = arith.mulf %371, %371 : vector<8x32xf32>
    %373 = tpu.concatenate %371, %372 in 0 : vector<8x32xf32>, vector<8x32xf32> -> vector<16x32xf32>
    %cst_81 = arith.constant dense<0.000000e+00> : vector<16xf32>
    %374 = vector.multi_reduction <add>, %373, %cst_81 [1] : vector<16x32xf32> to vector<16xf32>
    %375 = vector.shape_cast %374 : vector<16xf32> to vector<16x1xf32>
    %cst_82 = arith.constant 3.200000e+01 : f32
    %376 = vector.broadcast %cst_82 : f32 to vector<16x1xf32>
    %377 = arith.divf %375, %376 : vector<16x1xf32>
    %378 = vector.extract_strided_slice %377 {offsets = [0, 0], sizes = [8, 1], strides = [1, 1]} : vector<16x1xf32> to vector<8x1xf32>
    %379 = vector.extract_strided_slice %377 {offsets = [8, 0], sizes = [8, 1], strides = [1, 1]} : vector<16x1xf32> to vector<8x1xf32>
    %380 = arith.mulf %378, %378 : vector<8x1xf32>
    %381 = arith.subf %379, %380 : vector<8x1xf32>
    %cst_83 = arith.constant 0.000000e+00 : f32
    %382 = vector.broadcast %cst_83 : f32 to vector<8x1xf32>
    %383 = arith.maximumf %381, %382 : vector<8x1xf32>
    %cst_84 = arith.constant 9.99999974E-6 : f32
    %384 = vector.broadcast %cst_84 : f32 to vector<8x1xf32>
    %385 = arith.addf %383, %384 : vector<8x1xf32>
    %386 = math.rsqrt %385 : vector<8x1xf32>
    %387 = vector.broadcast %378 : vector<8x1xf32> to vector<8x32xf32>
    %388 = arith.subf %371, %387 : vector<8x32xf32>
    %389 = vector.broadcast %386 : vector<8x1xf32> to vector<8x32xf32>
    %390 = arith.mulf %388, %389 : vector<8x32xf32>
    %391 = vector.broadcast %5 : vector<1x32xf32> to vector<8x32xf32>
    %392 = arith.mulf %390, %391 : vector<8x32xf32>
    %393 = vector.broadcast %6 : vector<1x32xf32> to vector<8x32xf32>
    %394 = arith.addf %392, %393 : vector<8x32xf32>
    %395 = math.tanh %394 : vector<8x32xf32>
    %396 = arith.subf %395, %303 : vector<8x32xf32>
    %397 = arith.mulf %352, %396 : vector<8x32xf32>
    %398 = arith.addf %303, %397 : vector<8x32xf32>
    %399 = arith.index_cast %307 : i32 to index
    %c0_85 = arith.constant 0 : index
    %400 = vector.load %arg7[%399, %c0_85] : memref<128x32xf32, #tpu.memory_space<vmem>>, vector<8x32xf32>
    tpu.vector_store %arg7[%399, %c0_85], %398 {strides = array<i32>} : memref<128x32xf32, #tpu.memory_space<vmem>>, vector<8x32xf32>,
    %c4_i32 = arith.constant 4 : i32
    %c8_i32_86 = arith.constant 8 : i32
    %401 = arith.muli %c4_i32, %c8_i32_86 : i32
    %402 = tpu.assume_multiple %401, 8 : i32
    %403 = arith.truncf %398 : vector<8x32xf32> to vector<8x32xbf16>
    %cst_87 = arith.constant dense<0.000000e+00> : vector<8x64xf32>
    %404 = tpu.matmul %403, %18, %cst_87 {dimension_numbers = #tpu.dot_dimension_numbers<[1], [0], [0], [1], [0, 0, 1, 1], [], []>} : vector<8x32xbf16>, vector<32x64xbf16>, vector<8x64xf32> -> vector<8x64xf32>
    %405 = arith.index_cast %402 : i32 to index
    %c0_88 = arith.constant 0 : index
    %406 = vector.load %arg9[%405, %c0_88] : memref<128x64xf32, #tpu.memory_space<vmem>>, vector<8x64xf32>
    %407 = arith.addf %404, %406 : vector<8x64xf32>
    %408 = vector.extract_strided_slice %407 {offsets = [0, 0], sizes = [8, 32], strides = [1, 1]} : vector<8x64xf32> to vector<8x32xf32>
    %409 = vector.extract_strided_slice %407 {offsets = [0, 32], sizes = [8, 32], strides = [1, 1]} : vector<8x64xf32> to vector<8x32xf32>
    %410 = arith.mulf %408, %408 : vector<8x32xf32>
    %411 = arith.mulf %409, %409 : vector<8x32xf32>
    %412 = tpu.concatenate %408, %409, %410, %411 in 0 : vector<8x32xf32>, vector<8x32xf32>, vector<8x32xf32>, vector<8x32xf32> -> vector<32x32xf32>
    %cst_89 = arith.constant dense<0.000000e+00> : vector<32xf32>
    %413 = vector.multi_reduction <add>, %412, %cst_89 [1] : vector<32x32xf32> to vector<32xf32>
    %414 = vector.shape_cast %413 : vector<32xf32> to vector<32x1xf32>
    %cst_90 = arith.constant 3.200000e+01 : f32
    %415 = vector.broadcast %cst_90 : f32 to vector<32x1xf32>
    %416 = arith.divf %414, %415 : vector<32x1xf32>
    %417 = vector.extract_strided_slice %416 {offsets = [0, 0], sizes = [8, 1], strides = [1, 1]} : vector<32x1xf32> to vector<8x1xf32>
    %418 = vector.extract_strided_slice %416 {offsets = [8, 0], sizes = [8, 1], strides = [1, 1]} : vector<32x1xf32> to vector<8x1xf32>
    %419 = vector.extract_strided_slice %416 {offsets = [16, 0], sizes = [8, 1], strides = [1, 1]} : vector<32x1xf32> to vector<8x1xf32>
    %420 = vector.extract_strided_slice %416 {offsets = [24, 0], sizes = [8, 1], strides = [1, 1]} : vector<32x1xf32> to vector<8x1xf32>
    %421 = arith.mulf %417, %417 : vector<8x1xf32>
    %422 = arith.subf %419, %421 : vector<8x1xf32>
    %cst_91 = arith.constant 0.000000e+00 : f32
    %423 = vector.broadcast %cst_91 : f32 to vector<8x1xf32>
    %424 = arith.maximumf %422, %423 : vector<8x1xf32>
    %cst_92 = arith.constant 9.99999974E-6 : f32
    %425 = vector.broadcast %cst_92 : f32 to vector<8x1xf32>
    %426 = arith.addf %424, %425 : vector<8x1xf32>
    %427 = math.rsqrt %426 : vector<8x1xf32>
    %428 = arith.mulf %418, %418 : vector<8x1xf32>
    %429 = arith.subf %420, %428 : vector<8x1xf32>
    %cst_93 = arith.constant 0.000000e+00 : f32
    %430 = vector.broadcast %cst_93 : f32 to vector<8x1xf32>
    %431 = arith.maximumf %429, %430 : vector<8x1xf32>
    %cst_94 = arith.constant 9.99999974E-6 : f32
    %432 = vector.broadcast %cst_94 : f32 to vector<8x1xf32>
    %433 = arith.addf %431, %432 : vector<8x1xf32>
    %434 = math.rsqrt %433 : vector<8x1xf32>
    %435 = vector.broadcast %417 : vector<8x1xf32> to vector<8x32xf32>
    %436 = arith.subf %408, %435 : vector<8x32xf32>
    %437 = vector.broadcast %427 : vector<8x1xf32> to vector<8x32xf32>
    %438 = arith.mulf %436, %437 : vector<8x32xf32>
    %439 = vector.broadcast %1 : vector<1x32xf32> to vector<8x32xf32>
    %440 = arith.mulf %438, %439 : vector<8x32xf32>
    %441 = vector.broadcast %3 : vector<1x32xf32> to vector<8x32xf32>
    %442 = arith.addf %440, %441 : vector<8x32xf32>
    %443 = arith.negf %442 : vector<8x32xf32>
    %444 = math.exp %443 : vector<8x32xf32>
    %cst_95 = arith.constant 1.000000e+00 : f32
    %445 = vector.broadcast %cst_95 : f32 to vector<8x32xf32>
    %446 = arith.addf %445, %444 : vector<8x32xf32>
    %447 = arith.divf %445, %446 : vector<8x32xf32>
    %448 = vector.broadcast %418 : vector<8x1xf32> to vector<8x32xf32>
    %449 = arith.subf %409, %448 : vector<8x32xf32>
    %450 = vector.broadcast %434 : vector<8x1xf32> to vector<8x32xf32>
    %451 = arith.mulf %449, %450 : vector<8x32xf32>
    %452 = vector.broadcast %2 : vector<1x32xf32> to vector<8x32xf32>
    %453 = arith.mulf %451, %452 : vector<8x32xf32>
    %454 = vector.broadcast %4 : vector<1x32xf32> to vector<8x32xf32>
    %455 = arith.addf %453, %454 : vector<8x32xf32>
    %456 = arith.negf %455 : vector<8x32xf32>
    %457 = math.exp %456 : vector<8x32xf32>
    %cst_96 = arith.constant 1.000000e+00 : f32
    %458 = vector.broadcast %cst_96 : f32 to vector<8x32xf32>
    %459 = arith.addf %458, %457 : vector<8x32xf32>
    %460 = arith.divf %458, %459 : vector<8x32xf32>
    %461 = arith.mulf %398, %460 : vector<8x32xf32>
    %462 = arith.truncf %461 : vector<8x32xf32> to vector<8x32xbf16>
    %cst_97 = arith.constant dense<0.000000e+00> : vector<8x32xf32>
    %463 = tpu.matmul %462, %19, %cst_97 {dimension_numbers = #tpu.dot_dimension_numbers<[1], [0], [0], [1], [0, 0, 1, 1], [], []>} : vector<8x32xbf16>, vector<32x32xbf16>, vector<8x32xf32> -> vector<8x32xf32>
    %464 = arith.index_cast %402 : i32 to index
    %c0_98 = arith.constant 0 : index
    %465 = vector.load %arg10[%464, %c0_98] : memref<128x32xf32, #tpu.memory_space<vmem>>, vector<8x32xf32>
    %466 = arith.addf %463, %465 : vector<8x32xf32>
    %467 = arith.mulf %466, %466 : vector<8x32xf32>
    %468 = tpu.concatenate %466, %467 in 0 : vector<8x32xf32>, vector<8x32xf32> -> vector<16x32xf32>
    %cst_99 = arith.constant dense<0.000000e+00> : vector<16xf32>
    %469 = vector.multi_reduction <add>, %468, %cst_99 [1] : vector<16x32xf32> to vector<16xf32>
    %470 = vector.shape_cast %469 : vector<16xf32> to vector<16x1xf32>
    %cst_100 = arith.constant 3.200000e+01 : f32
    %471 = vector.broadcast %cst_100 : f32 to vector<16x1xf32>
    %472 = arith.divf %470, %471 : vector<16x1xf32>
    %473 = vector.extract_strided_slice %472 {offsets = [0, 0], sizes = [8, 1], strides = [1, 1]} : vector<16x1xf32> to vector<8x1xf32>
    %474 = vector.extract_strided_slice %472 {offsets = [8, 0], sizes = [8, 1], strides = [1, 1]} : vector<16x1xf32> to vector<8x1xf32>
    %475 = arith.mulf %473, %473 : vector<8x1xf32>
    %476 = arith.subf %474, %475 : vector<8x1xf32>
    %cst_101 = arith.constant 0.000000e+00 : f32
    %477 = vector.broadcast %cst_101 : f32 to vector<8x1xf32>
    %478 = arith.maximumf %476, %477 : vector<8x1xf32>
    %cst_102 = arith.constant 9.99999974E-6 : f32
    %479 = vector.broadcast %cst_102 : f32 to vector<8x1xf32>
    %480 = arith.addf %478, %479 : vector<8x1xf32>
    %481 = math.rsqrt %480 : vector<8x1xf32>
    %482 = vector.broadcast %473 : vector<8x1xf32> to vector<8x32xf32>
    %483 = arith.subf %466, %482 : vector<8x32xf32>
    %484 = vector.broadcast %481 : vector<8x1xf32> to vector<8x32xf32>
    %485 = arith.mulf %483, %484 : vector<8x32xf32>
    %486 = vector.broadcast %5 : vector<1x32xf32> to vector<8x32xf32>
    %487 = arith.mulf %485, %486 : vector<8x32xf32>
    %488 = vector.broadcast %6 : vector<1x32xf32> to vector<8x32xf32>
    %489 = arith.addf %487, %488 : vector<8x32xf32>
    %490 = math.tanh %489 : vector<8x32xf32>
    %491 = arith.subf %490, %398 : vector<8x32xf32>
    %492 = arith.mulf %447, %491 : vector<8x32xf32>
    %493 = arith.addf %398, %492 : vector<8x32xf32>
    %494 = arith.index_cast %402 : i32 to index
    %c0_103 = arith.constant 0 : index
    %495 = vector.load %arg7[%494, %c0_103] : memref<128x32xf32, #tpu.memory_space<vmem>>, vector<8x32xf32>
    tpu.vector_store %arg7[%494, %c0_103], %493 {strides = array<i32>} : memref<128x32xf32, #tpu.memory_space<vmem>>, vector<8x32xf32>,
    %c5_i32 = arith.constant 5 : i32
    %c8_i32_104 = arith.constant 8 : i32
    %496 = arith.muli %c5_i32, %c8_i32_104 : i32
    %497 = tpu.assume_multiple %496, 8 : i32
    %498 = arith.truncf %493 : vector<8x32xf32> to vector<8x32xbf16>
    %cst_105 = arith.constant dense<0.000000e+00> : vector<8x64xf32>
    %499 = tpu.matmul %498, %18, %cst_105 {dimension_numbers = #tpu.dot_dimension_numbers<[1], [0], [0], [1], [0, 0, 1, 1], [], []>} : vector<8x32xbf16>, vector<32x64xbf16>, vector<8x64xf32> -> vector<8x64xf32>
    %500 = arith.index_cast %497 : i32 to index
    %c0_106 = arith.constant 0 : index
    %501 = vector.load %arg9[%500, %c0_106] : memref<128x64xf32, #tpu.memory_space<vmem>>, vector<8x64xf32>
    %502 = arith.addf %499, %501 : vector<8x64xf32>
    %503 = vector.extract_strided_slice %502 {offsets = [0, 0], sizes = [8, 32], strides = [1, 1]} : vector<8x64xf32> to vector<8x32xf32>
    %504 = vector.extract_strided_slice %502 {offsets = [0, 32], sizes = [8, 32], strides = [1, 1]} : vector<8x64xf32> to vector<8x32xf32>
    %505 = arith.mulf %503, %503 : vector<8x32xf32>
    %506 = arith.mulf %504, %504 : vector<8x32xf32>
    %507 = tpu.concatenate %503, %504, %505, %506 in 0 : vector<8x32xf32>, vector<8x32xf32>, vector<8x32xf32>, vector<8x32xf32> -> vector<32x32xf32>
    %cst_107 = arith.constant dense<0.000000e+00> : vector<32xf32>
    %508 = vector.multi_reduction <add>, %507, %cst_107 [1] : vector<32x32xf32> to vector<32xf32>
    %509 = vector.shape_cast %508 : vector<32xf32> to vector<32x1xf32>
    %cst_108 = arith.constant 3.200000e+01 : f32
    %510 = vector.broadcast %cst_108 : f32 to vector<32x1xf32>
    %511 = arith.divf %509, %510 : vector<32x1xf32>
    %512 = vector.extract_strided_slice %511 {offsets = [0, 0], sizes = [8, 1], strides = [1, 1]} : vector<32x1xf32> to vector<8x1xf32>
    %513 = vector.extract_strided_slice %511 {offsets = [8, 0], sizes = [8, 1], strides = [1, 1]} : vector<32x1xf32> to vector<8x1xf32>
    %514 = vector.extract_strided_slice %511 {offsets = [16, 0], sizes = [8, 1], strides = [1, 1]} : vector<32x1xf32> to vector<8x1xf32>
    %515 = vector.extract_strided_slice %511 {offsets = [24, 0], sizes = [8, 1], strides = [1, 1]} : vector<32x1xf32> to vector<8x1xf32>
    %516 = arith.mulf %512, %512 : vector<8x1xf32>
    %517 = arith.subf %514, %516 : vector<8x1xf32>
    %cst_109 = arith.constant 0.000000e+00 : f32
    %518 = vector.broadcast %cst_109 : f32 to vector<8x1xf32>
    %519 = arith.maximumf %517, %518 : vector<8x1xf32>
    %cst_110 = arith.constant 9.99999974E-6 : f32
    %520 = vector.broadcast %cst_110 : f32 to vector<8x1xf32>
    %521 = arith.addf %519, %520 : vector<8x1xf32>
    %522 = math.rsqrt %521 : vector<8x1xf32>
    %523 = arith.mulf %513, %513 : vector<8x1xf32>
    %524 = arith.subf %515, %523 : vector<8x1xf32>
    %cst_111 = arith.constant 0.000000e+00 : f32
    %525 = vector.broadcast %cst_111 : f32 to vector<8x1xf32>
    %526 = arith.maximumf %524, %525 : vector<8x1xf32>
    %cst_112 = arith.constant 9.99999974E-6 : f32
    %527 = vector.broadcast %cst_112 : f32 to vector<8x1xf32>
    %528 = arith.addf %526, %527 : vector<8x1xf32>
    %529 = math.rsqrt %528 : vector<8x1xf32>
    %530 = vector.broadcast %512 : vector<8x1xf32> to vector<8x32xf32>
    %531 = arith.subf %503, %530 : vector<8x32xf32>
    %532 = vector.broadcast %522 : vector<8x1xf32> to vector<8x32xf32>
    %533 = arith.mulf %531, %532 : vector<8x32xf32>
    %534 = vector.broadcast %1 : vector<1x32xf32> to vector<8x32xf32>
    %535 = arith.mulf %533, %534 : vector<8x32xf32>
    %536 = vector.broadcast %3 : vector<1x32xf32> to vector<8x32xf32>
    %537 = arith.addf %535, %536 : vector<8x32xf32>
    %538 = arith.negf %537 : vector<8x32xf32>
    %539 = math.exp %538 : vector<8x32xf32>
    %cst_113 = arith.constant 1.000000e+00 : f32
    %540 = vector.broadcast %cst_113 : f32 to vector<8x32xf32>
    %541 = arith.addf %540, %539 : vector<8x32xf32>
    %542 = arith.divf %540, %541 : vector<8x32xf32>
    %543 = vector.broadcast %513 : vector<8x1xf32> to vector<8x32xf32>
    %544 = arith.subf %504, %543 : vector<8x32xf32>
    %545 = vector.broadcast %529 : vector<8x1xf32> to vector<8x32xf32>
    %546 = arith.mulf %544, %545 : vector<8x32xf32>
    %547 = vector.broadcast %2 : vector<1x32xf32> to vector<8x32xf32>
    %548 = arith.mulf %546, %547 : vector<8x32xf32>
    %549 = vector.broadcast %4 : vector<1x32xf32> to vector<8x32xf32>
    %550 = arith.addf %548, %549 : vector<8x32xf32>
    %551 = arith.negf %550 : vector<8x32xf32>
    %552 = math.exp %551 : vector<8x32xf32>
    %cst_114 = arith.constant 1.000000e+00 : f32
    %553 = vector.broadcast %cst_114 : f32 to vector<8x32xf32>
    %554 = arith.addf %553, %552 : vector<8x32xf32>
    %555 = arith.divf %553, %554 : vector<8x32xf32>
    %556 = arith.mulf %493, %555 : vector<8x32xf32>
    %557 = arith.truncf %556 : vector<8x32xf32> to vector<8x32xbf16>
    %cst_115 = arith.constant dense<0.000000e+00> : vector<8x32xf32>
    %558 = tpu.matmul %557, %19, %cst_115 {dimension_numbers = #tpu.dot_dimension_numbers<[1], [0], [0], [1], [0, 0, 1, 1], [], []>} : vector<8x32xbf16>, vector<32x32xbf16>, vector<8x32xf32> -> vector<8x32xf32>
    %559 = arith.index_cast %497 : i32 to index
    %c0_116 = arith.constant 0 : index
    %560 = vector.load %arg10[%559, %c0_116] : memref<128x32xf32, #tpu.memory_space<vmem>>, vector<8x32xf32>
    %561 = arith.addf %558, %560 : vector<8x32xf32>
    %562 = arith.mulf %561, %561 : vector<8x32xf32>
    %563 = tpu.concatenate %561, %562 in 0 : vector<8x32xf32>, vector<8x32xf32> -> vector<16x32xf32>
    %cst_117 = arith.constant dense<0.000000e+00> : vector<16xf32>
    %564 = vector.multi_reduction <add>, %563, %cst_117 [1] : vector<16x32xf32> to vector<16xf32>
    %565 = vector.shape_cast %564 : vector<16xf32> to vector<16x1xf32>
    %cst_118 = arith.constant 3.200000e+01 : f32
    %566 = vector.broadcast %cst_118 : f32 to vector<16x1xf32>
    %567 = arith.divf %565, %566 : vector<16x1xf32>
    %568 = vector.extract_strided_slice %567 {offsets = [0, 0], sizes = [8, 1], strides = [1, 1]} : vector<16x1xf32> to vector<8x1xf32>
    %569 = vector.extract_strided_slice %567 {offsets = [8, 0], sizes = [8, 1], strides = [1, 1]} : vector<16x1xf32> to vector<8x1xf32>
    %570 = arith.mulf %568, %568 : vector<8x1xf32>
    %571 = arith.subf %569, %570 : vector<8x1xf32>
    %cst_119 = arith.constant 0.000000e+00 : f32
    %572 = vector.broadcast %cst_119 : f32 to vector<8x1xf32>
    %573 = arith.maximumf %571, %572 : vector<8x1xf32>
    %cst_120 = arith.constant 9.99999974E-6 : f32
    %574 = vector.broadcast %cst_120 : f32 to vector<8x1xf32>
    %575 = arith.addf %573, %574 : vector<8x1xf32>
    %576 = math.rsqrt %575 : vector<8x1xf32>
    %577 = vector.broadcast %568 : vector<8x1xf32> to vector<8x32xf32>
    %578 = arith.subf %561, %577 : vector<8x32xf32>
    %579 = vector.broadcast %576 : vector<8x1xf32> to vector<8x32xf32>
    %580 = arith.mulf %578, %579 : vector<8x32xf32>
    %581 = vector.broadcast %5 : vector<1x32xf32> to vector<8x32xf32>
    %582 = arith.mulf %580, %581 : vector<8x32xf32>
    %583 = vector.broadcast %6 : vector<1x32xf32> to vector<8x32xf32>
    %584 = arith.addf %582, %583 : vector<8x32xf32>
    %585 = math.tanh %584 : vector<8x32xf32>
    %586 = arith.subf %585, %493 : vector<8x32xf32>
    %587 = arith.mulf %542, %586 : vector<8x32xf32>
    %588 = arith.addf %493, %587 : vector<8x32xf32>
    %589 = arith.index_cast %497 : i32 to index
    %c0_121 = arith.constant 0 : index
    %590 = vector.load %arg7[%589, %c0_121] : memref<128x32xf32, #tpu.memory_space<vmem>>, vector<8x32xf32>
    tpu.vector_store %arg7[%589, %c0_121], %588 {strides = array<i32>} : memref<128x32xf32, #tpu.memory_space<vmem>>, vector<8x32xf32>,
    %c6_i32 = arith.constant 6 : i32
    %c8_i32_122 = arith.constant 8 : i32
    %591 = arith.muli %c6_i32, %c8_i32_122 : i32
    %592 = tpu.assume_multiple %591, 8 : i32
    %593 = arith.truncf %588 : vector<8x32xf32> to vector<8x32xbf16>
    %cst_123 = arith.constant dense<0.000000e+00> : vector<8x64xf32>
    %594 = tpu.matmul %593, %18, %cst_123 {dimension_numbers = #tpu.dot_dimension_numbers<[1], [0], [0], [1], [0, 0, 1, 1], [], []>} : vector<8x32xbf16>, vector<32x64xbf16>, vector<8x64xf32> -> vector<8x64xf32>
    %595 = arith.index_cast %592 : i32 to index
    %c0_124 = arith.constant 0 : index
    %596 = vector.load %arg9[%595, %c0_124] : memref<128x64xf32, #tpu.memory_space<vmem>>, vector<8x64xf32>
    %597 = arith.addf %594, %596 : vector<8x64xf32>
    %598 = vector.extract_strided_slice %597 {offsets = [0, 0], sizes = [8, 32], strides = [1, 1]} : vector<8x64xf32> to vector<8x32xf32>
    %599 = vector.extract_strided_slice %597 {offsets = [0, 32], sizes = [8, 32], strides = [1, 1]} : vector<8x64xf32> to vector<8x32xf32>
    %600 = arith.mulf %598, %598 : vector<8x32xf32>
    %601 = arith.mulf %599, %599 : vector<8x32xf32>
    %602 = tpu.concatenate %598, %599, %600, %601 in 0 : vector<8x32xf32>, vector<8x32xf32>, vector<8x32xf32>, vector<8x32xf32> -> vector<32x32xf32>
    %cst_125 = arith.constant dense<0.000000e+00> : vector<32xf32>
    %603 = vector.multi_reduction <add>, %602, %cst_125 [1] : vector<32x32xf32> to vector<32xf32>
    %604 = vector.shape_cast %603 : vector<32xf32> to vector<32x1xf32>
    %cst_126 = arith.constant 3.200000e+01 : f32
    %605 = vector.broadcast %cst_126 : f32 to vector<32x1xf32>
    %606 = arith.divf %604, %605 : vector<32x1xf32>
    %607 = vector.extract_strided_slice %606 {offsets = [0, 0], sizes = [8, 1], strides = [1, 1]} : vector<32x1xf32> to vector<8x1xf32>
    %608 = vector.extract_strided_slice %606 {offsets = [8, 0], sizes = [8, 1], strides = [1, 1]} : vector<32x1xf32> to vector<8x1xf32>
    %609 = vector.extract_strided_slice %606 {offsets = [16, 0], sizes = [8, 1], strides = [1, 1]} : vector<32x1xf32> to vector<8x1xf32>
    %610 = vector.extract_strided_slice %606 {offsets = [24, 0], sizes = [8, 1], strides = [1, 1]} : vector<32x1xf32> to vector<8x1xf32>
    %611 = arith.mulf %607, %607 : vector<8x1xf32>
    %612 = arith.subf %609, %611 : vector<8x1xf32>
    %cst_127 = arith.constant 0.000000e+00 : f32
    %613 = vector.broadcast %cst_127 : f32 to vector<8x1xf32>
    %614 = arith.maximumf %612, %613 : vector<8x1xf32>
    %cst_128 = arith.constant 9.99999974E-6 : f32
    %615 = vector.broadcast %cst_128 : f32 to vector<8x1xf32>
    %616 = arith.addf %614, %615 : vector<8x1xf32>
    %617 = math.rsqrt %616 : vector<8x1xf32>
    %618 = arith.mulf %608, %608 : vector<8x1xf32>
    %619 = arith.subf %610, %618 : vector<8x1xf32>
    %cst_129 = arith.constant 0.000000e+00 : f32
    %620 = vector.broadcast %cst_129 : f32 to vector<8x1xf32>
    %621 = arith.maximumf %619, %620 : vector<8x1xf32>
    %cst_130 = arith.constant 9.99999974E-6 : f32
    %622 = vector.broadcast %cst_130 : f32 to vector<8x1xf32>
    %623 = arith.addf %621, %622 : vector<8x1xf32>
    %624 = math.rsqrt %623 : vector<8x1xf32>
    %625 = vector.broadcast %607 : vector<8x1xf32> to vector<8x32xf32>
    %626 = arith.subf %598, %625 : vector<8x32xf32>
    %627 = vector.broadcast %617 : vector<8x1xf32> to vector<8x32xf32>
    %628 = arith.mulf %626, %627 : vector<8x32xf32>
    %629 = vector.broadcast %1 : vector<1x32xf32> to vector<8x32xf32>
    %630 = arith.mulf %628, %629 : vector<8x32xf32>
    %631 = vector.broadcast %3 : vector<1x32xf32> to vector<8x32xf32>
    %632 = arith.addf %630, %631 : vector<8x32xf32>
    %633 = arith.negf %632 : vector<8x32xf32>
    %634 = math.exp %633 : vector<8x32xf32>
    %cst_131 = arith.constant 1.000000e+00 : f32
    %635 = vector.broadcast %cst_131 : f32 to vector<8x32xf32>
    %636 = arith.addf %635, %634 : vector<8x32xf32>
    %637 = arith.divf %635, %636 : vector<8x32xf32>
    %638 = vector.broadcast %608 : vector<8x1xf32> to vector<8x32xf32>
    %639 = arith.subf %599, %638 : vector<8x32xf32>
    %640 = vector.broadcast %624 : vector<8x1xf32> to vector<8x32xf32>
    %641 = arith.mulf %639, %640 : vector<8x32xf32>
    %642 = vector.broadcast %2 : vector<1x32xf32> to vector<8x32xf32>
    %643 = arith.mulf %641, %642 : vector<8x32xf32>
    %644 = vector.broadcast %4 : vector<1x32xf32> to vector<8x32xf32>
    %645 = arith.addf %643, %644 : vector<8x32xf32>
    %646 = arith.negf %645 : vector<8x32xf32>
    %647 = math.exp %646 : vector<8x32xf32>
    %cst_132 = arith.constant 1.000000e+00 : f32
    %648 = vector.broadcast %cst_132 : f32 to vector<8x32xf32>
    %649 = arith.addf %648, %647 : vector<8x32xf32>
    %650 = arith.divf %648, %649 : vector<8x32xf32>
    %651 = arith.mulf %588, %650 : vector<8x32xf32>
    %652 = arith.truncf %651 : vector<8x32xf32> to vector<8x32xbf16>
    %cst_133 = arith.constant dense<0.000000e+00> : vector<8x32xf32>
    %653 = tpu.matmul %652, %19, %cst_133 {dimension_numbers = #tpu.dot_dimension_numbers<[1], [0], [0], [1], [0, 0, 1, 1], [], []>} : vector<8x32xbf16>, vector<32x32xbf16>, vector<8x32xf32> -> vector<8x32xf32>
    %654 = arith.index_cast %592 : i32 to index
    %c0_134 = arith.constant 0 : index
    %655 = vector.load %arg10[%654, %c0_134] : memref<128x32xf32, #tpu.memory_space<vmem>>, vector<8x32xf32>
    %656 = arith.addf %653, %655 : vector<8x32xf32>
    %657 = arith.mulf %656, %656 : vector<8x32xf32>
    %658 = tpu.concatenate %656, %657 in 0 : vector<8x32xf32>, vector<8x32xf32> -> vector<16x32xf32>
    %cst_135 = arith.constant dense<0.000000e+00> : vector<16xf32>
    %659 = vector.multi_reduction <add>, %658, %cst_135 [1] : vector<16x32xf32> to vector<16xf32>
    %660 = vector.shape_cast %659 : vector<16xf32> to vector<16x1xf32>
    %cst_136 = arith.constant 3.200000e+01 : f32
    %661 = vector.broadcast %cst_136 : f32 to vector<16x1xf32>
    %662 = arith.divf %660, %661 : vector<16x1xf32>
    %663 = vector.extract_strided_slice %662 {offsets = [0, 0], sizes = [8, 1], strides = [1, 1]} : vector<16x1xf32> to vector<8x1xf32>
    %664 = vector.extract_strided_slice %662 {offsets = [8, 0], sizes = [8, 1], strides = [1, 1]} : vector<16x1xf32> to vector<8x1xf32>
    %665 = arith.mulf %663, %663 : vector<8x1xf32>
    %666 = arith.subf %664, %665 : vector<8x1xf32>
    %cst_137 = arith.constant 0.000000e+00 : f32
    %667 = vector.broadcast %cst_137 : f32 to vector<8x1xf32>
    %668 = arith.maximumf %666, %667 : vector<8x1xf32>
    %cst_138 = arith.constant 9.99999974E-6 : f32
    %669 = vector.broadcast %cst_138 : f32 to vector<8x1xf32>
    %670 = arith.addf %668, %669 : vector<8x1xf32>
    %671 = math.rsqrt %670 : vector<8x1xf32>
    %672 = vector.broadcast %663 : vector<8x1xf32> to vector<8x32xf32>
    %673 = arith.subf %656, %672 : vector<8x32xf32>
    %674 = vector.broadcast %671 : vector<8x1xf32> to vector<8x32xf32>
    %675 = arith.mulf %673, %674 : vector<8x32xf32>
    %676 = vector.broadcast %5 : vector<1x32xf32> to vector<8x32xf32>
    %677 = arith.mulf %675, %676 : vector<8x32xf32>
    %678 = vector.broadcast %6 : vector<1x32xf32> to vector<8x32xf32>
    %679 = arith.addf %677, %678 : vector<8x32xf32>
    %680 = math.tanh %679 : vector<8x32xf32>
    %681 = arith.subf %680, %588 : vector<8x32xf32>
    %682 = arith.mulf %637, %681 : vector<8x32xf32>
    %683 = arith.addf %588, %682 : vector<8x32xf32>
    %684 = arith.index_cast %592 : i32 to index
    %c0_139 = arith.constant 0 : index
    %685 = vector.load %arg7[%684, %c0_139] : memref<128x32xf32, #tpu.memory_space<vmem>>, vector<8x32xf32>
    tpu.vector_store %arg7[%684, %c0_139], %683 {strides = array<i32>} : memref<128x32xf32, #tpu.memory_space<vmem>>, vector<8x32xf32>,
    %c7_i32 = arith.constant 7 : i32
    %c8_i32_140 = arith.constant 8 : i32
    %686 = arith.muli %c7_i32, %c8_i32_140 : i32
    %687 = tpu.assume_multiple %686, 8 : i32
    %688 = arith.truncf %683 : vector<8x32xf32> to vector<8x32xbf16>
    %cst_141 = arith.constant dense<0.000000e+00> : vector<8x64xf32>
    %689 = tpu.matmul %688, %18, %cst_141 {dimension_numbers = #tpu.dot_dimension_numbers<[1], [0], [0], [1], [0, 0, 1, 1], [], []>} : vector<8x32xbf16>, vector<32x64xbf16>, vector<8x64xf32> -> vector<8x64xf32>
    %690 = arith.index_cast %687 : i32 to index
    %c0_142 = arith.constant 0 : index
    %691 = vector.load %arg9[%690, %c0_142] : memref<128x64xf32, #tpu.memory_space<vmem>>, vector<8x64xf32>
    %692 = arith.addf %689, %691 : vector<8x64xf32>
    %693 = vector.extract_strided_slice %692 {offsets = [0, 0], sizes = [8, 32], strides = [1, 1]} : vector<8x64xf32> to vector<8x32xf32>
    %694 = vector.extract_strided_slice %692 {offsets = [0, 32], sizes = [8, 32], strides = [1, 1]} : vector<8x64xf32> to vector<8x32xf32>
    %695 = arith.mulf %693, %693 : vector<8x32xf32>
    %696 = arith.mulf %694, %694 : vector<8x32xf32>
    %697 = tpu.concatenate %693, %694, %695, %696 in 0 : vector<8x32xf32>, vector<8x32xf32>, vector<8x32xf32>, vector<8x32xf32> -> vector<32x32xf32>
    %cst_143 = arith.constant dense<0.000000e+00> : vector<32xf32>
    %698 = vector.multi_reduction <add>, %697, %cst_143 [1] : vector<32x32xf32> to vector<32xf32>
    %699 = vector.shape_cast %698 : vector<32xf32> to vector<32x1xf32>
    %cst_144 = arith.constant 3.200000e+01 : f32
    %700 = vector.broadcast %cst_144 : f32 to vector<32x1xf32>
    %701 = arith.divf %699, %700 : vector<32x1xf32>
    %702 = vector.extract_strided_slice %701 {offsets = [0, 0], sizes = [8, 1], strides = [1, 1]} : vector<32x1xf32> to vector<8x1xf32>
    %703 = vector.extract_strided_slice %701 {offsets = [8, 0], sizes = [8, 1], strides = [1, 1]} : vector<32x1xf32> to vector<8x1xf32>
    %704 = vector.extract_strided_slice %701 {offsets = [16, 0], sizes = [8, 1], strides = [1, 1]} : vector<32x1xf32> to vector<8x1xf32>
    %705 = vector.extract_strided_slice %701 {offsets = [24, 0], sizes = [8, 1], strides = [1, 1]} : vector<32x1xf32> to vector<8x1xf32>
    %706 = arith.mulf %702, %702 : vector<8x1xf32>
    %707 = arith.subf %704, %706 : vector<8x1xf32>
    %cst_145 = arith.constant 0.000000e+00 : f32
    %708 = vector.broadcast %cst_145 : f32 to vector<8x1xf32>
    %709 = arith.maximumf %707, %708 : vector<8x1xf32>
    %cst_146 = arith.constant 9.99999974E-6 : f32
    %710 = vector.broadcast %cst_146 : f32 to vector<8x1xf32>
    %711 = arith.addf %709, %710 : vector<8x1xf32>
    %712 = math.rsqrt %711 : vector<8x1xf32>
    %713 = arith.mulf %703, %703 : vector<8x1xf32>
    %714 = arith.subf %705, %713 : vector<8x1xf32>
    %cst_147 = arith.constant 0.000000e+00 : f32
    %715 = vector.broadcast %cst_147 : f32 to vector<8x1xf32>
    %716 = arith.maximumf %714, %715 : vector<8x1xf32>
    %cst_148 = arith.constant 9.99999974E-6 : f32
    %717 = vector.broadcast %cst_148 : f32 to vector<8x1xf32>
    %718 = arith.addf %716, %717 : vector<8x1xf32>
    %719 = math.rsqrt %718 : vector<8x1xf32>
    %720 = vector.broadcast %702 : vector<8x1xf32> to vector<8x32xf32>
    %721 = arith.subf %693, %720 : vector<8x32xf32>
    %722 = vector.broadcast %712 : vector<8x1xf32> to vector<8x32xf32>
    %723 = arith.mulf %721, %722 : vector<8x32xf32>
    %724 = vector.broadcast %1 : vector<1x32xf32> to vector<8x32xf32>
    %725 = arith.mulf %723, %724 : vector<8x32xf32>
    %726 = vector.broadcast %3 : vector<1x32xf32> to vector<8x32xf32>
    %727 = arith.addf %725, %726 : vector<8x32xf32>
    %728 = arith.negf %727 : vector<8x32xf32>
    %729 = math.exp %728 : vector<8x32xf32>
    %cst_149 = arith.constant 1.000000e+00 : f32
    %730 = vector.broadcast %cst_149 : f32 to vector<8x32xf32>
    %731 = arith.addf %730, %729 : vector<8x32xf32>
    %732 = arith.divf %730, %731 : vector<8x32xf32>
    %733 = vector.broadcast %703 : vector<8x1xf32> to vector<8x32xf32>
    %734 = arith.subf %694, %733 : vector<8x32xf32>
    %735 = vector.broadcast %719 : vector<8x1xf32> to vector<8x32xf32>
    %736 = arith.mulf %734, %735 : vector<8x32xf32>
    %737 = vector.broadcast %2 : vector<1x32xf32> to vector<8x32xf32>
    %738 = arith.mulf %736, %737 : vector<8x32xf32>
    %739 = vector.broadcast %4 : vector<1x32xf32> to vector<8x32xf32>
    %740 = arith.addf %738, %739 : vector<8x32xf32>
    %741 = arith.negf %740 : vector<8x32xf32>
    %742 = math.exp %741 : vector<8x32xf32>
    %cst_150 = arith.constant 1.000000e+00 : f32
    %743 = vector.broadcast %cst_150 : f32 to vector<8x32xf32>
    %744 = arith.addf %743, %742 : vector<8x32xf32>
    %745 = arith.divf %743, %744 : vector<8x32xf32>
    %746 = arith.mulf %683, %745 : vector<8x32xf32>
    %747 = arith.truncf %746 : vector<8x32xf32> to vector<8x32xbf16>
    %cst_151 = arith.constant dense<0.000000e+00> : vector<8x32xf32>
    %748 = tpu.matmul %747, %19, %cst_151 {dimension_numbers = #tpu.dot_dimension_numbers<[1], [0], [0], [1], [0, 0, 1, 1], [], []>} : vector<8x32xbf16>, vector<32x32xbf16>, vector<8x32xf32> -> vector<8x32xf32>
    %749 = arith.index_cast %687 : i32 to index
    %c0_152 = arith.constant 0 : index
    %750 = vector.load %arg10[%749, %c0_152] : memref<128x32xf32, #tpu.memory_space<vmem>>, vector<8x32xf32>
    %751 = arith.addf %748, %750 : vector<8x32xf32>
    %752 = arith.mulf %751, %751 : vector<8x32xf32>
    %753 = tpu.concatenate %751, %752 in 0 : vector<8x32xf32>, vector<8x32xf32> -> vector<16x32xf32>
    %cst_153 = arith.constant dense<0.000000e+00> : vector<16xf32>
    %754 = vector.multi_reduction <add>, %753, %cst_153 [1] : vector<16x32xf32> to vector<16xf32>
    %755 = vector.shape_cast %754 : vector<16xf32> to vector<16x1xf32>
    %cst_154 = arith.constant 3.200000e+01 : f32
    %756 = vector.broadcast %cst_154 : f32 to vector<16x1xf32>
    %757 = arith.divf %755, %756 : vector<16x1xf32>
    %758 = vector.extract_strided_slice %757 {offsets = [0, 0], sizes = [8, 1], strides = [1, 1]} : vector<16x1xf32> to vector<8x1xf32>
    %759 = vector.extract_strided_slice %757 {offsets = [8, 0], sizes = [8, 1], strides = [1, 1]} : vector<16x1xf32> to vector<8x1xf32>
    %760 = arith.mulf %758, %758 : vector<8x1xf32>
    %761 = arith.subf %759, %760 : vector<8x1xf32>
    %cst_155 = arith.constant 0.000000e+00 : f32
    %762 = vector.broadcast %cst_155 : f32 to vector<8x1xf32>
    %763 = arith.maximumf %761, %762 : vector<8x1xf32>
    %cst_156 = arith.constant 9.99999974E-6 : f32
    %764 = vector.broadcast %cst_156 : f32 to vector<8x1xf32>
    %765 = arith.addf %763, %764 : vector<8x1xf32>
    %766 = math.rsqrt %765 : vector<8x1xf32>
    %767 = vector.broadcast %758 : vector<8x1xf32> to vector<8x32xf32>
    %768 = arith.subf %751, %767 : vector<8x32xf32>
    %769 = vector.broadcast %766 : vector<8x1xf32> to vector<8x32xf32>
    %770 = arith.mulf %768, %769 : vector<8x32xf32>
    %771 = vector.broadcast %5 : vector<1x32xf32> to vector<8x32xf32>
    %772 = arith.mulf %770, %771 : vector<8x32xf32>
    %773 = vector.broadcast %6 : vector<1x32xf32> to vector<8x32xf32>
    %774 = arith.addf %772, %773 : vector<8x32xf32>
    %775 = math.tanh %774 : vector<8x32xf32>
    %776 = arith.subf %775, %683 : vector<8x32xf32>
    %777 = arith.mulf %732, %776 : vector<8x32xf32>
    %778 = arith.addf %683, %777 : vector<8x32xf32>
    %779 = arith.index_cast %687 : i32 to index
    %c0_157 = arith.constant 0 : index
    %780 = vector.load %arg7[%779, %c0_157] : memref<128x32xf32, #tpu.memory_space<vmem>>, vector<8x32xf32>
    tpu.vector_store %arg7[%779, %c0_157], %778 {strides = array<i32>} : memref<128x32xf32, #tpu.memory_space<vmem>>, vector<8x32xf32>,
    %c8_i32_158 = arith.constant 8 : i32
    %c8_i32_159 = arith.constant 8 : i32
    %781 = arith.muli %c8_i32_158, %c8_i32_159 : i32
    %782 = tpu.assume_multiple %781, 8 : i32
    %783 = arith.truncf %778 : vector<8x32xf32> to vector<8x32xbf16>
    %cst_160 = arith.constant dense<0.000000e+00> : vector<8x64xf32>
    %784 = tpu.matmul %783, %18, %cst_160 {dimension_numbers = #tpu.dot_dimension_numbers<[1], [0], [0], [1], [0, 0, 1, 1], [], []>} : vector<8x32xbf16>, vector<32x64xbf16>, vector<8x64xf32> -> vector<8x64xf32>
    %785 = arith.index_cast %782 : i32 to index
    %c0_161 = arith.constant 0 : index
    %786 = vector.load %arg9[%785, %c0_161] : memref<128x64xf32, #tpu.memory_space<vmem>>, vector<8x64xf32>
    %787 = arith.addf %784, %786 : vector<8x64xf32>
    %788 = vector.extract_strided_slice %787 {offsets = [0, 0], sizes = [8, 32], strides = [1, 1]} : vector<8x64xf32> to vector<8x32xf32>
    %789 = vector.extract_strided_slice %787 {offsets = [0, 32], sizes = [8, 32], strides = [1, 1]} : vector<8x64xf32> to vector<8x32xf32>
    %790 = arith.mulf %788, %788 : vector<8x32xf32>
    %791 = arith.mulf %789, %789 : vector<8x32xf32>
    %792 = tpu.concatenate %788, %789, %790, %791 in 0 : vector<8x32xf32>, vector<8x32xf32>, vector<8x32xf32>, vector<8x32xf32> -> vector<32x32xf32>
    %cst_162 = arith.constant dense<0.000000e+00> : vector<32xf32>
    %793 = vector.multi_reduction <add>, %792, %cst_162 [1] : vector<32x32xf32> to vector<32xf32>
    %794 = vector.shape_cast %793 : vector<32xf32> to vector<32x1xf32>
    %cst_163 = arith.constant 3.200000e+01 : f32
    %795 = vector.broadcast %cst_163 : f32 to vector<32x1xf32>
    %796 = arith.divf %794, %795 : vector<32x1xf32>
    %797 = vector.extract_strided_slice %796 {offsets = [0, 0], sizes = [8, 1], strides = [1, 1]} : vector<32x1xf32> to vector<8x1xf32>
    %798 = vector.extract_strided_slice %796 {offsets = [8, 0], sizes = [8, 1], strides = [1, 1]} : vector<32x1xf32> to vector<8x1xf32>
    %799 = vector.extract_strided_slice %796 {offsets = [16, 0], sizes = [8, 1], strides = [1, 1]} : vector<32x1xf32> to vector<8x1xf32>
    %800 = vector.extract_strided_slice %796 {offsets = [24, 0], sizes = [8, 1], strides = [1, 1]} : vector<32x1xf32> to vector<8x1xf32>
    %801 = arith.mulf %797, %797 : vector<8x1xf32>
    %802 = arith.subf %799, %801 : vector<8x1xf32>
    %cst_164 = arith.constant 0.000000e+00 : f32
    %803 = vector.broadcast %cst_164 : f32 to vector<8x1xf32>
    %804 = arith.maximumf %802, %803 : vector<8x1xf32>
    %cst_165 = arith.constant 9.99999974E-6 : f32
    %805 = vector.broadcast %cst_165 : f32 to vector<8x1xf32>
    %806 = arith.addf %804, %805 : vector<8x1xf32>
    %807 = math.rsqrt %806 : vector<8x1xf32>
    %808 = arith.mulf %798, %798 : vector<8x1xf32>
    %809 = arith.subf %800, %808 : vector<8x1xf32>
    %cst_166 = arith.constant 0.000000e+00 : f32
    %810 = vector.broadcast %cst_166 : f32 to vector<8x1xf32>
    %811 = arith.maximumf %809, %810 : vector<8x1xf32>
    %cst_167 = arith.constant 9.99999974E-6 : f32
    %812 = vector.broadcast %cst_167 : f32 to vector<8x1xf32>
    %813 = arith.addf %811, %812 : vector<8x1xf32>
    %814 = math.rsqrt %813 : vector<8x1xf32>
    %815 = vector.broadcast %797 : vector<8x1xf32> to vector<8x32xf32>
    %816 = arith.subf %788, %815 : vector<8x32xf32>
    %817 = vector.broadcast %807 : vector<8x1xf32> to vector<8x32xf32>
    %818 = arith.mulf %816, %817 : vector<8x32xf32>
    %819 = vector.broadcast %1 : vector<1x32xf32> to vector<8x32xf32>
    %820 = arith.mulf %818, %819 : vector<8x32xf32>
    %821 = vector.broadcast %3 : vector<1x32xf32> to vector<8x32xf32>
    %822 = arith.addf %820, %821 : vector<8x32xf32>
    %823 = arith.negf %822 : vector<8x32xf32>
    %824 = math.exp %823 : vector<8x32xf32>
    %cst_168 = arith.constant 1.000000e+00 : f32
    %825 = vector.broadcast %cst_168 : f32 to vector<8x32xf32>
    %826 = arith.addf %825, %824 : vector<8x32xf32>
    %827 = arith.divf %825, %826 : vector<8x32xf32>
    %828 = vector.broadcast %798 : vector<8x1xf32> to vector<8x32xf32>
    %829 = arith.subf %789, %828 : vector<8x32xf32>
    %830 = vector.broadcast %814 : vector<8x1xf32> to vector<8x32xf32>
    %831 = arith.mulf %829, %830 : vector<8x32xf32>
    %832 = vector.broadcast %2 : vector<1x32xf32> to vector<8x32xf32>
    %833 = arith.mulf %831, %832 : vector<8x32xf32>
    %834 = vector.broadcast %4 : vector<1x32xf32> to vector<8x32xf32>
    %835 = arith.addf %833, %834 : vector<8x32xf32>
    %836 = arith.negf %835 : vector<8x32xf32>
    %837 = math.exp %836 : vector<8x32xf32>
    %cst_169 = arith.constant 1.000000e+00 : f32
    %838 = vector.broadcast %cst_169 : f32 to vector<8x32xf32>
    %839 = arith.addf %838, %837 : vector<8x32xf32>
    %840 = arith.divf %838, %839 : vector<8x32xf32>
    %841 = arith.mulf %778, %840 : vector<8x32xf32>
    %842 = arith.truncf %841 : vector<8x32xf32> to vector<8x32xbf16>
    %cst_170 = arith.constant dense<0.000000e+00> : vector<8x32xf32>
    %843 = tpu.matmul %842, %19, %cst_170 {dimension_numbers = #tpu.dot_dimension_numbers<[1], [0], [0], [1], [0, 0, 1, 1], [], []>} : vector<8x32xbf16>, vector<32x32xbf16>, vector<8x32xf32> -> vector<8x32xf32>
    %844 = arith.index_cast %782 : i32 to index
    %c0_171 = arith.constant 0 : index
    %845 = vector.load %arg10[%844, %c0_171] : memref<128x32xf32, #tpu.memory_space<vmem>>, vector<8x32xf32>
    %846 = arith.addf %843, %845 : vector<8x32xf32>
    %847 = arith.mulf %846, %846 : vector<8x32xf32>
    %848 = tpu.concatenate %846, %847 in 0 : vector<8x32xf32>, vector<8x32xf32> -> vector<16x32xf32>
    %cst_172 = arith.constant dense<0.000000e+00> : vector<16xf32>
    %849 = vector.multi_reduction <add>, %848, %cst_172 [1] : vector<16x32xf32> to vector<16xf32>
    %850 = vector.shape_cast %849 : vector<16xf32> to vector<16x1xf32>
    %cst_173 = arith.constant 3.200000e+01 : f32
    %851 = vector.broadcast %cst_173 : f32 to vector<16x1xf32>
    %852 = arith.divf %850, %851 : vector<16x1xf32>
    %853 = vector.extract_strided_slice %852 {offsets = [0, 0], sizes = [8, 1], strides = [1, 1]} : vector<16x1xf32> to vector<8x1xf32>
    %854 = vector.extract_strided_slice %852 {offsets = [8, 0], sizes = [8, 1], strides = [1, 1]} : vector<16x1xf32> to vector<8x1xf32>
    %855 = arith.mulf %853, %853 : vector<8x1xf32>
    %856 = arith.subf %854, %855 : vector<8x1xf32>
    %cst_174 = arith.constant 0.000000e+00 : f32
    %857 = vector.broadcast %cst_174 : f32 to vector<8x1xf32>
    %858 = arith.maximumf %856, %857 : vector<8x1xf32>
    %cst_175 = arith.constant 9.99999974E-6 : f32
    %859 = vector.broadcast %cst_175 : f32 to vector<8x1xf32>
    %860 = arith.addf %858, %859 : vector<8x1xf32>
    %861 = math.rsqrt %860 : vector<8x1xf32>
    %862 = vector.broadcast %853 : vector<8x1xf32> to vector<8x32xf32>
    %863 = arith.subf %846, %862 : vector<8x32xf32>
    %864 = vector.broadcast %861 : vector<8x1xf32> to vector<8x32xf32>
    %865 = arith.mulf %863, %864 : vector<8x32xf32>
    %866 = vector.broadcast %5 : vector<1x32xf32> to vector<8x32xf32>
    %867 = arith.mulf %865, %866 : vector<8x32xf32>
    %868 = vector.broadcast %6 : vector<1x32xf32> to vector<8x32xf32>
    %869 = arith.addf %867, %868 : vector<8x32xf32>
    %870 = math.tanh %869 : vector<8x32xf32>
    %871 = arith.subf %870, %778 : vector<8x32xf32>
    %872 = arith.mulf %827, %871 : vector<8x32xf32>
    %873 = arith.addf %778, %872 : vector<8x32xf32>
    %874 = arith.index_cast %782 : i32 to index
    %c0_176 = arith.constant 0 : index
    %875 = vector.load %arg7[%874, %c0_176] : memref<128x32xf32, #tpu.memory_space<vmem>>, vector<8x32xf32>
    tpu.vector_store %arg7[%874, %c0_176], %873 {strides = array<i32>} : memref<128x32xf32, #tpu.memory_space<vmem>>, vector<8x32xf32>,
    %c9_i32 = arith.constant 9 : i32
    %c8_i32_177 = arith.constant 8 : i32
    %876 = arith.muli %c9_i32, %c8_i32_177 : i32
    %877 = tpu.assume_multiple %876, 8 : i32
    %878 = arith.truncf %873 : vector<8x32xf32> to vector<8x32xbf16>
    %cst_178 = arith.constant dense<0.000000e+00> : vector<8x64xf32>
    %879 = tpu.matmul %878, %18, %cst_178 {dimension_numbers = #tpu.dot_dimension_numbers<[1], [0], [0], [1], [0, 0, 1, 1], [], []>} : vector<8x32xbf16>, vector<32x64xbf16>, vector<8x64xf32> -> vector<8x64xf32>
    %880 = arith.index_cast %877 : i32 to index
    %c0_179 = arith.constant 0 : index
    %881 = vector.load %arg9[%880, %c0_179] : memref<128x64xf32, #tpu.memory_space<vmem>>, vector<8x64xf32>
    %882 = arith.addf %879, %881 : vector<8x64xf32>
    %883 = vector.extract_strided_slice %882 {offsets = [0, 0], sizes = [8, 32], strides = [1, 1]} : vector<8x64xf32> to vector<8x32xf32>
    %884 = vector.extract_strided_slice %882 {offsets = [0, 32], sizes = [8, 32], strides = [1, 1]} : vector<8x64xf32> to vector<8x32xf32>
    %885 = arith.mulf %883, %883 : vector<8x32xf32>
    %886 = arith.mulf %884, %884 : vector<8x32xf32>
    %887 = tpu.concatenate %883, %884, %885, %886 in 0 : vector<8x32xf32>, vector<8x32xf32>, vector<8x32xf32>, vector<8x32xf32> -> vector<32x32xf32>
    %cst_180 = arith.constant dense<0.000000e+00> : vector<32xf32>
    %888 = vector.multi_reduction <add>, %887, %cst_180 [1] : vector<32x32xf32> to vector<32xf32>
    %889 = vector.shape_cast %888 : vector<32xf32> to vector<32x1xf32>
    %cst_181 = arith.constant 3.200000e+01 : f32
    %890 = vector.broadcast %cst_181 : f32 to vector<32x1xf32>
    %891 = arith.divf %889, %890 : vector<32x1xf32>
    %892 = vector.extract_strided_slice %891 {offsets = [0, 0], sizes = [8, 1], strides = [1, 1]} : vector<32x1xf32> to vector<8x1xf32>
    %893 = vector.extract_strided_slice %891 {offsets = [8, 0], sizes = [8, 1], strides = [1, 1]} : vector<32x1xf32> to vector<8x1xf32>
    %894 = vector.extract_strided_slice %891 {offsets = [16, 0], sizes = [8, 1], strides = [1, 1]} : vector<32x1xf32> to vector<8x1xf32>
    %895 = vector.extract_strided_slice %891 {offsets = [24, 0], sizes = [8, 1], strides = [1, 1]} : vector<32x1xf32> to vector<8x1xf32>
    %896 = arith.mulf %892, %892 : vector<8x1xf32>
    %897 = arith.subf %894, %896 : vector<8x1xf32>
    %cst_182 = arith.constant 0.000000e+00 : f32
    %898 = vector.broadcast %cst_182 : f32 to vector<8x1xf32>
    %899 = arith.maximumf %897, %898 : vector<8x1xf32>
    %cst_183 = arith.constant 9.99999974E-6 : f32
    %900 = vector.broadcast %cst_183 : f32 to vector<8x1xf32>
    %901 = arith.addf %899, %900 : vector<8x1xf32>
    %902 = math.rsqrt %901 : vector<8x1xf32>
    %903 = arith.mulf %893, %893 : vector<8x1xf32>
    %904 = arith.subf %895, %903 : vector<8x1xf32>
    %cst_184 = arith.constant 0.000000e+00 : f32
    %905 = vector.broadcast %cst_184 : f32 to vector<8x1xf32>
    %906 = arith.maximumf %904, %905 : vector<8x1xf32>
    %cst_185 = arith.constant 9.99999974E-6 : f32
    %907 = vector.broadcast %cst_185 : f32 to vector<8x1xf32>
    %908 = arith.addf %906, %907 : vector<8x1xf32>
    %909 = math.rsqrt %908 : vector<8x1xf32>
    %910 = vector.broadcast %892 : vector<8x1xf32> to vector<8x32xf32>
    %911 = arith.subf %883, %910 : vector<8x32xf32>
    %912 = vector.broadcast %902 : vector<8x1xf32> to vector<8x32xf32>
    %913 = arith.mulf %911, %912 : vector<8x32xf32>
    %914 = vector.broadcast %1 : vector<1x32xf32> to vector<8x32xf32>
    %915 = arith.mulf %913, %914 : vector<8x32xf32>
    %916 = vector.broadcast %3 : vector<1x32xf32> to vector<8x32xf32>
    %917 = arith.addf %915, %916 : vector<8x32xf32>
    %918 = arith.negf %917 : vector<8x32xf32>
    %919 = math.exp %918 : vector<8x32xf32>
    %cst_186 = arith.constant 1.000000e+00 : f32
    %920 = vector.broadcast %cst_186 : f32 to vector<8x32xf32>
    %921 = arith.addf %920, %919 : vector<8x32xf32>
    %922 = arith.divf %920, %921 : vector<8x32xf32>
    %923 = vector.broadcast %893 : vector<8x1xf32> to vector<8x32xf32>
    %924 = arith.subf %884, %923 : vector<8x32xf32>
    %925 = vector.broadcast %909 : vector<8x1xf32> to vector<8x32xf32>
    %926 = arith.mulf %924, %925 : vector<8x32xf32>
    %927 = vector.broadcast %2 : vector<1x32xf32> to vector<8x32xf32>
    %928 = arith.mulf %926, %927 : vector<8x32xf32>
    %929 = vector.broadcast %4 : vector<1x32xf32> to vector<8x32xf32>
    %930 = arith.addf %928, %929 : vector<8x32xf32>
    %931 = arith.negf %930 : vector<8x32xf32>
    %932 = math.exp %931 : vector<8x32xf32>
    %cst_187 = arith.constant 1.000000e+00 : f32
    %933 = vector.broadcast %cst_187 : f32 to vector<8x32xf32>
    %934 = arith.addf %933, %932 : vector<8x32xf32>
    %935 = arith.divf %933, %934 : vector<8x32xf32>
    %936 = arith.mulf %873, %935 : vector<8x32xf32>
    %937 = arith.truncf %936 : vector<8x32xf32> to vector<8x32xbf16>
    %cst_188 = arith.constant dense<0.000000e+00> : vector<8x32xf32>
    %938 = tpu.matmul %937, %19, %cst_188 {dimension_numbers = #tpu.dot_dimension_numbers<[1], [0], [0], [1], [0, 0, 1, 1], [], []>} : vector<8x32xbf16>, vector<32x32xbf16>, vector<8x32xf32> -> vector<8x32xf32>
    %939 = arith.index_cast %877 : i32 to index
    %c0_189 = arith.constant 0 : index
    %940 = vector.load %arg10[%939, %c0_189] : memref<128x32xf32, #tpu.memory_space<vmem>>, vector<8x32xf32>
    %941 = arith.addf %938, %940 : vector<8x32xf32>
    %942 = arith.mulf %941, %941 : vector<8x32xf32>
    %943 = tpu.concatenate %941, %942 in 0 : vector<8x32xf32>, vector<8x32xf32> -> vector<16x32xf32>
    %cst_190 = arith.constant dense<0.000000e+00> : vector<16xf32>
    %944 = vector.multi_reduction <add>, %943, %cst_190 [1] : vector<16x32xf32> to vector<16xf32>
    %945 = vector.shape_cast %944 : vector<16xf32> to vector<16x1xf32>
    %cst_191 = arith.constant 3.200000e+01 : f32
    %946 = vector.broadcast %cst_191 : f32 to vector<16x1xf32>
    %947 = arith.divf %945, %946 : vector<16x1xf32>
    %948 = vector.extract_strided_slice %947 {offsets = [0, 0], sizes = [8, 1], strides = [1, 1]} : vector<16x1xf32> to vector<8x1xf32>
    %949 = vector.extract_strided_slice %947 {offsets = [8, 0], sizes = [8, 1], strides = [1, 1]} : vector<16x1xf32> to vector<8x1xf32>
    %950 = arith.mulf %948, %948 : vector<8x1xf32>
    %951 = arith.subf %949, %950 : vector<8x1xf32>
    %cst_192 = arith.constant 0.000000e+00 : f32
    %952 = vector.broadcast %cst_192 : f32 to vector<8x1xf32>
    %953 = arith.maximumf %951, %952 : vector<8x1xf32>
    %cst_193 = arith.constant 9.99999974E-6 : f32
    %954 = vector.broadcast %cst_193 : f32 to vector<8x1xf32>
    %955 = arith.addf %953, %954 : vector<8x1xf32>
    %956 = math.rsqrt %955 : vector<8x1xf32>
    %957 = vector.broadcast %948 : vector<8x1xf32> to vector<8x32xf32>
    %958 = arith.subf %941, %957 : vector<8x32xf32>
    %959 = vector.broadcast %956 : vector<8x1xf32> to vector<8x32xf32>
    %960 = arith.mulf %958, %959 : vector<8x32xf32>
    %961 = vector.broadcast %5 : vector<1x32xf32> to vector<8x32xf32>
    %962 = arith.mulf %960, %961 : vector<8x32xf32>
    %963 = vector.broadcast %6 : vector<1x32xf32> to vector<8x32xf32>
    %964 = arith.addf %962, %963 : vector<8x32xf32>
    %965 = math.tanh %964 : vector<8x32xf32>
    %966 = arith.subf %965, %873 : vector<8x32xf32>
    %967 = arith.mulf %922, %966 : vector<8x32xf32>
    %968 = arith.addf %873, %967 : vector<8x32xf32>
    %969 = arith.index_cast %877 : i32 to index
    %c0_194 = arith.constant 0 : index
    %970 = vector.load %arg7[%969, %c0_194] : memref<128x32xf32, #tpu.memory_space<vmem>>, vector<8x32xf32>
    tpu.vector_store %arg7[%969, %c0_194], %968 {strides = array<i32>} : memref<128x32xf32, #tpu.memory_space<vmem>>, vector<8x32xf32>,
    %c10_i32 = arith.constant 10 : i32
    %c8_i32_195 = arith.constant 8 : i32
    %971 = arith.muli %c10_i32, %c8_i32_195 : i32
    %972 = tpu.assume_multiple %971, 8 : i32
    %973 = arith.truncf %968 : vector<8x32xf32> to vector<8x32xbf16>
    %cst_196 = arith.constant dense<0.000000e+00> : vector<8x64xf32>
    %974 = tpu.matmul %973, %18, %cst_196 {dimension_numbers = #tpu.dot_dimension_numbers<[1], [0], [0], [1], [0, 0, 1, 1], [], []>} : vector<8x32xbf16>, vector<32x64xbf16>, vector<8x64xf32> -> vector<8x64xf32>
    %975 = arith.index_cast %972 : i32 to index
    %c0_197 = arith.constant 0 : index
    %976 = vector.load %arg9[%975, %c0_197] : memref<128x64xf32, #tpu.memory_space<vmem>>, vector<8x64xf32>
    %977 = arith.addf %974, %976 : vector<8x64xf32>
    %978 = vector.extract_strided_slice %977 {offsets = [0, 0], sizes = [8, 32], strides = [1, 1]} : vector<8x64xf32> to vector<8x32xf32>
    %979 = vector.extract_strided_slice %977 {offsets = [0, 32], sizes = [8, 32], strides = [1, 1]} : vector<8x64xf32> to vector<8x32xf32>
    %980 = arith.mulf %978, %978 : vector<8x32xf32>
    %981 = arith.mulf %979, %979 : vector<8x32xf32>
    %982 = tpu.concatenate %978, %979, %980, %981 in 0 : vector<8x32xf32>, vector<8x32xf32>, vector<8x32xf32>, vector<8x32xf32> -> vector<32x32xf32>
    %cst_198 = arith.constant dense<0.000000e+00> : vector<32xf32>
    %983 = vector.multi_reduction <add>, %982, %cst_198 [1] : vector<32x32xf32> to vector<32xf32>
    %984 = vector.shape_cast %983 : vector<32xf32> to vector<32x1xf32>
    %cst_199 = arith.constant 3.200000e+01 : f32
    %985 = vector.broadcast %cst_199 : f32 to vector<32x1xf32>
    %986 = arith.divf %984, %985 : vector<32x1xf32>
    %987 = vector.extract_strided_slice %986 {offsets = [0, 0], sizes = [8, 1], strides = [1, 1]} : vector<32x1xf32> to vector<8x1xf32>
    %988 = vector.extract_strided_slice %986 {offsets = [8, 0], sizes = [8, 1], strides = [1, 1]} : vector<32x1xf32> to vector<8x1xf32>
    %989 = vector.extract_strided_slice %986 {offsets = [16, 0], sizes = [8, 1], strides = [1, 1]} : vector<32x1xf32> to vector<8x1xf32>
    %990 = vector.extract_strided_slice %986 {offsets = [24, 0], sizes = [8, 1], strides = [1, 1]} : vector<32x1xf32> to vector<8x1xf32>
    %991 = arith.mulf %987, %987 : vector<8x1xf32>
    %992 = arith.subf %989, %991 : vector<8x1xf32>
    %cst_200 = arith.constant 0.000000e+00 : f32
    %993 = vector.broadcast %cst_200 : f32 to vector<8x1xf32>
    %994 = arith.maximumf %992, %993 : vector<8x1xf32>
    %cst_201 = arith.constant 9.99999974E-6 : f32
    %995 = vector.broadcast %cst_201 : f32 to vector<8x1xf32>
    %996 = arith.addf %994, %995 : vector<8x1xf32>
    %997 = math.rsqrt %996 : vector<8x1xf32>
    %998 = arith.mulf %988, %988 : vector<8x1xf32>
    %999 = arith.subf %990, %998 : vector<8x1xf32>
    %cst_202 = arith.constant 0.000000e+00 : f32
    %1000 = vector.broadcast %cst_202 : f32 to vector<8x1xf32>
    %1001 = arith.maximumf %999, %1000 : vector<8x1xf32>
    %cst_203 = arith.constant 9.99999974E-6 : f32
    %1002 = vector.broadcast %cst_203 : f32 to vector<8x1xf32>
    %1003 = arith.addf %1001, %1002 : vector<8x1xf32>
    %1004 = math.rsqrt %1003 : vector<8x1xf32>
    %1005 = vector.broadcast %987 : vector<8x1xf32> to vector<8x32xf32>
    %1006 = arith.subf %978, %1005 : vector<8x32xf32>
    %1007 = vector.broadcast %997 : vector<8x1xf32> to vector<8x32xf32>
    %1008 = arith.mulf %1006, %1007 : vector<8x32xf32>
    %1009 = vector.broadcast %1 : vector<1x32xf32> to vector<8x32xf32>
    %1010 = arith.mulf %1008, %1009 : vector<8x32xf32>
    %1011 = vector.broadcast %3 : vector<1x32xf32> to vector<8x32xf32>
    %1012 = arith.addf %1010, %1011 : vector<8x32xf32>
    %1013 = arith.negf %1012 : vector<8x32xf32>
    %1014 = math.exp %1013 : vector<8x32xf32>
    %cst_204 = arith.constant 1.000000e+00 : f32
    %1015 = vector.broadcast %cst_204 : f32 to vector<8x32xf32>
    %1016 = arith.addf %1015, %1014 : vector<8x32xf32>
    %1017 = arith.divf %1015, %1016 : vector<8x32xf32>
    %1018 = vector.broadcast %988 : vector<8x1xf32> to vector<8x32xf32>
    %1019 = arith.subf %979, %1018 : vector<8x32xf32>
    %1020 = vector.broadcast %1004 : vector<8x1xf32> to vector<8x32xf32>
    %1021 = arith.mulf %1019, %1020 : vector<8x32xf32>
    %1022 = vector.broadcast %2 : vector<1x32xf32> to vector<8x32xf32>
    %1023 = arith.mulf %1021, %1022 : vector<8x32xf32>
    %1024 = vector.broadcast %4 : vector<1x32xf32> to vector<8x32xf32>
    %1025 = arith.addf %1023, %1024 : vector<8x32xf32>
    %1026 = arith.negf %1025 : vector<8x32xf32>
    %1027 = math.exp %1026 : vector<8x32xf32>
    %cst_205 = arith.constant 1.000000e+00 : f32
    %1028 = vector.broadcast %cst_205 : f32 to vector<8x32xf32>
    %1029 = arith.addf %1028, %1027 : vector<8x32xf32>
    %1030 = arith.divf %1028, %1029 : vector<8x32xf32>
    %1031 = arith.mulf %968, %1030 : vector<8x32xf32>
    %1032 = arith.truncf %1031 : vector<8x32xf32> to vector<8x32xbf16>
    %cst_206 = arith.constant dense<0.000000e+00> : vector<8x32xf32>
    %1033 = tpu.matmul %1032, %19, %cst_206 {dimension_numbers = #tpu.dot_dimension_numbers<[1], [0], [0], [1], [0, 0, 1, 1], [], []>} : vector<8x32xbf16>, vector<32x32xbf16>, vector<8x32xf32> -> vector<8x32xf32>
    %1034 = arith.index_cast %972 : i32 to index
    %c0_207 = arith.constant 0 : index
    %1035 = vector.load %arg10[%1034, %c0_207] : memref<128x32xf32, #tpu.memory_space<vmem>>, vector<8x32xf32>
    %1036 = arith.addf %1033, %1035 : vector<8x32xf32>
    %1037 = arith.mulf %1036, %1036 : vector<8x32xf32>
    %1038 = tpu.concatenate %1036, %1037 in 0 : vector<8x32xf32>, vector<8x32xf32> -> vector<16x32xf32>
    %cst_208 = arith.constant dense<0.000000e+00> : vector<16xf32>
    %1039 = vector.multi_reduction <add>, %1038, %cst_208 [1] : vector<16x32xf32> to vector<16xf32>
    %1040 = vector.shape_cast %1039 : vector<16xf32> to vector<16x1xf32>
    %cst_209 = arith.constant 3.200000e+01 : f32
    %1041 = vector.broadcast %cst_209 : f32 to vector<16x1xf32>
    %1042 = arith.divf %1040, %1041 : vector<16x1xf32>
    %1043 = vector.extract_strided_slice %1042 {offsets = [0, 0], sizes = [8, 1], strides = [1, 1]} : vector<16x1xf32> to vector<8x1xf32>
    %1044 = vector.extract_strided_slice %1042 {offsets = [8, 0], sizes = [8, 1], strides = [1, 1]} : vector<16x1xf32> to vector<8x1xf32>
    %1045 = arith.mulf %1043, %1043 : vector<8x1xf32>
    %1046 = arith.subf %1044, %1045 : vector<8x1xf32>
    %cst_210 = arith.constant 0.000000e+00 : f32
    %1047 = vector.broadcast %cst_210 : f32 to vector<8x1xf32>
    %1048 = arith.maximumf %1046, %1047 : vector<8x1xf32>
    %cst_211 = arith.constant 9.99999974E-6 : f32
    %1049 = vector.broadcast %cst_211 : f32 to vector<8x1xf32>
    %1050 = arith.addf %1048, %1049 : vector<8x1xf32>
    %1051 = math.rsqrt %1050 : vector<8x1xf32>
    %1052 = vector.broadcast %1043 : vector<8x1xf32> to vector<8x32xf32>
    %1053 = arith.subf %1036, %1052 : vector<8x32xf32>
    %1054 = vector.broadcast %1051 : vector<8x1xf32> to vector<8x32xf32>
    %1055 = arith.mulf %1053, %1054 : vector<8x32xf32>
    %1056 = vector.broadcast %5 : vector<1x32xf32> to vector<8x32xf32>
    %1057 = arith.mulf %1055, %1056 : vector<8x32xf32>
    %1058 = vector.broadcast %6 : vector<1x32xf32> to vector<8x32xf32>
    %1059 = arith.addf %1057, %1058 : vector<8x32xf32>
    %1060 = math.tanh %1059 : vector<8x32xf32>
    %1061 = arith.subf %1060, %968 : vector<8x32xf32>
    %1062 = arith.mulf %1017, %1061 : vector<8x32xf32>
    %1063 = arith.addf %968, %1062 : vector<8x32xf32>
    %1064 = arith.index_cast %972 : i32 to index
    %c0_212 = arith.constant 0 : index
    %1065 = vector.load %arg7[%1064, %c0_212] : memref<128x32xf32, #tpu.memory_space<vmem>>, vector<8x32xf32>
    tpu.vector_store %arg7[%1064, %c0_212], %1063 {strides = array<i32>} : memref<128x32xf32, #tpu.memory_space<vmem>>, vector<8x32xf32>,
    %c11_i32 = arith.constant 11 : i32
    %c8_i32_213 = arith.constant 8 : i32
    %1066 = arith.muli %c11_i32, %c8_i32_213 : i32
    %1067 = tpu.assume_multiple %1066, 8 : i32
    %1068 = arith.truncf %1063 : vector<8x32xf32> to vector<8x32xbf16>
    %cst_214 = arith.constant dense<0.000000e+00> : vector<8x64xf32>
    %1069 = tpu.matmul %1068, %18, %cst_214 {dimension_numbers = #tpu.dot_dimension_numbers<[1], [0], [0], [1], [0, 0, 1, 1], [], []>} : vector<8x32xbf16>, vector<32x64xbf16>, vector<8x64xf32> -> vector<8x64xf32>
    %1070 = arith.index_cast %1067 : i32 to index
    %c0_215 = arith.constant 0 : index
    %1071 = vector.load %arg9[%1070, %c0_215] : memref<128x64xf32, #tpu.memory_space<vmem>>, vector<8x64xf32>
    %1072 = arith.addf %1069, %1071 : vector<8x64xf32>
    %1073 = vector.extract_strided_slice %1072 {offsets = [0, 0], sizes = [8, 32], strides = [1, 1]} : vector<8x64xf32> to vector<8x32xf32>
    %1074 = vector.extract_strided_slice %1072 {offsets = [0, 32], sizes = [8, 32], strides = [1, 1]} : vector<8x64xf32> to vector<8x32xf32>
    %1075 = arith.mulf %1073, %1073 : vector<8x32xf32>
    %1076 = arith.mulf %1074, %1074 : vector<8x32xf32>
    %1077 = tpu.concatenate %1073, %1074, %1075, %1076 in 0 : vector<8x32xf32>, vector<8x32xf32>, vector<8x32xf32>, vector<8x32xf32> -> vector<32x32xf32>
    %cst_216 = arith.constant dense<0.000000e+00> : vector<32xf32>
    %1078 = vector.multi_reduction <add>, %1077, %cst_216 [1] : vector<32x32xf32> to vector<32xf32>
    %1079 = vector.shape_cast %1078 : vector<32xf32> to vector<32x1xf32>
    %cst_217 = arith.constant 3.200000e+01 : f32
    %1080 = vector.broadcast %cst_217 : f32 to vector<32x1xf32>
    %1081 = arith.divf %1079, %1080 : vector<32x1xf32>
    %1082 = vector.extract_strided_slice %1081 {offsets = [0, 0], sizes = [8, 1], strides = [1, 1]} : vector<32x1xf32> to vector<8x1xf32>
    %1083 = vector.extract_strided_slice %1081 {offsets = [8, 0], sizes = [8, 1], strides = [1, 1]} : vector<32x1xf32> to vector<8x1xf32>
    %1084 = vector.extract_strided_slice %1081 {offsets = [16, 0], sizes = [8, 1], strides = [1, 1]} : vector<32x1xf32> to vector<8x1xf32>
    %1085 = vector.extract_strided_slice %1081 {offsets = [24, 0], sizes = [8, 1], strides = [1, 1]} : vector<32x1xf32> to vector<8x1xf32>
    %1086 = arith.mulf %1082, %1082 : vector<8x1xf32>
    %1087 = arith.subf %1084, %1086 : vector<8x1xf32>
    %cst_218 = arith.constant 0.000000e+00 : f32
    %1088 = vector.broadcast %cst_218 : f32 to vector<8x1xf32>
    %1089 = arith.maximumf %1087, %1088 : vector<8x1xf32>
    %cst_219 = arith.constant 9.99999974E-6 : f32
    %1090 = vector.broadcast %cst_219 : f32 to vector<8x1xf32>
    %1091 = arith.addf %1089, %1090 : vector<8x1xf32>
    %1092 = math.rsqrt %1091 : vector<8x1xf32>
    %1093 = arith.mulf %1083, %1083 : vector<8x1xf32>
    %1094 = arith.subf %1085, %1093 : vector<8x1xf32>
    %cst_220 = arith.constant 0.000000e+00 : f32
    %1095 = vector.broadcast %cst_220 : f32 to vector<8x1xf32>
    %1096 = arith.maximumf %1094, %1095 : vector<8x1xf32>
    %cst_221 = arith.constant 9.99999974E-6 : f32
    %1097 = vector.broadcast %cst_221 : f32 to vector<8x1xf32>
    %1098 = arith.addf %1096, %1097 : vector<8x1xf32>
    %1099 = math.rsqrt %1098 : vector<8x1xf32>
    %1100 = vector.broadcast %1082 : vector<8x1xf32> to vector<8x32xf32>
    %1101 = arith.subf %1073, %1100 : vector<8x32xf32>
    %1102 = vector.broadcast %1092 : vector<8x1xf32> to vector<8x32xf32>
    %1103 = arith.mulf %1101, %1102 : vector<8x32xf32>
    %1104 = vector.broadcast %1 : vector<1x32xf32> to vector<8x32xf32>
    %1105 = arith.mulf %1103, %1104 : vector<8x32xf32>
    %1106 = vector.broadcast %3 : vector<1x32xf32> to vector<8x32xf32>
    %1107 = arith.addf %1105, %1106 : vector<8x32xf32>
    %1108 = arith.negf %1107 : vector<8x32xf32>
    %1109 = math.exp %1108 : vector<8x32xf32>
    %cst_222 = arith.constant 1.000000e+00 : f32
    %1110 = vector.broadcast %cst_222 : f32 to vector<8x32xf32>
    %1111 = arith.addf %1110, %1109 : vector<8x32xf32>
    %1112 = arith.divf %1110, %1111 : vector<8x32xf32>
    %1113 = vector.broadcast %1083 : vector<8x1xf32> to vector<8x32xf32>
    %1114 = arith.subf %1074, %1113 : vector<8x32xf32>
    %1115 = vector.broadcast %1099 : vector<8x1xf32> to vector<8x32xf32>
    %1116 = arith.mulf %1114, %1115 : vector<8x32xf32>
    %1117 = vector.broadcast %2 : vector<1x32xf32> to vector<8x32xf32>
    %1118 = arith.mulf %1116, %1117 : vector<8x32xf32>
    %1119 = vector.broadcast %4 : vector<1x32xf32> to vector<8x32xf32>
    %1120 = arith.addf %1118, %1119 : vector<8x32xf32>
    %1121 = arith.negf %1120 : vector<8x32xf32>
    %1122 = math.exp %1121 : vector<8x32xf32>
    %cst_223 = arith.constant 1.000000e+00 : f32
    %1123 = vector.broadcast %cst_223 : f32 to vector<8x32xf32>
    %1124 = arith.addf %1123, %1122 : vector<8x32xf32>
    %1125 = arith.divf %1123, %1124 : vector<8x32xf32>
    %1126 = arith.mulf %1063, %1125 : vector<8x32xf32>
    %1127 = arith.truncf %1126 : vector<8x32xf32> to vector<8x32xbf16>
    %cst_224 = arith.constant dense<0.000000e+00> : vector<8x32xf32>
    %1128 = tpu.matmul %1127, %19, %cst_224 {dimension_numbers = #tpu.dot_dimension_numbers<[1], [0], [0], [1], [0, 0, 1, 1], [], []>} : vector<8x32xbf16>, vector<32x32xbf16>, vector<8x32xf32> -> vector<8x32xf32>
    %1129 = arith.index_cast %1067 : i32 to index
    %c0_225 = arith.constant 0 : index
    %1130 = vector.load %arg10[%1129, %c0_225] : memref<128x32xf32, #tpu.memory_space<vmem>>, vector<8x32xf32>
    %1131 = arith.addf %1128, %1130 : vector<8x32xf32>
    %1132 = arith.mulf %1131, %1131 : vector<8x32xf32>
    %1133 = tpu.concatenate %1131, %1132 in 0 : vector<8x32xf32>, vector<8x32xf32> -> vector<16x32xf32>
    %cst_226 = arith.constant dense<0.000000e+00> : vector<16xf32>
    %1134 = vector.multi_reduction <add>, %1133, %cst_226 [1] : vector<16x32xf32> to vector<16xf32>
    %1135 = vector.shape_cast %1134 : vector<16xf32> to vector<16x1xf32>
    %cst_227 = arith.constant 3.200000e+01 : f32
    %1136 = vector.broadcast %cst_227 : f32 to vector<16x1xf32>
    %1137 = arith.divf %1135, %1136 : vector<16x1xf32>
    %1138 = vector.extract_strided_slice %1137 {offsets = [0, 0], sizes = [8, 1], strides = [1, 1]} : vector<16x1xf32> to vector<8x1xf32>
    %1139 = vector.extract_strided_slice %1137 {offsets = [8, 0], sizes = [8, 1], strides = [1, 1]} : vector<16x1xf32> to vector<8x1xf32>
    %1140 = arith.mulf %1138, %1138 : vector<8x1xf32>
    %1141 = arith.subf %1139, %1140 : vector<8x1xf32>
    %cst_228 = arith.constant 0.000000e+00 : f32
    %1142 = vector.broadcast %cst_228 : f32 to vector<8x1xf32>
    %1143 = arith.maximumf %1141, %1142 : vector<8x1xf32>
    %cst_229 = arith.constant 9.99999974E-6 : f32
    %1144 = vector.broadcast %cst_229 : f32 to vector<8x1xf32>
    %1145 = arith.addf %1143, %1144 : vector<8x1xf32>
    %1146 = math.rsqrt %1145 : vector<8x1xf32>
    %1147 = vector.broadcast %1138 : vector<8x1xf32> to vector<8x32xf32>
    %1148 = arith.subf %1131, %1147 : vector<8x32xf32>
    %1149 = vector.broadcast %1146 : vector<8x1xf32> to vector<8x32xf32>
    %1150 = arith.mulf %1148, %1149 : vector<8x32xf32>
    %1151 = vector.broadcast %5 : vector<1x32xf32> to vector<8x32xf32>
    %1152 = arith.mulf %1150, %1151 : vector<8x32xf32>
    %1153 = vector.broadcast %6 : vector<1x32xf32> to vector<8x32xf32>
    %1154 = arith.addf %1152, %1153 : vector<8x32xf32>
    %1155 = math.tanh %1154 : vector<8x32xf32>
    %1156 = arith.subf %1155, %1063 : vector<8x32xf32>
    %1157 = arith.mulf %1112, %1156 : vector<8x32xf32>
    %1158 = arith.addf %1063, %1157 : vector<8x32xf32>
    %1159 = arith.index_cast %1067 : i32 to index
    %c0_230 = arith.constant 0 : index
    %1160 = vector.load %arg7[%1159, %c0_230] : memref<128x32xf32, #tpu.memory_space<vmem>>, vector<8x32xf32>
    tpu.vector_store %arg7[%1159, %c0_230], %1158 {strides = array<i32>} : memref<128x32xf32, #tpu.memory_space<vmem>>, vector<8x32xf32>,
    %c12_i32 = arith.constant 12 : i32
    %c8_i32_231 = arith.constant 8 : i32
    %1161 = arith.muli %c12_i32, %c8_i32_231 : i32
    %1162 = tpu.assume_multiple %1161, 8 : i32
    %1163 = arith.truncf %1158 : vector<8x32xf32> to vector<8x32xbf16>
    %cst_232 = arith.constant dense<0.000000e+00> : vector<8x64xf32>
    %1164 = tpu.matmul %1163, %18, %cst_232 {dimension_numbers = #tpu.dot_dimension_numbers<[1], [0], [0], [1], [0, 0, 1, 1], [], []>} : vector<8x32xbf16>, vector<32x64xbf16>, vector<8x64xf32> -> vector<8x64xf32>
    %1165 = arith.index_cast %1162 : i32 to index
    %c0_233 = arith.constant 0 : index
    %1166 = vector.load %arg9[%1165, %c0_233] : memref<128x64xf32, #tpu.memory_space<vmem>>, vector<8x64xf32>
    %1167 = arith.addf %1164, %1166 : vector<8x64xf32>
    %1168 = vector.extract_strided_slice %1167 {offsets = [0, 0], sizes = [8, 32], strides = [1, 1]} : vector<8x64xf32> to vector<8x32xf32>
    %1169 = vector.extract_strided_slice %1167 {offsets = [0, 32], sizes = [8, 32], strides = [1, 1]} : vector<8x64xf32> to vector<8x32xf32>
    %1170 = arith.mulf %1168, %1168 : vector<8x32xf32>
    %1171 = arith.mulf %1169, %1169 : vector<8x32xf32>
    %1172 = tpu.concatenate %1168, %1169, %1170, %1171 in 0 : vector<8x32xf32>, vector<8x32xf32>, vector<8x32xf32>, vector<8x32xf32> -> vector<32x32xf32>
    %cst_234 = arith.constant dense<0.000000e+00> : vector<32xf32>
    %1173 = vector.multi_reduction <add>, %1172, %cst_234 [1] : vector<32x32xf32> to vector<32xf32>
    %1174 = vector.shape_cast %1173 : vector<32xf32> to vector<32x1xf32>
    %cst_235 = arith.constant 3.200000e+01 : f32
    %1175 = vector.broadcast %cst_235 : f32 to vector<32x1xf32>
    %1176 = arith.divf %1174, %1175 : vector<32x1xf32>
    %1177 = vector.extract_strided_slice %1176 {offsets = [0, 0], sizes = [8, 1], strides = [1, 1]} : vector<32x1xf32> to vector<8x1xf32>
    %1178 = vector.extract_strided_slice %1176 {offsets = [8, 0], sizes = [8, 1], strides = [1, 1]} : vector<32x1xf32> to vector<8x1xf32>
    %1179 = vector.extract_strided_slice %1176 {offsets = [16, 0], sizes = [8, 1], strides = [1, 1]} : vector<32x1xf32> to vector<8x1xf32>
    %1180 = vector.extract_strided_slice %1176 {offsets = [24, 0], sizes = [8, 1], strides = [1, 1]} : vector<32x1xf32> to vector<8x1xf32>
    %1181 = arith.mulf %1177, %1177 : vector<8x1xf32>
    %1182 = arith.subf %1179, %1181 : vector<8x1xf32>
    %cst_236 = arith.constant 0.000000e+00 : f32
    %1183 = vector.broadcast %cst_236 : f32 to vector<8x1xf32>
    %1184 = arith.maximumf %1182, %1183 : vector<8x1xf32>
    %cst_237 = arith.constant 9.99999974E-6 : f32
    %1185 = vector.broadcast %cst_237 : f32 to vector<8x1xf32>
    %1186 = arith.addf %1184, %1185 : vector<8x1xf32>
    %1187 = math.rsqrt %1186 : vector<8x1xf32>
    %1188 = arith.mulf %1178, %1178 : vector<8x1xf32>
    %1189 = arith.subf %1180, %1188 : vector<8x1xf32>
    %cst_238 = arith.constant 0.000000e+00 : f32
    %1190 = vector.broadcast %cst_238 : f32 to vector<8x1xf32>
    %1191 = arith.maximumf %1189, %1190 : vector<8x1xf32>
    %cst_239 = arith.constant 9.99999974E-6 : f32
    %1192 = vector.broadcast %cst_239 : f32 to vector<8x1xf32>
    %1193 = arith.addf %1191, %1192 : vector<8x1xf32>
    %1194 = math.rsqrt %1193 : vector<8x1xf32>
    %1195 = vector.broadcast %1177 : vector<8x1xf32> to vector<8x32xf32>
    %1196 = arith.subf %1168, %1195 : vector<8x32xf32>
    %1197 = vector.broadcast %1187 : vector<8x1xf32> to vector<8x32xf32>
    %1198 = arith.mulf %1196, %1197 : vector<8x32xf32>
    %1199 = vector.broadcast %1 : vector<1x32xf32> to vector<8x32xf32>
    %1200 = arith.mulf %1198, %1199 : vector<8x32xf32>
    %1201 = vector.broadcast %3 : vector<1x32xf32> to vector<8x32xf32>
    %1202 = arith.addf %1200, %1201 : vector<8x32xf32>
    %1203 = arith.negf %1202 : vector<8x32xf32>
    %1204 = math.exp %1203 : vector<8x32xf32>
    %cst_240 = arith.constant 1.000000e+00 : f32
    %1205 = vector.broadcast %cst_240 : f32 to vector<8x32xf32>
    %1206 = arith.addf %1205, %1204 : vector<8x32xf32>
    %1207 = arith.divf %1205, %1206 : vector<8x32xf32>
    %1208 = vector.broadcast %1178 : vector<8x1xf32> to vector<8x32xf32>
    %1209 = arith.subf %1169, %1208 : vector<8x32xf32>
    %1210 = vector.broadcast %1194 : vector<8x1xf32> to vector<8x32xf32>
    %1211 = arith.mulf %1209, %1210 : vector<8x32xf32>
    %1212 = vector.broadcast %2 : vector<1x32xf32> to vector<8x32xf32>
    %1213 = arith.mulf %1211, %1212 : vector<8x32xf32>
    %1214 = vector.broadcast %4 : vector<1x32xf32> to vector<8x32xf32>
    %1215 = arith.addf %1213, %1214 : vector<8x32xf32>
    %1216 = arith.negf %1215 : vector<8x32xf32>
    %1217 = math.exp %1216 : vector<8x32xf32>
    %cst_241 = arith.constant 1.000000e+00 : f32
    %1218 = vector.broadcast %cst_241 : f32 to vector<8x32xf32>
    %1219 = arith.addf %1218, %1217 : vector<8x32xf32>
    %1220 = arith.divf %1218, %1219 : vector<8x32xf32>
    %1221 = arith.mulf %1158, %1220 : vector<8x32xf32>
    %1222 = arith.truncf %1221 : vector<8x32xf32> to vector<8x32xbf16>
    %cst_242 = arith.constant dense<0.000000e+00> : vector<8x32xf32>
    %1223 = tpu.matmul %1222, %19, %cst_242 {dimension_numbers = #tpu.dot_dimension_numbers<[1], [0], [0], [1], [0, 0, 1, 1], [], []>} : vector<8x32xbf16>, vector<32x32xbf16>, vector<8x32xf32> -> vector<8x32xf32>
    %1224 = arith.index_cast %1162 : i32 to index
    %c0_243 = arith.constant 0 : index
    %1225 = vector.load %arg10[%1224, %c0_243] : memref<128x32xf32, #tpu.memory_space<vmem>>, vector<8x32xf32>
    %1226 = arith.addf %1223, %1225 : vector<8x32xf32>
    %1227 = arith.mulf %1226, %1226 : vector<8x32xf32>
    %1228 = tpu.concatenate %1226, %1227 in 0 : vector<8x32xf32>, vector<8x32xf32> -> vector<16x32xf32>
    %cst_244 = arith.constant dense<0.000000e+00> : vector<16xf32>
    %1229 = vector.multi_reduction <add>, %1228, %cst_244 [1] : vector<16x32xf32> to vector<16xf32>
    %1230 = vector.shape_cast %1229 : vector<16xf32> to vector<16x1xf32>
    %cst_245 = arith.constant 3.200000e+01 : f32
    %1231 = vector.broadcast %cst_245 : f32 to vector<16x1xf32>
    %1232 = arith.divf %1230, %1231 : vector<16x1xf32>
    %1233 = vector.extract_strided_slice %1232 {offsets = [0, 0], sizes = [8, 1], strides = [1, 1]} : vector<16x1xf32> to vector<8x1xf32>
    %1234 = vector.extract_strided_slice %1232 {offsets = [8, 0], sizes = [8, 1], strides = [1, 1]} : vector<16x1xf32> to vector<8x1xf32>
    %1235 = arith.mulf %1233, %1233 : vector<8x1xf32>
    %1236 = arith.subf %1234, %1235 : vector<8x1xf32>
    %cst_246 = arith.constant 0.000000e+00 : f32
    %1237 = vector.broadcast %cst_246 : f32 to vector<8x1xf32>
    %1238 = arith.maximumf %1236, %1237 : vector<8x1xf32>
    %cst_247 = arith.constant 9.99999974E-6 : f32
    %1239 = vector.broadcast %cst_247 : f32 to vector<8x1xf32>
    %1240 = arith.addf %1238, %1239 : vector<8x1xf32>
    %1241 = math.rsqrt %1240 : vector<8x1xf32>
    %1242 = vector.broadcast %1233 : vector<8x1xf32> to vector<8x32xf32>
    %1243 = arith.subf %1226, %1242 : vector<8x32xf32>
    %1244 = vector.broadcast %1241 : vector<8x1xf32> to vector<8x32xf32>
    %1245 = arith.mulf %1243, %1244 : vector<8x32xf32>
    %1246 = vector.broadcast %5 : vector<1x32xf32> to vector<8x32xf32>
    %1247 = arith.mulf %1245, %1246 : vector<8x32xf32>
    %1248 = vector.broadcast %6 : vector<1x32xf32> to vector<8x32xf32>
    %1249 = arith.addf %1247, %1248 : vector<8x32xf32>
    %1250 = math.tanh %1249 : vector<8x32xf32>
    %1251 = arith.subf %1250, %1158 : vector<8x32xf32>
    %1252 = arith.mulf %1207, %1251 : vector<8x32xf32>
    %1253 = arith.addf %1158, %1252 : vector<8x32xf32>
    %1254 = arith.index_cast %1162 : i32 to index
    %c0_248 = arith.constant 0 : index
    %1255 = vector.load %arg7[%1254, %c0_248] : memref<128x32xf32, #tpu.memory_space<vmem>>, vector<8x32xf32>
    tpu.vector_store %arg7[%1254, %c0_248], %1253 {strides = array<i32>} : memref<128x32xf32, #tpu.memory_space<vmem>>, vector<8x32xf32>,
    %c13_i32 = arith.constant 13 : i32
    %c8_i32_249 = arith.constant 8 : i32
    %1256 = arith.muli %c13_i32, %c8_i32_249 : i32
    %1257 = tpu.assume_multiple %1256, 8 : i32
    %1258 = arith.truncf %1253 : vector<8x32xf32> to vector<8x32xbf16>
    %cst_250 = arith.constant dense<0.000000e+00> : vector<8x64xf32>
    %1259 = tpu.matmul %1258, %18, %cst_250 {dimension_numbers = #tpu.dot_dimension_numbers<[1], [0], [0], [1], [0, 0, 1, 1], [], []>} : vector<8x32xbf16>, vector<32x64xbf16>, vector<8x64xf32> -> vector<8x64xf32>
    %1260 = arith.index_cast %1257 : i32 to index
    %c0_251 = arith.constant 0 : index
    %1261 = vector.load %arg9[%1260, %c0_251] : memref<128x64xf32, #tpu.memory_space<vmem>>, vector<8x64xf32>
    %1262 = arith.addf %1259, %1261 : vector<8x64xf32>
    %1263 = vector.extract_strided_slice %1262 {offsets = [0, 0], sizes = [8, 32], strides = [1, 1]} : vector<8x64xf32> to vector<8x32xf32>
    %1264 = vector.extract_strided_slice %1262 {offsets = [0, 32], sizes = [8, 32], strides = [1, 1]} : vector<8x64xf32> to vector<8x32xf32>
    %1265 = arith.mulf %1263, %1263 : vector<8x32xf32>
    %1266 = arith.mulf %1264, %1264 : vector<8x32xf32>
    %1267 = tpu.concatenate %1263, %1264, %1265, %1266 in 0 : vector<8x32xf32>, vector<8x32xf32>, vector<8x32xf32>, vector<8x32xf32> -> vector<32x32xf32>
    %cst_252 = arith.constant dense<0.000000e+00> : vector<32xf32>
    %1268 = vector.multi_reduction <add>, %1267, %cst_252 [1] : vector<32x32xf32> to vector<32xf32>
    %1269 = vector.shape_cast %1268 : vector<32xf32> to vector<32x1xf32>
    %cst_253 = arith.constant 3.200000e+01 : f32
    %1270 = vector.broadcast %cst_253 : f32 to vector<32x1xf32>
    %1271 = arith.divf %1269, %1270 : vector<32x1xf32>
    %1272 = vector.extract_strided_slice %1271 {offsets = [0, 0], sizes = [8, 1], strides = [1, 1]} : vector<32x1xf32> to vector<8x1xf32>
    %1273 = vector.extract_strided_slice %1271 {offsets = [8, 0], sizes = [8, 1], strides = [1, 1]} : vector<32x1xf32> to vector<8x1xf32>
    %1274 = vector.extract_strided_slice %1271 {offsets = [16, 0], sizes = [8, 1], strides = [1, 1]} : vector<32x1xf32> to vector<8x1xf32>
    %1275 = vector.extract_strided_slice %1271 {offsets = [24, 0], sizes = [8, 1], strides = [1, 1]} : vector<32x1xf32> to vector<8x1xf32>
    %1276 = arith.mulf %1272, %1272 : vector<8x1xf32>
    %1277 = arith.subf %1274, %1276 : vector<8x1xf32>
    %cst_254 = arith.constant 0.000000e+00 : f32
    %1278 = vector.broadcast %cst_254 : f32 to vector<8x1xf32>
    %1279 = arith.maximumf %1277, %1278 : vector<8x1xf32>
    %cst_255 = arith.constant 9.99999974E-6 : f32
    %1280 = vector.broadcast %cst_255 : f32 to vector<8x1xf32>
    %1281 = arith.addf %1279, %1280 : vector<8x1xf32>
    %1282 = math.rsqrt %1281 : vector<8x1xf32>
    %1283 = arith.mulf %1273, %1273 : vector<8x1xf32>
    %1284 = arith.subf %1275, %1283 : vector<8x1xf32>
    %cst_256 = arith.constant 0.000000e+00 : f32
    %1285 = vector.broadcast %cst_256 : f32 to vector<8x1xf32>
    %1286 = arith.maximumf %1284, %1285 : vector<8x1xf32>
    %cst_257 = arith.constant 9.99999974E-6 : f32
    %1287 = vector.broadcast %cst_257 : f32 to vector<8x1xf32>
    %1288 = arith.addf %1286, %1287 : vector<8x1xf32>
    %1289 = math.rsqrt %1288 : vector<8x1xf32>
    %1290 = vector.broadcast %1272 : vector<8x1xf32> to vector<8x32xf32>
    %1291 = arith.subf %1263, %1290 : vector<8x32xf32>
    %1292 = vector.broadcast %1282 : vector<8x1xf32> to vector<8x32xf32>
    %1293 = arith.mulf %1291, %1292 : vector<8x32xf32>
    %1294 = vector.broadcast %1 : vector<1x32xf32> to vector<8x32xf32>
    %1295 = arith.mulf %1293, %1294 : vector<8x32xf32>
    %1296 = vector.broadcast %3 : vector<1x32xf32> to vector<8x32xf32>
    %1297 = arith.addf %1295, %1296 : vector<8x32xf32>
    %1298 = arith.negf %1297 : vector<8x32xf32>
    %1299 = math.exp %1298 : vector<8x32xf32>
    %cst_258 = arith.constant 1.000000e+00 : f32
    %1300 = vector.broadcast %cst_258 : f32 to vector<8x32xf32>
    %1301 = arith.addf %1300, %1299 : vector<8x32xf32>
    %1302 = arith.divf %1300, %1301 : vector<8x32xf32>
    %1303 = vector.broadcast %1273 : vector<8x1xf32> to vector<8x32xf32>
    %1304 = arith.subf %1264, %1303 : vector<8x32xf32>
    %1305 = vector.broadcast %1289 : vector<8x1xf32> to vector<8x32xf32>
    %1306 = arith.mulf %1304, %1305 : vector<8x32xf32>
    %1307 = vector.broadcast %2 : vector<1x32xf32> to vector<8x32xf32>
    %1308 = arith.mulf %1306, %1307 : vector<8x32xf32>
    %1309 = vector.broadcast %4 : vector<1x32xf32> to vector<8x32xf32>
    %1310 = arith.addf %1308, %1309 : vector<8x32xf32>
    %1311 = arith.negf %1310 : vector<8x32xf32>
    %1312 = math.exp %1311 : vector<8x32xf32>
    %cst_259 = arith.constant 1.000000e+00 : f32
    %1313 = vector.broadcast %cst_259 : f32 to vector<8x32xf32>
    %1314 = arith.addf %1313, %1312 : vector<8x32xf32>
    %1315 = arith.divf %1313, %1314 : vector<8x32xf32>
    %1316 = arith.mulf %1253, %1315 : vector<8x32xf32>
    %1317 = arith.truncf %1316 : vector<8x32xf32> to vector<8x32xbf16>
    %cst_260 = arith.constant dense<0.000000e+00> : vector<8x32xf32>
    %1318 = tpu.matmul %1317, %19, %cst_260 {dimension_numbers = #tpu.dot_dimension_numbers<[1], [0], [0], [1], [0, 0, 1, 1], [], []>} : vector<8x32xbf16>, vector<32x32xbf16>, vector<8x32xf32> -> vector<8x32xf32>
    %1319 = arith.index_cast %1257 : i32 to index
    %c0_261 = arith.constant 0 : index
    %1320 = vector.load %arg10[%1319, %c0_261] : memref<128x32xf32, #tpu.memory_space<vmem>>, vector<8x32xf32>
    %1321 = arith.addf %1318, %1320 : vector<8x32xf32>
    %1322 = arith.mulf %1321, %1321 : vector<8x32xf32>
    %1323 = tpu.concatenate %1321, %1322 in 0 : vector<8x32xf32>, vector<8x32xf32> -> vector<16x32xf32>
    %cst_262 = arith.constant dense<0.000000e+00> : vector<16xf32>
    %1324 = vector.multi_reduction <add>, %1323, %cst_262 [1] : vector<16x32xf32> to vector<16xf32>
    %1325 = vector.shape_cast %1324 : vector<16xf32> to vector<16x1xf32>
    %cst_263 = arith.constant 3.200000e+01 : f32
    %1326 = vector.broadcast %cst_263 : f32 to vector<16x1xf32>
    %1327 = arith.divf %1325, %1326 : vector<16x1xf32>
    %1328 = vector.extract_strided_slice %1327 {offsets = [0, 0], sizes = [8, 1], strides = [1, 1]} : vector<16x1xf32> to vector<8x1xf32>
    %1329 = vector.extract_strided_slice %1327 {offsets = [8, 0], sizes = [8, 1], strides = [1, 1]} : vector<16x1xf32> to vector<8x1xf32>
    %1330 = arith.mulf %1328, %1328 : vector<8x1xf32>
    %1331 = arith.subf %1329, %1330 : vector<8x1xf32>
    %cst_264 = arith.constant 0.000000e+00 : f32
    %1332 = vector.broadcast %cst_264 : f32 to vector<8x1xf32>
    %1333 = arith.maximumf %1331, %1332 : vector<8x1xf32>
    %cst_265 = arith.constant 9.99999974E-6 : f32
    %1334 = vector.broadcast %cst_265 : f32 to vector<8x1xf32>
    %1335 = arith.addf %1333, %1334 : vector<8x1xf32>
    %1336 = math.rsqrt %1335 : vector<8x1xf32>
    %1337 = vector.broadcast %1328 : vector<8x1xf32> to vector<8x32xf32>
    %1338 = arith.subf %1321, %1337 : vector<8x32xf32>
    %1339 = vector.broadcast %1336 : vector<8x1xf32> to vector<8x32xf32>
    %1340 = arith.mulf %1338, %1339 : vector<8x32xf32>
    %1341 = vector.broadcast %5 : vector<1x32xf32> to vector<8x32xf32>
    %1342 = arith.mulf %1340, %1341 : vector<8x32xf32>
    %1343 = vector.broadcast %6 : vector<1x32xf32> to vector<8x32xf32>
    %1344 = arith.addf %1342, %1343 : vector<8x32xf32>
    %1345 = math.tanh %1344 : vector<8x32xf32>
    %1346 = arith.subf %1345, %1253 : vector<8x32xf32>
    %1347 = arith.mulf %1302, %1346 : vector<8x32xf32>
    %1348 = arith.addf %1253, %1347 : vector<8x32xf32>
    %1349 = arith.index_cast %1257 : i32 to index
    %c0_266 = arith.constant 0 : index
    %1350 = vector.load %arg7[%1349, %c0_266] : memref<128x32xf32, #tpu.memory_space<vmem>>, vector<8x32xf32>
    tpu.vector_store %arg7[%1349, %c0_266], %1348 {strides = array<i32>} : memref<128x32xf32, #tpu.memory_space<vmem>>, vector<8x32xf32>,
    %c14_i32 = arith.constant 14 : i32
    %c8_i32_267 = arith.constant 8 : i32
    %1351 = arith.muli %c14_i32, %c8_i32_267 : i32
    %1352 = tpu.assume_multiple %1351, 8 : i32
    %1353 = arith.truncf %1348 : vector<8x32xf32> to vector<8x32xbf16>
    %cst_268 = arith.constant dense<0.000000e+00> : vector<8x64xf32>
    %1354 = tpu.matmul %1353, %18, %cst_268 {dimension_numbers = #tpu.dot_dimension_numbers<[1], [0], [0], [1], [0, 0, 1, 1], [], []>} : vector<8x32xbf16>, vector<32x64xbf16>, vector<8x64xf32> -> vector<8x64xf32>
    %1355 = arith.index_cast %1352 : i32 to index
    %c0_269 = arith.constant 0 : index
    %1356 = vector.load %arg9[%1355, %c0_269] : memref<128x64xf32, #tpu.memory_space<vmem>>, vector<8x64xf32>
    %1357 = arith.addf %1354, %1356 : vector<8x64xf32>
    %1358 = vector.extract_strided_slice %1357 {offsets = [0, 0], sizes = [8, 32], strides = [1, 1]} : vector<8x64xf32> to vector<8x32xf32>
    %1359 = vector.extract_strided_slice %1357 {offsets = [0, 32], sizes = [8, 32], strides = [1, 1]} : vector<8x64xf32> to vector<8x32xf32>
    %1360 = arith.mulf %1358, %1358 : vector<8x32xf32>
    %1361 = arith.mulf %1359, %1359 : vector<8x32xf32>
    %1362 = tpu.concatenate %1358, %1359, %1360, %1361 in 0 : vector<8x32xf32>, vector<8x32xf32>, vector<8x32xf32>, vector<8x32xf32> -> vector<32x32xf32>
    %cst_270 = arith.constant dense<0.000000e+00> : vector<32xf32>
    %1363 = vector.multi_reduction <add>, %1362, %cst_270 [1] : vector<32x32xf32> to vector<32xf32>
    %1364 = vector.shape_cast %1363 : vector<32xf32> to vector<32x1xf32>
    %cst_271 = arith.constant 3.200000e+01 : f32
    %1365 = vector.broadcast %cst_271 : f32 to vector<32x1xf32>
    %1366 = arith.divf %1364, %1365 : vector<32x1xf32>
    %1367 = vector.extract_strided_slice %1366 {offsets = [0, 0], sizes = [8, 1], strides = [1, 1]} : vector<32x1xf32> to vector<8x1xf32>
    %1368 = vector.extract_strided_slice %1366 {offsets = [8, 0], sizes = [8, 1], strides = [1, 1]} : vector<32x1xf32> to vector<8x1xf32>
    %1369 = vector.extract_strided_slice %1366 {offsets = [16, 0], sizes = [8, 1], strides = [1, 1]} : vector<32x1xf32> to vector<8x1xf32>
    %1370 = vector.extract_strided_slice %1366 {offsets = [24, 0], sizes = [8, 1], strides = [1, 1]} : vector<32x1xf32> to vector<8x1xf32>
    %1371 = arith.mulf %1367, %1367 : vector<8x1xf32>
    %1372 = arith.subf %1369, %1371 : vector<8x1xf32>
    %cst_272 = arith.constant 0.000000e+00 : f32
    %1373 = vector.broadcast %cst_272 : f32 to vector<8x1xf32>
    %1374 = arith.maximumf %1372, %1373 : vector<8x1xf32>
    %cst_273 = arith.constant 9.99999974E-6 : f32
    %1375 = vector.broadcast %cst_273 : f32 to vector<8x1xf32>
    %1376 = arith.addf %1374, %1375 : vector<8x1xf32>
    %1377 = math.rsqrt %1376 : vector<8x1xf32>
    %1378 = arith.mulf %1368, %1368 : vector<8x1xf32>
    %1379 = arith.subf %1370, %1378 : vector<8x1xf32>
    %cst_274 = arith.constant 0.000000e+00 : f32
    %1380 = vector.broadcast %cst_274 : f32 to vector<8x1xf32>
    %1381 = arith.maximumf %1379, %1380 : vector<8x1xf32>
    %cst_275 = arith.constant 9.99999974E-6 : f32
    %1382 = vector.broadcast %cst_275 : f32 to vector<8x1xf32>
    %1383 = arith.addf %1381, %1382 : vector<8x1xf32>
    %1384 = math.rsqrt %1383 : vector<8x1xf32>
    %1385 = vector.broadcast %1367 : vector<8x1xf32> to vector<8x32xf32>
    %1386 = arith.subf %1358, %1385 : vector<8x32xf32>
    %1387 = vector.broadcast %1377 : vector<8x1xf32> to vector<8x32xf32>
    %1388 = arith.mulf %1386, %1387 : vector<8x32xf32>
    %1389 = vector.broadcast %1 : vector<1x32xf32> to vector<8x32xf32>
    %1390 = arith.mulf %1388, %1389 : vector<8x32xf32>
    %1391 = vector.broadcast %3 : vector<1x32xf32> to vector<8x32xf32>
    %1392 = arith.addf %1390, %1391 : vector<8x32xf32>
    %1393 = arith.negf %1392 : vector<8x32xf32>
    %1394 = math.exp %1393 : vector<8x32xf32>
    %cst_276 = arith.constant 1.000000e+00 : f32
    %1395 = vector.broadcast %cst_276 : f32 to vector<8x32xf32>
    %1396 = arith.addf %1395, %1394 : vector<8x32xf32>
    %1397 = arith.divf %1395, %1396 : vector<8x32xf32>
    %1398 = vector.broadcast %1368 : vector<8x1xf32> to vector<8x32xf32>
    %1399 = arith.subf %1359, %1398 : vector<8x32xf32>
    %1400 = vector.broadcast %1384 : vector<8x1xf32> to vector<8x32xf32>
    %1401 = arith.mulf %1399, %1400 : vector<8x32xf32>
    %1402 = vector.broadcast %2 : vector<1x32xf32> to vector<8x32xf32>
    %1403 = arith.mulf %1401, %1402 : vector<8x32xf32>
    %1404 = vector.broadcast %4 : vector<1x32xf32> to vector<8x32xf32>
    %1405 = arith.addf %1403, %1404 : vector<8x32xf32>
    %1406 = arith.negf %1405 : vector<8x32xf32>
    %1407 = math.exp %1406 : vector<8x32xf32>
    %cst_277 = arith.constant 1.000000e+00 : f32
    %1408 = vector.broadcast %cst_277 : f32 to vector<8x32xf32>
    %1409 = arith.addf %1408, %1407 : vector<8x32xf32>
    %1410 = arith.divf %1408, %1409 : vector<8x32xf32>
    %1411 = arith.mulf %1348, %1410 : vector<8x32xf32>
    %1412 = arith.truncf %1411 : vector<8x32xf32> to vector<8x32xbf16>
    %cst_278 = arith.constant dense<0.000000e+00> : vector<8x32xf32>
    %1413 = tpu.matmul %1412, %19, %cst_278 {dimension_numbers = #tpu.dot_dimension_numbers<[1], [0], [0], [1], [0, 0, 1, 1], [], []>} : vector<8x32xbf16>, vector<32x32xbf16>, vector<8x32xf32> -> vector<8x32xf32>
    %1414 = arith.index_cast %1352 : i32 to index
    %c0_279 = arith.constant 0 : index
    %1415 = vector.load %arg10[%1414, %c0_279] : memref<128x32xf32, #tpu.memory_space<vmem>>, vector<8x32xf32>
    %1416 = arith.addf %1413, %1415 : vector<8x32xf32>
    %1417 = arith.mulf %1416, %1416 : vector<8x32xf32>
    %1418 = tpu.concatenate %1416, %1417 in 0 : vector<8x32xf32>, vector<8x32xf32> -> vector<16x32xf32>
    %cst_280 = arith.constant dense<0.000000e+00> : vector<16xf32>
    %1419 = vector.multi_reduction <add>, %1418, %cst_280 [1] : vector<16x32xf32> to vector<16xf32>
    %1420 = vector.shape_cast %1419 : vector<16xf32> to vector<16x1xf32>
    %cst_281 = arith.constant 3.200000e+01 : f32
    %1421 = vector.broadcast %cst_281 : f32 to vector<16x1xf32>
    %1422 = arith.divf %1420, %1421 : vector<16x1xf32>
    %1423 = vector.extract_strided_slice %1422 {offsets = [0, 0], sizes = [8, 1], strides = [1, 1]} : vector<16x1xf32> to vector<8x1xf32>
    %1424 = vector.extract_strided_slice %1422 {offsets = [8, 0], sizes = [8, 1], strides = [1, 1]} : vector<16x1xf32> to vector<8x1xf32>
    %1425 = arith.mulf %1423, %1423 : vector<8x1xf32>
    %1426 = arith.subf %1424, %1425 : vector<8x1xf32>
    %cst_282 = arith.constant 0.000000e+00 : f32
    %1427 = vector.broadcast %cst_282 : f32 to vector<8x1xf32>
    %1428 = arith.maximumf %1426, %1427 : vector<8x1xf32>
    %cst_283 = arith.constant 9.99999974E-6 : f32
    %1429 = vector.broadcast %cst_283 : f32 to vector<8x1xf32>
    %1430 = arith.addf %1428, %1429 : vector<8x1xf32>
    %1431 = math.rsqrt %1430 : vector<8x1xf32>
    %1432 = vector.broadcast %1423 : vector<8x1xf32> to vector<8x32xf32>
    %1433 = arith.subf %1416, %1432 : vector<8x32xf32>
    %1434 = vector.broadcast %1431 : vector<8x1xf32> to vector<8x32xf32>
    %1435 = arith.mulf %1433, %1434 : vector<8x32xf32>
    %1436 = vector.broadcast %5 : vector<1x32xf32> to vector<8x32xf32>
    %1437 = arith.mulf %1435, %1436 : vector<8x32xf32>
    %1438 = vector.broadcast %6 : vector<1x32xf32> to vector<8x32xf32>
    %1439 = arith.addf %1437, %1438 : vector<8x32xf32>
    %1440 = math.tanh %1439 : vector<8x32xf32>
    %1441 = arith.subf %1440, %1348 : vector<8x32xf32>
    %1442 = arith.mulf %1397, %1441 : vector<8x32xf32>
    %1443 = arith.addf %1348, %1442 : vector<8x32xf32>
    %1444 = arith.index_cast %1352 : i32 to index
    %c0_284 = arith.constant 0 : index
    %1445 = vector.load %arg7[%1444, %c0_284] : memref<128x32xf32, #tpu.memory_space<vmem>>, vector<8x32xf32>
    tpu.vector_store %arg7[%1444, %c0_284], %1443 {strides = array<i32>} : memref<128x32xf32, #tpu.memory_space<vmem>>, vector<8x32xf32>,
    %c15_i32 = arith.constant 15 : i32
    %c8_i32_285 = arith.constant 8 : i32
    %1446 = arith.muli %c15_i32, %c8_i32_285 : i32
    %1447 = tpu.assume_multiple %1446, 8 : i32
    %1448 = arith.truncf %1443 : vector<8x32xf32> to vector<8x32xbf16>
    %cst_286 = arith.constant dense<0.000000e+00> : vector<8x64xf32>
    %1449 = tpu.matmul %1448, %18, %cst_286 {dimension_numbers = #tpu.dot_dimension_numbers<[1], [0], [0], [1], [0, 0, 1, 1], [], []>} : vector<8x32xbf16>, vector<32x64xbf16>, vector<8x64xf32> -> vector<8x64xf32>
    %1450 = arith.index_cast %1447 : i32 to index
    %c0_287 = arith.constant 0 : index
    %1451 = vector.load %arg9[%1450, %c0_287] : memref<128x64xf32, #tpu.memory_space<vmem>>, vector<8x64xf32>
    %1452 = arith.addf %1449, %1451 : vector<8x64xf32>
    %1453 = vector.extract_strided_slice %1452 {offsets = [0, 0], sizes = [8, 32], strides = [1, 1]} : vector<8x64xf32> to vector<8x32xf32>
    %1454 = vector.extract_strided_slice %1452 {offsets = [0, 32], sizes = [8, 32], strides = [1, 1]} : vector<8x64xf32> to vector<8x32xf32>
    %1455 = arith.mulf %1453, %1453 : vector<8x32xf32>
    %1456 = arith.mulf %1454, %1454 : vector<8x32xf32>
    %1457 = tpu.concatenate %1453, %1454, %1455, %1456 in 0 : vector<8x32xf32>, vector<8x32xf32>, vector<8x32xf32>, vector<8x32xf32> -> vector<32x32xf32>
    %cst_288 = arith.constant dense<0.000000e+00> : vector<32xf32>
    %1458 = vector.multi_reduction <add>, %1457, %cst_288 [1] : vector<32x32xf32> to vector<32xf32>
    %1459 = vector.shape_cast %1458 : vector<32xf32> to vector<32x1xf32>
    %cst_289 = arith.constant 3.200000e+01 : f32
    %1460 = vector.broadcast %cst_289 : f32 to vector<32x1xf32>
    %1461 = arith.divf %1459, %1460 : vector<32x1xf32>
    %1462 = vector.extract_strided_slice %1461 {offsets = [0, 0], sizes = [8, 1], strides = [1, 1]} : vector<32x1xf32> to vector<8x1xf32>
    %1463 = vector.extract_strided_slice %1461 {offsets = [8, 0], sizes = [8, 1], strides = [1, 1]} : vector<32x1xf32> to vector<8x1xf32>
    %1464 = vector.extract_strided_slice %1461 {offsets = [16, 0], sizes = [8, 1], strides = [1, 1]} : vector<32x1xf32> to vector<8x1xf32>
    %1465 = vector.extract_strided_slice %1461 {offsets = [24, 0], sizes = [8, 1], strides = [1, 1]} : vector<32x1xf32> to vector<8x1xf32>
    %1466 = arith.mulf %1462, %1462 : vector<8x1xf32>
    %1467 = arith.subf %1464, %1466 : vector<8x1xf32>
    %cst_290 = arith.constant 0.000000e+00 : f32
    %1468 = vector.broadcast %cst_290 : f32 to vector<8x1xf32>
    %1469 = arith.maximumf %1467, %1468 : vector<8x1xf32>
    %cst_291 = arith.constant 9.99999974E-6 : f32
    %1470 = vector.broadcast %cst_291 : f32 to vector<8x1xf32>
    %1471 = arith.addf %1469, %1470 : vector<8x1xf32>
    %1472 = math.rsqrt %1471 : vector<8x1xf32>
    %1473 = arith.mulf %1463, %1463 : vector<8x1xf32>
    %1474 = arith.subf %1465, %1473 : vector<8x1xf32>
    %cst_292 = arith.constant 0.000000e+00 : f32
    %1475 = vector.broadcast %cst_292 : f32 to vector<8x1xf32>
    %1476 = arith.maximumf %1474, %1475 : vector<8x1xf32>
    %cst_293 = arith.constant 9.99999974E-6 : f32
    %1477 = vector.broadcast %cst_293 : f32 to vector<8x1xf32>
    %1478 = arith.addf %1476, %1477 : vector<8x1xf32>
    %1479 = math.rsqrt %1478 : vector<8x1xf32>
    %1480 = vector.broadcast %1462 : vector<8x1xf32> to vector<8x32xf32>
    %1481 = arith.subf %1453, %1480 : vector<8x32xf32>
    %1482 = vector.broadcast %1472 : vector<8x1xf32> to vector<8x32xf32>
    %1483 = arith.mulf %1481, %1482 : vector<8x32xf32>
    %1484 = vector.broadcast %1 : vector<1x32xf32> to vector<8x32xf32>
    %1485 = arith.mulf %1483, %1484 : vector<8x32xf32>
    %1486 = vector.broadcast %3 : vector<1x32xf32> to vector<8x32xf32>
    %1487 = arith.addf %1485, %1486 : vector<8x32xf32>
    %1488 = arith.negf %1487 : vector<8x32xf32>
    %1489 = math.exp %1488 : vector<8x32xf32>
    %cst_294 = arith.constant 1.000000e+00 : f32
    %1490 = vector.broadcast %cst_294 : f32 to vector<8x32xf32>
    %1491 = arith.addf %1490, %1489 : vector<8x32xf32>
    %1492 = arith.divf %1490, %1491 : vector<8x32xf32>
    %1493 = vector.broadcast %1463 : vector<8x1xf32> to vector<8x32xf32>
    %1494 = arith.subf %1454, %1493 : vector<8x32xf32>
    %1495 = vector.broadcast %1479 : vector<8x1xf32> to vector<8x32xf32>
    %1496 = arith.mulf %1494, %1495 : vector<8x32xf32>
    %1497 = vector.broadcast %2 : vector<1x32xf32> to vector<8x32xf32>
    %1498 = arith.mulf %1496, %1497 : vector<8x32xf32>
    %1499 = vector.broadcast %4 : vector<1x32xf32> to vector<8x32xf32>
    %1500 = arith.addf %1498, %1499 : vector<8x32xf32>
    %1501 = arith.negf %1500 : vector<8x32xf32>
    %1502 = math.exp %1501 : vector<8x32xf32>
    %cst_295 = arith.constant 1.000000e+00 : f32
    %1503 = vector.broadcast %cst_295 : f32 to vector<8x32xf32>
    %1504 = arith.addf %1503, %1502 : vector<8x32xf32>
    %1505 = arith.divf %1503, %1504 : vector<8x32xf32>
    %1506 = arith.mulf %1443, %1505 : vector<8x32xf32>
    %1507 = arith.truncf %1506 : vector<8x32xf32> to vector<8x32xbf16>
    %cst_296 = arith.constant dense<0.000000e+00> : vector<8x32xf32>
    %1508 = tpu.matmul %1507, %19, %cst_296 {dimension_numbers = #tpu.dot_dimension_numbers<[1], [0], [0], [1], [0, 0, 1, 1], [], []>} : vector<8x32xbf16>, vector<32x32xbf16>, vector<8x32xf32> -> vector<8x32xf32>
    %1509 = arith.index_cast %1447 : i32 to index
    %c0_297 = arith.constant 0 : index
    %1510 = vector.load %arg10[%1509, %c0_297] : memref<128x32xf32, #tpu.memory_space<vmem>>, vector<8x32xf32>
    %1511 = arith.addf %1508, %1510 : vector<8x32xf32>
    %1512 = arith.mulf %1511, %1511 : vector<8x32xf32>
    %1513 = tpu.concatenate %1511, %1512 in 0 : vector<8x32xf32>, vector<8x32xf32> -> vector<16x32xf32>
    %cst_298 = arith.constant dense<0.000000e+00> : vector<16xf32>
    %1514 = vector.multi_reduction <add>, %1513, %cst_298 [1] : vector<16x32xf32> to vector<16xf32>
    %1515 = vector.shape_cast %1514 : vector<16xf32> to vector<16x1xf32>
    %cst_299 = arith.constant 3.200000e+01 : f32
    %1516 = vector.broadcast %cst_299 : f32 to vector<16x1xf32>
    %1517 = arith.divf %1515, %1516 : vector<16x1xf32>
    %1518 = vector.extract_strided_slice %1517 {offsets = [0, 0], sizes = [8, 1], strides = [1, 1]} : vector<16x1xf32> to vector<8x1xf32>
    %1519 = vector.extract_strided_slice %1517 {offsets = [8, 0], sizes = [8, 1], strides = [1, 1]} : vector<16x1xf32> to vector<8x1xf32>
    %1520 = arith.mulf %1518, %1518 : vector<8x1xf32>
    %1521 = arith.subf %1519, %1520 : vector<8x1xf32>
    %cst_300 = arith.constant 0.000000e+00 : f32
    %1522 = vector.broadcast %cst_300 : f32 to vector<8x1xf32>
    %1523 = arith.maximumf %1521, %1522 : vector<8x1xf32>
    %cst_301 = arith.constant 9.99999974E-6 : f32
    %1524 = vector.broadcast %cst_301 : f32 to vector<8x1xf32>
    %1525 = arith.addf %1523, %1524 : vector<8x1xf32>
    %1526 = math.rsqrt %1525 : vector<8x1xf32>
    %1527 = vector.broadcast %1518 : vector<8x1xf32> to vector<8x32xf32>
    %1528 = arith.subf %1511, %1527 : vector<8x32xf32>
    %1529 = vector.broadcast %1526 : vector<8x1xf32> to vector<8x32xf32>
    %1530 = arith.mulf %1528, %1529 : vector<8x32xf32>
    %1531 = vector.broadcast %5 : vector<1x32xf32> to vector<8x32xf32>
    %1532 = arith.mulf %1530, %1531 : vector<8x32xf32>
    %1533 = vector.broadcast %6 : vector<1x32xf32> to vector<8x32xf32>
    %1534 = arith.addf %1532, %1533 : vector<8x32xf32>
    %1535 = math.tanh %1534 : vector<8x32xf32>
    %1536 = arith.subf %1535, %1443 : vector<8x32xf32>
    %1537 = arith.mulf %1492, %1536 : vector<8x32xf32>
    %1538 = arith.addf %1443, %1537 : vector<8x32xf32>
    %1539 = arith.index_cast %1447 : i32 to index
    %c0_302 = arith.constant 0 : index
    %1540 = vector.load %arg7[%1539, %c0_302] : memref<128x32xf32, #tpu.memory_space<vmem>>, vector<8x32xf32>
    tpu.vector_store %arg7[%1539, %c0_302], %1538 {strides = array<i32>} : memref<128x32xf32, #tpu.memory_space<vmem>>, vector<8x32xf32>,
    %c16_i32 = arith.constant 16 : i32
    %c0_303 = arith.constant 0 : index
    %c0_304 = arith.constant 0 : index
    %1541 = vector.load %arg7[%c0_303, %c0_304] : memref<128x32xf32, #tpu.memory_space<vmem>>, vector<128x32xf32>
    %1542 = arith.truncf %1541 : vector<128x32xf32> to vector<128x32xbf16>
    %c0_305 = arith.constant 0 : index
    %c0_306 = arith.constant 0 : index
    %1543 = vector.load %arg5[%c0_305, %c0_306] : memref<32x128xbf16, #tpu.memory_space<vmem>>, vector<32x128xbf16>
    %cst_307 = arith.constant dense<0.000000e+00> : vector<128x128xf32>
    %1544 = tpu.matmul %1542, %1543, %cst_307 {dimension_numbers = #tpu.dot_dimension_numbers<[1], [0], [0], [1], [0, 0, 1, 1], [], []>} : vector<128x32xbf16>, vector<32x128xbf16>, vector<128x128xf32> -> vector<128x128xf32>
    %1545 = vector.broadcast %7 : vector<1x128xf32> to vector<128x128xf32>
    %1546 = arith.addf %1544, %1545 : vector<128x128xf32>
    %c0_308 = arith.constant 0 : index
    %c0_309 = arith.constant 0 : index
    %1547 = vector.load %arg8[%c0_308, %c0_309] : memref<128x128xf32, #tpu.memory_space<vmem>>, vector<128x128xf32>
    tpu.vector_store %arg8[%c0_308, %c0_309], %1546 {strides = array<i32>} : memref<128x128xf32, #tpu.memory_space<vmem>>, vector<128x128xf32>,
    return
  }
}

</mosaic_0001>

<llo_original>
// kernel: gru_forward.1
$region0: #{gru_forward.1}
  #allocation0 [shape = 'u32[]', space=smem, size = 0x4, offset = 0x4, fixed_abs, tag = 'smem constant byte address 0x4 - core index']
  #allocation1 [shape = 'u32[144,128]{1,0:T(1,128)}', space=vmem, size = 0x12000, scoped, tag = 'internal scratch']
  #allocation2 [shape = 'f32[128,64]{1,0:T(8,128)}', space=vmem, size = 0x10000, scoped, tag = 'scratch operand']
  #allocation3 [shape = 'f32[128,32]{1,0:T(8,128)}', space=vmem, size = 0x10000, scoped, tag = 'scratch operand']
  %s0 = inlined_call_operand.vmem [shape: bf16[128,32], index: 0, kind: input, shape index: {}]
  %s1 = inlined_call_operand.vmem [shape: f32[8,32], index: 1, kind: input, shape index: {}]
  %s2 = inlined_call_operand.vmem [shape: bf16[32,96], index: 2, kind: input, shape index: {}]
  %s3 = inlined_call_operand.vmem [shape: bf16[32,64], index: 3, kind: input, shape index: {}]
  %s4 = inlined_call_operand.vmem [shape: bf16[32,32], index: 4, kind: input, shape index: {}]
  %s5 = inlined_call_operand.vmem [shape: bf16[32,128], index: 5, kind: input, shape index: {}]
  %s6 = inlined_call_operand.vmem [shape: f32[8,128], index: 6, kind: input, shape index: {}]
  %s7 = inlined_call_operand.vmem [shape: f32[128,32], index: 7, kind: output, shape index: {0}]
  %s8 = inlined_call_operand.vmem [shape: f32[128,128], index: 8, kind: output, shape index: {1}]
  %9 = xla_tuple %s7, %s8
  %s10 = sld [smem:[#allocation0]]
  $region46: #{gru_forward.1} parent=0
    _
  %s12 = ssub.s32 1, %s10
  %s13 = scalar_select 0, %s12, %s10
  // Predicated region
  $region2: #{gru_forward.1} parent=0 // pred_check
    _
  $region3: #{gru_forward.1} parent=0 // pred_check_branch
    %15 = sbr.rel (0) target = $region5
  $region4: #{gru_forward.1} parent=0 // pred_region
    _
  $region5: #{gru_forward.1} parent=0 // pred_fallthru
    _
  // Predicated region
  $region6: #{gru_forward.1} parent=0 // pred_check
    _
  $region7: #{gru_forward.1} parent=0 // pred_check_branch
    %17 = sbr.rel (0) target = $region9
  $region8: #{gru_forward.1} parent=0 // pred_region
    _
  $region9: #{gru_forward.1} parent=0 // pred_fallthru
    _
  // Predicated region
  $region10: #{gru_forward.1} parent=0 // pred_check
    _
  $region11: #{gru_forward.1} parent=0 // pred_check_branch
    %19 = sbr.rel (0) target = $region13
  $region12: #{gru_forward.1} parent=0 // pred_region
    _
  $region13: #{gru_forward.1} parent=0 // pred_fallthru
    _
  // Predicated region
  $region14: #{gru_forward.1} parent=0 // pred_check
    _
  $region15: #{gru_forward.1} parent=0 // pred_check_branch
    %21 = sbr.rel (0) target = $region17
  $region16: #{gru_forward.1} parent=0 // pred_region
    _
  $region17: #{gru_forward.1} parent=0 // pred_fallthru
    _
  // Predicated region
  $region18: #{gru_forward.1} parent=0 // pred_check
    _
  $region19: #{gru_forward.1} parent=0 // pred_check_branch
    %23 = sbr.rel (0) target = $region21
  $region20: #{gru_forward.1} parent=0 // pred_region
    _
  $region21: #{gru_forward.1} parent=0 // pred_fallthru
    _
  // Predicated region
  $region22: #{gru_forward.1} parent=0 // pred_check
    _
  $region23: #{gru_forward.1} parent=0 // pred_check_branch
    %25 = sbr.rel (0) target = $region25
  $region24: #{gru_forward.1} parent=0 // pred_region
    _
  $region25: #{gru_forward.1} parent=0 // pred_fallthru
    _
  // Predicated region
  $region26: #{gru_forward.1} parent=0 // pred_check
    _
  $region27: #{gru_forward.1} parent=0 // pred_check_branch
    %27 = sbr.rel (0) target = $region29
  $region28: #{gru_forward.1} parent=0 // pred_region
    _
  $region29: #{gru_forward.1} parent=0 // pred_fallthru
    _
  %v29 = vld [vmem:[%s6] sm:$0xff]
  %v30 = vld [vmem:[%s0] sm:$0xf]
  %v31 = vld [vmem:[%s0 + $0x4] sm:$0xf]
  %v32 = vld [vmem:[%s0 + $0x8] sm:$0xf]
  %v33 = vld [vmem:[%s0 + $0xc] sm:$0xf]
  %v34 = vld [vmem:[%s0 + $0x10] sm:$0xf]
  %v35 = vld [vmem:[%s0 + $0x14] sm:$0xf]
  %v36 = vld [vmem:[%s0 + $0x18] sm:$0xf]
  %v37 = vld [vmem:[%s0 + $0x1c] sm:$0xf]
  %v38 = vld [vmem:[%s0 + $0x20] sm:$0xf]
  %v39 = vld [vmem:[%s0 + $0x24] sm:$0xf]
  %v40 = vld [vmem:[%s0 + $0x28] sm:$0xf]
  %v41 = vld [vmem:[%s0 + $0x2c] sm:$0xf]
  %v42 = vld [vmem:[%s0 + $0x30] sm:$0xf]
  %v43 = vld [vmem:[%s0 + $0x34] sm:$0xf]
  %v44 = vld [vmem:[%s0 + $0x38] sm:$0xf]
  %v45 = vld [vmem:[%s0 + $0x3c] sm:$0xf]
  %v46 = vld [vmem:[%s2] sm:$0xf]
  %v47 = vld [vmem:[%s2 + $0x4] sm:$0xf]
  %v48 = vld [vmem:[%s2 + $0x8] sm:$0xf]
  %v49 = vld [vmem:[%s2 + $0xc] sm:$0xf]
  %v50 = vlaneseq
  %v51 = vshrl.u32 %v50, 7
  %v52 = vsub.s32 7, %v51
  %v53 = vrot.slane %v29, %v52
  %v70 = vunpack.c.l.b16 %v30
  %v71 = vunpack.c.l.b16 %v31
  %v72 = vunpack.c.l.b16 %v32
  %v73 = vunpack.c.l.b16 %v33
  %v74 = vunpack.c.l.b16 %v34
  %v75 = vunpack.c.l.b16 %v35
  %v76 = vunpack.c.l.b16 %v36
  %v77 = vunpack.c.l.b16 %v37
  %v78 = vunpack.c.l.b16 %v38
  %v79 = vunpack.c.l.b16 %v39
  %v80 = vunpack.c.l.b16 %v40
  %v81 = vunpack.c.l.b16 %v41
  %v82 = vunpack.c.l.b16 %v42
  %v83 = vunpack.c.l.b16 %v43
  %v84 = vunpack.c.l.b16 %v44
  %v85 = vunpack.c.l.b16 %v45
  %v86 = vpack.c.b16 %v71, %v70
  %v87 = vpack.c.b16 %v73, %v72
  %v88 = vpack.c.b16 %v75, %v74
  %v89 = vpack.c.b16 %v77, %v76
  %v90 = vpack.c.b16 %v79, %v78
  %v91 = vpack.c.b16 %v81, %v80
  %v92 = vpack.c.b16 %v83, %v82
  %v93 = vpack.c.b16 %v85, %v84
  %v98 = vunpack.c.l.b16 %v46
  %v99 = vunpack.c.l.b16 %v47
  %v100 = vunpack.c.l.b16 %v48
  %v101 = vunpack.c.l.b16 %v49
  %v102 = vpack.c.b16 %v99, %v98
  %v103 = vpack.c.b16 %v101, %v100
  %vm106 = vcmask 261120
  %v108 = vsel %vm106, %v86, 0
  %v111 = vsel %vm106, %v87, 0
  %v114 = vsel %vm106, %v88, 0
  %v117 = vsel %vm106, %v89, 0
  %v120 = vsel %vm106, %v90, 0
  %v123 = vsel %vm106, %v91, 0
  %v126 = vsel %vm106, %v92, 0
  %v129 = vsel %vm106, %v93, 0
  %131 = vmatprep.subr.bf16.mxu0 0
  %132 = vmatpush1.bf16.msra.mxu0 %v102
  %133 = vmatprep.subr.bf16.mxu0 0
  %134 = vmatpush1.bf16.msra.mxu0 %v103
  %135 = vmatprep.subr.bf16.mxu0 0
  %136 = vmatpush1.bf16.msra.mxu0 0
  %137 = vmatprep.subr.bf16.mxu0 0
  %138 = vmatpush1.bf16.msra.mxu0 0
  %139 = vmatprep.subr.bf16.mxu0 0
  %140 = vmatpush1.bf16.msra.mxu0 0
  %141 = vmatprep.subr.bf16.mxu0 0
  %142 = vmatpush1.bf16.msra.mxu0 0
  %143 = vmatprep.subr.bf16.mxu0 0
  %144 = vmatpush1.bf16.msra.mxu0 0
  %145 = vmatprep.subr.bf16.mxu0 0
  %146 = vmatpush1.bf16.msra.mxu0 0
  %147 = vmatprep.subr.bf16.mxu0 0
  %148 = vmatpush1.bf16.msra.mxu0 0
  %149 = vmatprep.subr.bf16.mxu0 0
  %150 = vmatpush1.bf16.msra.mxu0 0
  %151 = vmatprep.subr.bf16.mxu0 0
  %152 = vmatpush1.bf16.msra.mxu0 0
  %153 = vmatprep.subr.bf16.mxu0 0
  %154 = vmatpush1.bf16.msra.mxu0 0
  %155 = vmatprep.subr.bf16.mxu0 0
  %156 = vmatpush1.bf16.msra.mxu0 0
  %157 = vmatprep.subr.bf16.mxu0 0
  %158 = vmatpush1.bf16.msra.mxu0 0
  %159 = vmatprep.subr.bf16.mxu0 0
  %160 = vmatpush1.bf16.msra.mxu0 0
  %161 = vmatprep.subr.bf16.mxu0 0
  %162 = vmatpush1.bf16.msra.mxu0 0
  %163 = vmatprep.mubr.bf16.mxu0 0
  %164 = vmatmul.mubr.bf16.gmra.mrb[0].mxu0 %v108
  %v165 = vpop.f32.mrb[0].mxu0
  %v166 = vadd.f32 %v53, %v165
  %v167 = vpop.f32.mrb[0].mxu0
  %v168 = vpop.f32.mrb[0].mxu0
  %v169 = vadd.f32 %v53, %v168
  %v170 = vpop.f32.mrb[0].mxu0
  %171 = vmatprep.mubr.bf16.mxu0 0
  %172 = vmatmul.mubr.bf16.gmra.mrb[0].mxu0 %v111
  %v173 = vpop.f32.mrb[0].mxu0
  %v174 = vadd.f32 %v53, %v173
  %v175 = vpop.f32.mrb[0].mxu0
  %v176 = vpop.f32.mrb[0].mxu0
  %v177 = vadd.f32 %v53, %v176
  %v178 = vpop.f32.mrb[0].mxu0
  %179 = vmatprep.mubr.bf16.mxu0 0
  %180 = vmatmul.mubr.bf16.gmra.mrb[0].mxu0 %v114
  %v181 = vpop.f32.mrb[0].mxu0
  %v182 = vadd.f32 %v53, %v181
  %v183 = vpop.f32.mrb[0].mxu0
  %v184 = vpop.f32.mrb[0].mxu0
  %v185 = vadd.f32 %v53, %v184
  %v186 = vpop.f32.mrb[0].mxu0
  %187 = vmatprep.mubr.bf16.mxu0 0
  %188 = vmatmul.mubr.bf16.gmra.mrb[0].mxu0 %v117
  %v189 = vpop.f32.mrb[0].mxu0
  %v190 = vadd.f32 %v53, %v189
  %v191 = vpop.f32.mrb[0].mxu0
  %v192 = vpop.f32.mrb[0].mxu0
  %v193 = vadd.f32 %v53, %v192
  %v194 = vpop.f32.mrb[0].mxu0
  %195 = vmatprep.mubr.bf16.mxu0 0
  %196 = vmatmul.mubr.bf16.gmra.mrb[0].mxu0 %v120
  %v197 = vpop.f32.mrb[0].mxu0
  %v198 = vadd.f32 %v53, %v197
  %v199 = vpop.f32.mrb[0].mxu0
  %v200 = vpop.f32.mrb[0].mxu0
  %v201 = vadd.f32 %v53, %v200
  %v202 = vpop.f32.mrb[0].mxu0
  %203 = vmatprep.mubr.bf16.mxu0 0
  %204 = vmatmul.mubr.bf16.gmra.mrb[0].mxu0 %v123
  %v205 = vpop.f32.mrb[0].mxu0
  %v206 = vadd.f32 %v53, %v205
  %v207 = vpop.f32.mrb[0].mxu0
  %v208 = vpop.f32.mrb[0].mxu0
  %v209 = vadd.f32 %v53, %v208
  %v210 = vpop.f32.mrb[0].mxu0
  %211 = vmatprep.mubr.bf16.mxu0 0
  %212 = vmatmul.mubr.bf16.gmra.mrb[0].mxu0 %v126
  %v213 = vpop.f32.mrb[0].mxu0
  %v214 = vadd.f32 %v53, %v213
  %v215 = vpop.f32.mrb[0].mxu0
  %v216 = vpop.f32.mrb[0].mxu0
  %v217 = vadd.f32 %v53, %v216
  %v218 = vpop.f32.mrb[0].mxu0
  %219 = vmatprep.mubr.bf16.mxu0 0
  %220 = vmatmul.mubr.bf16.gmra.mrb[0].mxu0 %v129
  %v221 = vpop.f32.mrb[0].mxu0
  %v222 = vadd.f32 %v53, %v221
  %v223 = vpop.f32.mrb[0].mxu0
  %v224 = vpop.f32.mrb[0].mxu0
  %v225 = vadd.f32 %v53, %v224
  %v226 = vpop.f32.mrb[0].mxu0
  %227 = vdwg.mxu0
  %vm228 = vcmask 523264
  %229 = vst.msk [vmem:[#allocation2] sm:$0xff] %vm228, %v166
  %230 = vst.msk [vmem:[#allocation2 + $0x8] sm:$0xff] %vm228, %v169
  %231 = vst.msk [vmem:[#allocation2 + $0x10] sm:$0xff] %vm228, %v174
  %232 = vst.msk [vmem:[#allocation2 + $0x18] sm:$0xff] %vm228, %v177
  %233 = vst.msk [vmem:[#allocation2 + $0x20] sm:$0xff] %vm228, %v182
  %234 = vst.msk [vmem:[#allocation2 + $0x28] sm:$0xff] %vm228, %v185
  %235 = vst.msk [vmem:[#allocation2 + $0x30] sm:$0xff] %vm228, %v190
  %236 = vst.msk [vmem:[#allocation2 + $0x38] sm:$0xff] %vm228, %v193
  %237 = vst.msk [vmem:[#allocation2 + $0x40] sm:$0xff] %vm228, %v198
  %238 = vst.msk [vmem:[#allocation2 + $0x48] sm:$0xff] %vm228, %v201
  %239 = vst.msk [vmem:[#allocation2 + $0x50] sm:$0xff] %vm228, %v206
  %240 = vst.msk [vmem:[#allocation2 + $0x58] sm:$0xff] %vm228, %v209
  %241 = vst.msk [vmem:[#allocation2 + $0x60] sm:$0xff] %vm228, %v214
  %242 = vst.msk [vmem:[#allocation2 + $0x68] sm:$0xff] %vm228, %v217
  %243 = vst.msk [vmem:[#allocation2 + $0x70] sm:$0xff] %vm228, %v222
  %244 = vst.msk [vmem:[#allocation2 + $0x78] sm:$0xff] %vm228, %v225
  %261 = vrot.lane.b32.xlu0 %v166, 64
  %v262 = vpop.permute.xlu0 %261
  %263 = vrot.lane.b32.xlu0 %v169, 64
  %v264 = vpop.permute.xlu0 %263
  %265 = vrot.lane.b32.xlu0 %v174, 64
  %v266 = vpop.permute.xlu0 %265
  %267 = vrot.lane.b32.xlu0 %v177, 64
  %v268 = vpop.permute.xlu0 %267
  %269 = vrot.lane.b32.xlu0 %v182, 64
  %v270 = vpop.permute.xlu0 %269
  %271 = vrot.lane.b32.xlu0 %v185, 64
  %v272 = vpop.permute.xlu0 %271
  %273 = vrot.lane.b32.xlu0 %v190, 64
  %v274 = vpop.permute.xlu0 %273
  %275 = vrot.lane.b32.xlu0 %v193, 64
  %v276 = vpop.permute.xlu0 %275
  %277 = vrot.lane.b32.xlu0 %v198, 64
  %v278 = vpop.permute.xlu0 %277
  %279 = vrot.lane.b32.xlu0 %v201, 64
  %v280 = vpop.permute.xlu0 %279
  %281 = vrot.lane.b32.xlu0 %v206, 64
  %v282 = vpop.permute.xlu0 %281
  %283 = vrot.lane.b32.xlu0 %v209, 64
  %v284 = vpop.permute.xlu0 %283
  %285 = vrot.lane.b32.xlu0 %v214, 64
  %v286 = vpop.permute.xlu0 %285
  %287 = vrot.lane.b32.xlu0 %v217, 64
  %v288 = vpop.permute.xlu0 %287
  %289 = vrot.lane.b32.xlu0 %v222, 64
  %v290 = vpop.permute.xlu0 %289
  %291 = vrot.lane.b32.xlu0 %v225, 64
  %v292 = vpop.permute.xlu0 %291
  %309 = vst.msk [vmem:[#allocation3] sm:$0xff] %vm106, %v262
  %310 = vst.msk [vmem:[#allocation3 + $0x8] sm:$0xff] %vm106, %v264
  %311 = vst.msk [vmem:[#allocation3 + $0x10] sm:$0xff] %vm106, %v266
  %312 = vst.msk [vmem:[#allocation3 + $0x18] sm:$0xff] %vm106, %v268
  %313 = vst.msk [vmem:[#allocation3 + $0x20] sm:$0xff] %vm106, %v270
  %314 = vst.msk [vmem:[#allocation3 + $0x28] sm:$0xff] %vm106, %v272
  %315 = vst.msk [vmem:[#allocation3 + $0x30] sm:$0xff] %vm106, %v274
  %316 = vst.msk [vmem:[#allocation3 + $0x38] sm:$0xff] %vm106, %v276
  %317 = vst.msk [vmem:[#allocation3 + $0x40] sm:$0xff] %vm106, %v278
  %318 = vst.msk [vmem:[#allocation3 + $0x48] sm:$0xff] %vm106, %v280
  %319 = vst.msk [vmem:[#allocation3 + $0x50] sm:$0xff] %vm106, %v282
  %320 = vst.msk [vmem:[#allocation3 + $0x58] sm:$0xff] %vm106, %v284
  %321 = vst.msk [vmem:[#allocation3 + $0x60] sm:$0xff] %vm106, %v286
  %322 = vst.msk [vmem:[#allocation3 + $0x68] sm:$0xff] %vm106, %v288
  %323 = vst.msk [vmem:[#allocation3 + $0x70] sm:$0xff] %vm106, %v290
  %324 = vst.msk [vmem:[#allocation3 + $0x78] sm:$0xff] %vm106, %v292
  %v325 = vld [vmem:[%s3] sm:$0xf]
  %v326 = vld [vmem:[%s3 + $0x4] sm:$0xf]
  %v327 = vld [vmem:[%s3 + $0x8] sm:$0xf]
  %v328 = vld [vmem:[%s3 + $0xc] sm:$0xf]
  %v329 = vld [vmem:[%s4] sm:$0xf]
  %v330 = vld [vmem:[%s4 + $0x4] sm:$0xf]
  %v331 = vld [vmem:[%s4 + $0x8] sm:$0xf]
  %v332 = vld [vmem:[%s4 + $0xc] sm:$0xf]
  %v333 = vld [vmem:[%s1] sm:$0xff]
  %v334 = vpack.c.bf16 %v333, %v333
  %v335 = vld [vmem:[#allocation2] sm:$0xff]
  %v340 = vunpack.c.l.b16 %v325
  %v341 = vunpack.c.l.b16 %v326
  %v342 = vunpack.c.l.b16 %v327
  %v343 = vunpack.c.l.b16 %v328
  %v344 = vpack.c.b16 %v341, %v340
  %v345 = vpack.c.b16 %v343, %v342
  %v349 = vsel %vm106, %v334, 0
  %351 = vmatprep.subr.bf16.mxu0 0
  %352 = vmatpush1.bf16.msra.mxu0 %v344
  %353 = vmatprep.subr.bf16.mxu0 0
  %354 = vmatpush1.bf16.msra.mxu0 %v345
  %355 = vmatprep.subr.bf16.mxu0 0
  %356 = vmatpush1.bf16.msra.mxu0 0
  %357 = vmatprep.subr.bf16.mxu0 0
  %358 = vmatpush1.bf16.msra.mxu0 0
  %359 = vmatprep.subr.bf16.mxu0 0
  %360 = vmatpush1.bf16.msra.mxu0 0
  %361 = vmatprep.subr.bf16.mxu0 0
  %362 = vmatpush1.bf16.msra.mxu0 0
  %363 = vmatprep.subr.bf16.mxu0 0
  %364 = vmatpush1.bf16.msra.mxu0 0
  %365 = vmatprep.subr.bf16.mxu0 0
  %366 = vmatpush1.bf16.msra.mxu0 0
  %367 = vmatprep.subr.bf16.mxu0 0
  %368 = vmatpush1.bf16.msra.mxu0 0
  %369 = vmatprep.subr.bf16.mxu0 0
  %370 = vmatpush1.bf16.msra.mxu0 0
  %371 = vmatprep.subr.bf16.mxu0 0
  %372 = vmatpush1.bf16.msra.mxu0 0
  %373 = vmatprep.subr.bf16.mxu0 0
  %374 = vmatpush1.bf16.msra.mxu0 0
  %375 = vmatprep.subr.bf16.mxu0 0
  %376 = vmatpush1.bf16.msra.mxu0 0
  %377 = vmatprep.subr.bf16.mxu0 0
  %378 = vmatpush1.bf16.msra.mxu0 0
  %379 = vmatprep.subr.bf16.mxu0 0
  %380 = vmatpush1.bf16.msra.mxu0 0
  %381 = vmatprep.subr.bf16.mxu0 0
  %382 = vmatpush1.bf16.msra.mxu0 0
  %383 = vmatprep.mubr.bf16.mxu0 0
  %384 = vmatmul.mubr.bf16.gmra.mrb[0].mxu0 %v349
  %v385 = vpop.f32.mrb[0].mxu0
  %v386 = vadd.f32 %v335, %v385
  %v387 = vpop.f32.mrb[0].mxu0
  %v388 = vpop.f32.mrb[0].mxu0
  %v389 = vpop.f32.mrb[0].mxu0
  %390 = vdwg.mxu0
  %v391 = vmul.f32 %v386, %v386
  %393 = vrot.lane.b32.xlu0 %v386, 96
  %v394 = vpop.permute.xlu0 %393
  %397 = vrot.lane.b32.xlu0 %v391, 96
  %v398 = vpop.permute.xlu0 %397
  %v400 = vsel %vm106, %v386, 0.0
  %401 = vadd.xlane.f32.xlu0 %v400
  %v402 = vpop.xlane.xlu0 %401
  %v403 = vsel %vm106, %v394, 0.0
  %404 = vadd.xlane.f32.xlu0 %v403
  %v405 = vpop.xlane.xlu0 %404
  %v406 = vsel %vm106, %v391, 0.0
  %407 = vadd.xlane.f32.xlu0 %v406
  %v408 = vpop.xlane.xlu0 %407
  %v409 = vsel %vm106, %v398, 0.0
  %410 = vadd.xlane.f32.xlu0 %v409
  %v411 = vpop.xlane.xlu0 %410
  %v412 = vrcp.pop 32.0
  %v413 = vmul.f32 %v402, %v412
  %v414 = vmul.f32 %v405, %v412
  %v415 = vmul.f32 %v408, %v412
  %v416 = vmul.f32 %v411, %v412
  %v417 = vmul.f32 %v413, %v413
  %v418 = vsub.f32 %v415, %v417
  %v419 = vmax.f32 %v418, 0.0
  %v420 = vadd.f32 %v419, 1e-05
  %v421 = vrsqrt.pop %v420
  %v422 = vmul.f32 %v414, %v414
  %v423 = vsub.f32 %v416, %v422
  %v424 = vmax.f32 %v423, 0.0
  %v425 = vadd.f32 %v424, 1e-05
  %v426 = vrsqrt.pop %v425
  %v427 = vsub.f32 %v386, %v413
  %v428 = vmul.f32 %v427, %v421
  %v429 = vlaneseq
  %v430 = vshrl.u32 %v429, 7
  %v431 = vsub.s32 0, %v430
  %v432 = vrot.slane %v29, %v431
  %v433 = vmul.f32 %v428, %v432
  %v434 = vlaneseq
  %v435 = vshrl.u32 %v434, 7
  %v436 = vsub.s32 2, %v435
  %v437 = vrot.slane %v29, %v436
  %v438 = vadd.f32 %v433, %v437
  %v439 = vxor.u32 %v438, 2147483648
  %v440 = vmul.f32 %v439, 1.442695
  %v441 = vpow.pop %v440
  %v442 = vadd.f32 %v441, 1.0
  %v443 = vrcp.pop %v442
  %v444 = vmul.f32 1.0, %v443
  %v445 = vsub.f32 %v386, %v414
  %v446 = vmul.f32 %v445, %v426
  %v447 = vlaneseq
  %v448 = vshrl.u32 %v447, 7
  %v449 = vsub.s32 1, %v448
  %v450 = vrot.slane %v29, %v449
  %452 = vrot.lane.b32.xlu0 %v450, 32
  %v453 = vpop.permute.xlu0 %452
  %v455 = vmul.f32 %v446, %v453
  %v456 = vlaneseq
  %v457 = vshrl.u32 %v456, 7
  %v458 = vsub.s32 3, %v457
  %v459 = vrot.slane %v29, %v458
  %461 = vrot.lane.b32.xlu0 %v459, 32
  %v462 = vpop.permute.xlu0 %461
  %v464 = vadd.f32 %v455, %v462
  %v465 = vxor.u32 %v464, 2147483648
  %v466 = vmul.f32 %v465, 1.442695
  %v467 = vpow.pop %v466
  %v468 = vadd.f32 %v467, 1.0
  %v469 = vrcp.pop %v468
  %v470 = vmul.f32 1.0, %v469
  %472 = vrot.lane.b32.xlu0 %v470, 96
  %v473 = vpop.permute.xlu0 %472
  %v475 = vmul.f32 %v333, %v473
  %v476 = vpack.c.bf16 %v475, %v475
  %v477 = vld [vmem:[#allocation3] sm:$0xff]
  %v482 = vunpack.c.l.b16 %v329
  %v483 = vunpack.c.l.b16 %v330
  %v484 = vunpack.c.l.b16 %v331
  %v485 = vunpack.c.l.b16 %v332
  %v486 = vpack.c.b16 %v483, %v482
  %v487 = vpack.c.b16 %v485, %v484
  %v491 = vsel %vm106, %v476, 0
  %493 = vmatprep.subr.bf16.mxu0 0
  %494 = vmatpush1.bf16.msra.mxu0 %v486
  %495 = vmatprep.subr.bf16.mxu0 0
  %496 = vmatpush1.bf16.msra.mxu0 %v487
  %497 = vmatprep.subr.bf16.mxu0 0
  %498 = vmatpush1.bf16.msra.mxu0 0
  %499 = vmatprep.subr.bf16.mxu0 0
  %500 = vmatpush1.bf16.msra.mxu0 0
  %501 = vmatprep.subr.bf16.mxu0 0
  %502 = vmatpush1.bf16.msra.mxu0 0
  %503 = vmatprep.subr.bf16.mxu0 0
  %504 = vmatpush1.bf16.msra.mxu0 0
  %505 = vmatprep.subr.bf16.mxu0 0
  %506 = vmatpush1.bf16.msra.mxu0 0
  %507 = vmatprep.subr.bf16.mxu0 0
  %508 = vmatpush1.bf16.msra.mxu0 0
  %509 = vmatprep.subr.bf16.mxu0 0
  %510 = vmatpush1.bf16.msra.mxu0 0
  %511 = vmatprep.subr.bf16.mxu0 0
  %512 = vmatpush1.bf16.msra.mxu0 0
  %513 = vmatprep.subr.bf16.mxu0 0
  %514 = vmatpush1.bf16.msra.mxu0 0
  %515 = vmatprep.subr.bf16.mxu0 0
  %516 = vmatpush1.bf16.msra.mxu0 0
  %517 = vmatprep.subr.bf16.mxu0 0
  %518 = vmatpush1.bf16.msra.mxu0 0
  %519 = vmatprep.subr.bf16.mxu0 0
  %520 = vmatpush1.bf16.msra.mxu0 0
  %521 = vmatprep.subr.bf16.mxu0 0
  %522 = vmatpush1.bf16.msra.mxu0 0
  %523 = vmatprep.subr.bf16.mxu0 0
  %524 = vmatpush1.bf16.msra.mxu0 0
  %525 = vmatprep.mubr.bf16.mxu0 0
  %526 = vmatmul.mubr.bf16.gmra.mrb[0].mxu0 %v491
  %v527 = vpop.f32.mrb[0].mxu0
  %v528 = vadd.f32 %v477, %v527
  %v529 = vpop.f32.mrb[0].mxu0
  %v530 = vpop.f32.mrb[0].mxu0
  %v531 = vpop.f32.mrb[0].mxu0
  %532 = vdwg.mxu0
  %v533 = vmul.f32 %v528, %v528
  %v534 = vsel %vm106, %v528, 0.0
  %535 = vadd.xlane.f32.xlu0 %v534
  %v536 = vpop.xlane.xlu0 %535
  %v537 = vsel %vm106, %v533, 0.0
  %538 = vadd.xlane.f32.xlu0 %v537
  %v539 = vpop.xlane.xlu0 %538
  %v540 = vmul.f32 %v536, %v412
  %v541 = vmul.f32 %v539, %v412
  %v542 = vmul.f32 %v540, %v540
  %v543 = vsub.f32 %v541, %v542
  %v544 = vmax.f32 %v543, 0.0
  %v545 = vadd.f32 %v544, 1e-05
  %v546 = vrsqrt.pop %v545
  %v547 = vsub.f32 %v528, %v540
  %v548 = vmul.f32 %v547, %v546
  %v549 = vlaneseq
  %v550 = vshrl.u32 %v549, 7
  %v551 = vsub.s32 4, %v550
  %v552 = vrot.slane %v29, %v551
  %v553 = vmul.f32 %v548, %v552
  %v554 = vlaneseq
  %v555 = vshrl.u32 %v554, 7
  %v556 = vsub.s32 5, %v555
  %v557 = vrot.slane %v29, %v556
  %v558 = vadd.f32 %v553, %v557
  %v559 = vtanh.pop %v558
  %v560 = vsub.f32 %v559, %v333
  %v561 = vmul.f32 %v444, %v560
  %v562 = vadd.f32 %v333, %v561
  %563 = vst.msk [vmem:[%s7] sm:$0xff] %vm106, %v562
  %v564 = vpack.c.bf16 %v562, %v562
  %s565 = scalar_lea.vmem [#allocation2], 8
  %v566 = vld [vmem:[%s565] sm:$0xff]
  %v568 = vsel %vm106, %v564, 0
  %570 = vmatprep.subr.bf16.mxu0 0
  %571 = vmatpush1.bf16.msra.mxu0 %v344
  %572 = vmatprep.subr.bf16.mxu0 0
  %573 = vmatpush1.bf16.msra.mxu0 %v345
  %574 = vmatprep.subr.bf16.mxu0 0
  %575 = vmatpush1.bf16.msra.mxu0 0
  %576 = vmatprep.subr.bf16.mxu0 0
  %577 = vmatpush1.bf16.msra.mxu0 0
  %578 = vmatprep.subr.bf16.mxu0 0
  %579 = vmatpush1.bf16.msra.mxu0 0
  %580 = vmatprep.subr.bf16.mxu0 0
  %581 = vmatpush1.bf16.msra.mxu0 0
  %582 = vmatprep.subr.bf16.mxu0 0
  %583 = vmatpush1.bf16.msra.mxu0 0
  %584 = vmatprep.subr.bf16.mxu0 0
  %585 = vmatpush1.bf16.msra.mxu0 0
  %586 = vmatprep.subr.bf16.mxu0 0
  %587 = vmatpush1.bf16.msra.mxu0 0
  %588 = vmatprep.subr.bf16.mxu0 0
  %589 = vmatpush1.bf16.msra.mxu0 0
  %590 = vmatprep.subr.bf16.mxu0 0
  %591 = vmatpush1.bf16.msra.mxu0 0
  %592 = vmatprep.subr.bf16.mxu0 0
  %593 = vmatpush1.bf16.msra.mxu0 0
  %594 = vmatprep.subr.bf16.mxu0 0
  %595 = vmatpush1.bf16.msra.mxu0 0
  %596 = vmatprep.subr.bf16.mxu0 0
  %597 = vmatpush1.bf16.msra.mxu0 0
  %598 = vmatprep.subr.bf16.mxu0 0
  %599 = vmatpush1.bf16.msra.mxu0 0
  %600 = vmatprep.subr.bf16.mxu0 0
  %601 = vmatpush1.bf16.msra.mxu0 0
  %602 = vmatprep.mubr.bf16.mxu0 0
  %603 = vmatmul.mubr.bf16.gmra.mrb[0].mxu0 %v568
  %v604 = vpop.f32.mrb[0].mxu0
  %v605 = vadd.f32 %v566, %v604
  %v606 = vpop.f32.mrb[0].mxu0
  %v607 = vpop.f32.mrb[0].mxu0
  %v608 = vpop.f32.mrb[0].mxu0
  %609 = vdwg.mxu0
  %v610 = vmul.f32 %v605, %v605
  %612 = vrot.lane.b32.xlu0 %v605, 96
  %v613 = vpop.permute.xlu0 %612
  %616 = vrot.lane.b32.xlu0 %v610, 96
  %v617 = vpop.permute.xlu0 %616
  %v619 = vsel %vm106, %v605, 0.0
  %620 = vadd.xlane.f32.xlu0 %v619
  %v621 = vpop.xlane.xlu0 %620
  %v622 = vsel %vm106, %v613, 0.0
  %623 = vadd.xlane.f32.xlu0 %v622
  %v624 = vpop.xlane.xlu0 %623
  %v625 = vsel %vm106, %v610, 0.0
  %626 = vadd.xlane.f32.xlu0 %v625
  %v627 = vpop.xlane.xlu0 %626
  %v628 = vsel %vm106, %v617, 0.0
  %629 = vadd.xlane.f32.xlu0 %v628
  %v630 = vpop.xlane.xlu0 %629
  %v631 = vmul.f32 %v621, %v412
  %v632 = vmul.f32 %v624, %v412
  %v633 = vmul.f32 %v627, %v412
  %v634 = vmul.f32 %v630, %v412
  %v635 = vmul.f32 %v631, %v631
  %v636 = vsub.f32 %v633, %v635
  %v637 = vmax.f32 %v636, 0.0
  %v638 = vadd.f32 %v637, 1e-05
  %v639 = vrsqrt.pop %v638
  %v640 = vmul.f32 %v632, %v632
  %v641 = vsub.f32 %v634, %v640
  %v642 = vmax.f32 %v641, 0.0
  %v643 = vadd.f32 %v642, 1e-05
  %v644 = vrsqrt.pop %v643
  %v645 = vsub.f32 %v605, %v631
  %v646 = vmul.f32 %v645, %v639
  %v647 = vmul.f32 %v646, %v432
  %v648 = vadd.f32 %v647, %v437
  %v649 = vxor.u32 %v648, 2147483648
  %v650 = vmul.f32 %v649, 1.442695
  %v651 = vpow.pop %v650
  %v652 = vadd.f32 %v651, 1.0
  %v653 = vrcp.pop %v652
  %v654 = vmul.f32 1.0, %v653
  %v655 = vsub.f32 %v605, %v632
  %v656 = vmul.f32 %v655, %v644
  %v657 = vmul.f32 %v656, %v453
  %v658 = vadd.f32 %v657, %v462
  %v659 = vxor.u32 %v658, 2147483648
  %v660 = vmul.f32 %v659, 1.442695
  %v661 = vpow.pop %v660
  %v662 = vadd.f32 %v661, 1.0
  %v663 = vrcp.pop %v662
  %v664 = vmul.f32 1.0, %v663
  %666 = vrot.lane.b32.xlu0 %v664, 96
  %v667 = vpop.permute.xlu0 %666
  %v669 = vmul.f32 %v562, %v667
  %v670 = vpack.c.bf16 %v669, %v669
  %s671 = scalar_lea.vmem [#allocation3], 8
  %v672 = vld [vmem:[%s671] sm:$0xff]
  %v674 = vsel %vm106, %v670, 0
  %676 = vmatprep.subr.bf16.mxu0 0
  %677 = vmatpush1.bf16.msra.mxu0 %v486
  %678 = vmatprep.subr.bf16.mxu0 0
  %679 = vmatpush1.bf16.msra.mxu0 %v487
  %680 = vmatprep.subr.bf16.mxu0 0
  %681 = vmatpush1.bf16.msra.mxu0 0
  %682 = vmatprep.subr.bf16.mxu0 0
  %683 = vmatpush1.bf16.msra.mxu0 0
  %684 = vmatprep.subr.bf16.mxu0 0
  %685 = vmatpush1.bf16.msra.mxu0 0
  %686 = vmatprep.subr.bf16.mxu0 0
  %687 = vmatpush1.bf16.msra.mxu0 0
  %688 = vmatprep.subr.bf16.mxu0 0
  %689 = vmatpush1.bf16.msra.mxu0 0
  %690 = vmatprep.subr.bf16.mxu0 0
  %691 = vmatpush1.bf16.msra.mxu0 0
  %692 = vmatprep.subr.bf16.mxu0 0
  %693 = vmatpush1.bf16.msra.mxu0 0
  %694 = vmatprep.subr.bf16.mxu0 0
  %695 = vmatpush1.bf16.msra.mxu0 0
  %696 = vmatprep.subr.bf16.mxu0 0
  %697 = vmatpush1.bf16.msra.mxu0 0
  %698 = vmatprep.subr.bf16.mxu0 0
  %699 = vmatpush1.bf16.msra.mxu0 0
  %700 = vmatprep.subr.bf16.mxu0 0
  %701 = vmatpush1.bf16.msra.mxu0 0
  %702 = vmatprep.subr.bf16.mxu0 0
  %703 = vmatpush1.bf16.msra.mxu0 0
  %704 = vmatprep.subr.bf16.mxu0 0
  %705 = vmatpush1.bf16.msra.mxu0 0
  %706 = vmatprep.subr.bf16.mxu0 0
  %707 = vmatpush1.bf16.msra.mxu0 0
  %708 = vmatprep.mubr.bf16.mxu0 0
  %709 = vmatmul.mubr.bf16.gmra.mrb[0].mxu0 %v674
  %v710 = vpop.f32.mrb[0].mxu0
  %v711 = vadd.f32 %v672, %v710
  %v712 = vpop.f32.mrb[0].mxu0
  %v713 = vpop.f32.mrb[0].mxu0
  %v714 = vpop.f32.mrb[0].mxu0
  %715 = vdwg.mxu0
  %v716 = vmul.f32 %v711, %v711
  %v717 = vsel %vm106, %v711, 0.0
  %718 = vadd.xlane.f32.xlu0 %v717
  %v719 = vpop.xlane.xlu0 %718
  %v720 = vsel %vm106, %v716, 0.0
  %721 = vadd.xlane.f32.xlu0 %v720
  %v722 = vpop.xlane.xlu0 %721
  %v723 = vmul.f32 %v719, %v412
  %v724 = vmul.f32 %v722, %v412
  %v725 = vmul.f32 %v723, %v723
  %v726 = vsub.f32 %v724, %v725
  %v727 = vmax.f32 %v726, 0.0
  %v728 = vadd.f32 %v727, 1e-05
  %v729 = vrsqrt.pop %v728
  %v730 = vsub.f32 %v711, %v723
  %v731 = vmul.f32 %v730, %v729
  %v732 = vmul.f32 %v731, %v552
  %v733 = vadd.f32 %v732, %v557
  %v734 = vtanh.pop %v733
  %v735 = vsub.f32 %v734, %v562
  %v736 = vmul.f32 %v654, %v735
  %v737 = vadd.f32 %v562, %v736
  %s738 = scalar_lea.vmem %s7, 8
  %739 = vst.msk [vmem:[%s738] sm:$0xff] %vm106, %v737
  %v740 = vpack.c.bf16 %v737, %v737
  %s741 = scalar_lea.vmem [#allocation2], 16
  %v742 = vld [vmem:[%s741] sm:$0xff]
  %v744 = vsel %vm106, %v740, 0
  %746 = vmatprep.subr.bf16.mxu0 0
  %747 = vmatpush1.bf16.msra.mxu0 %v344
  %748 = vmatprep.subr.bf16.mxu0 0
  %749 = vmatpush1.bf16.msra.mxu0 %v345
  %750 = vmatprep.subr.bf16.mxu0 0
  %751 = vmatpush1.bf16.msra.mxu0 0
  %752 = vmatprep.subr.bf16.mxu0 0
  %753 = vmatpush1.bf16.msra.mxu0 0
  %754 = vmatprep.subr.bf16.mxu0 0
  %755 = vmatpush1.bf16.msra.mxu0 0
  %756 = vmatprep.subr.bf16.mxu0 0
  %757 = vmatpush1.bf16.msra.mxu0 0
  %758 = vmatprep.subr.bf16.mxu0 0
  %759 = vmatpush1.bf16.msra.mxu0 0
  %760 = vmatprep.subr.bf16.mxu0 0
  %761 = vmatpush1.bf16.msra.mxu0 0
  %762 = vmatprep.subr.bf16.mxu0 0
  %763 = vmatpush1.bf16.msra.mxu0 0
  %764 = vmatprep.subr.bf16.mxu0 0
  %765 = vmatpush1.bf16.msra.mxu0 0
  %766 = vmatprep.subr.bf16.mxu0 0
  %767 = vmatpush1.bf16.msra.mxu0 0
  %768 = vmatprep.subr.bf16.mxu0 0
  %769 = vmatpush1.bf16.msra.mxu0 0
  %770 = vmatprep.subr.bf16.mxu0 0
  %771 = vmatpush1.bf16.msra.mxu0 0
  %772 = vmatprep.subr.bf16.mxu0 0
  %773 = vmatpush1.bf16.msra.mxu0 0
  %774 = vmatprep.subr.bf16.mxu0 0
  %775 = vmatpush1.bf16.msra.mxu0 0
  %776 = vmatprep.subr.bf16.mxu0 0
  %777 = vmatpush1.bf16.msra.mxu0 0
  %778 = vmatprep.mubr.bf16.mxu0 0
  %779 = vmatmul.mubr.bf16.gmra.mrb[0].mxu0 %v744
  %v780 = vpop.f32.mrb[0].mxu0
  %v781 = vadd.f32 %v742, %v780
  %v782 = vpop.f32.mrb[0].mxu0
  %v783 = vpop.f32.mrb[0].mxu0
  %v784 = vpop.f32.mrb[0].mxu0
  %785 = vdwg.mxu0
  %v786 = vmul.f32 %v781, %v781
  %788 = vrot.lane.b32.xlu0 %v781, 96
  %v789 = vpop.permute.xlu0 %788
  %792 = vrot.lane.b32.xlu0 %v786, 96
  %v793 = vpop.permute.xlu0 %792
  %v795 = vsel %vm106, %v781, 0.0
  %796 = vadd.xlane.f32.xlu0 %v795
  %v797 = vpop.xlane.xlu0 %796
  %v798 = vsel %vm106, %v789, 0.0
  %799 = vadd.xlane.f32.xlu0 %v798
  %v800 = vpop.xlane.xlu0 %799
  %v801 = vsel %vm106, %v786, 0.0
  %802 = vadd.xlane.f32.xlu0 %v801
  %v803 = vpop.xlane.xlu0 %802
  %v804 = vsel %vm106, %v793, 0.0
  %805 = vadd.xlane.f32.xlu0 %v804
  %v806 = vpop.xlane.xlu0 %805
  %v807 = vmul.f32 %v797, %v412
  %v808 = vmul.f32 %v800, %v412
  %v809 = vmul.f32 %v803, %v412
  %v810 = vmul.f32 %v806, %v412
  %v811 = vmul.f32 %v807, %v807
  %v812 = vsub.f32 %v809, %v811
  %v813 = vmax.f32 %v812, 0.0
  %v814 = vadd.f32 %v813, 1e-05
  %v815 = vrsqrt.pop %v814
  %v816 = vmul.f32 %v808, %v808
  %v817 = vsub.f32 %v810, %v816
  %v818 = vmax.f32 %v817, 0.0
  %v819 = vadd.f32 %v818, 1e-05
  %v820 = vrsqrt.pop %v819
  %v821 = vsub.f32 %v781, %v807
  %v822 = vmul.f32 %v821, %v815
  %v823 = vmul.f32 %v822, %v432
  %v824 = vadd.f32 %v823, %v437
  %v825 = vxor.u32 %v824, 2147483648
  %v826 = vmul.f32 %v825, 1.442695
  %v827 = vpow.pop %v826
  %v828 = vadd.f32 %v827, 1.0
  %v829 = vrcp.pop %v828
  %v830 = vmul.f32 1.0, %v829
  %v831 = vsub.f32 %v781, %v808
  %v832 = vmul.f32 %v831, %v820
  %v833 = vmul.f32 %v832, %v453
  %v834 = vadd.f32 %v833, %v462
  %v835 = vxor.u32 %v834, 2147483648
  %v836 = vmul.f32 %v835, 1.442695
  %v837 = vpow.pop %v836
  %v838 = vadd.f32 %v837, 1.0
  %v839 = vrcp.pop %v838
  %v840 = vmul.f32 1.0, %v839
  %842 = vrot.lane.b32.xlu0 %v840, 96
  %v843 = vpop.permute.xlu0 %842
  %v845 = vmul.f32 %v737, %v843
  %v846 = vpack.c.bf16 %v845, %v845
  %s847 = scalar_lea.vmem [#allocation3], 16
  %v848 = vld [vmem:[%s847] sm:$0xff]
  %v850 = vsel %vm106, %v846, 0
  %852 = vmatprep.subr.bf16.mxu0 0
  %853 = vmatpush1.bf16.msra.mxu0 %v486
  %854 = vmatprep.subr.bf16.mxu0 0
  %855 = vmatpush1.bf16.msra.mxu0 %v487
  %856 = vmatprep.subr.bf16.mxu0 0
  %857 = vmatpush1.bf16.msra.mxu0 0
  %858 = vmatprep.subr.bf16.mxu0 0
  %859 = vmatpush1.bf16.msra.mxu0 0
  %860 = vmatprep.subr.bf16.mxu0 0
  %861 = vmatpush1.bf16.msra.mxu0 0
  %862 = vmatprep.subr.bf16.mxu0 0
  %863 = vmatpush1.bf16.msra.mxu0 0
  %864 = vmatprep.subr.bf16.mxu0 0
  %865 = vmatpush1.bf16.msra.mxu0 0
  %866 = vmatprep.subr.bf16.mxu0 0
  %867 = vmatpush1.bf16.msra.mxu0 0
  %868 = vmatprep.subr.bf16.mxu0 0
  %869 = vmatpush1.bf16.msra.mxu0 0
  %870 = vmatprep.subr.bf16.mxu0 0
  %871 = vmatpush1.bf16.msra.mxu0 0
  %872 = vmatprep.subr.bf16.mxu0 0
  %873 = vmatpush1.bf16.msra.mxu0 0
  %874 = vmatprep.subr.bf16.mxu0 0
  %875 = vmatpush1.bf16.msra.mxu0 0
  %876 = vmatprep.subr.bf16.mxu0 0
  %877 = vmatpush1.bf16.msra.mxu0 0
  %878 = vmatprep.subr.bf16.mxu0 0
  %879 = vmatpush1.bf16.msra.mxu0 0
  %880 = vmatprep.subr.bf16.mxu0 0
  %881 = vmatpush1.bf16.msra.mxu0 0
  %882 = vmatprep.subr.bf16.mxu0 0
  %883 = vmatpush1.bf16.msra.mxu0 0
  %884 = vmatprep.mubr.bf16.mxu0 0
  %885 = vmatmul.mubr.bf16.gmra.mrb[0].mxu0 %v850
  %v886 = vpop.f32.mrb[0].mxu0
  %v887 = vadd.f32 %v848, %v886
  %v888 = vpop.f32.mrb[0].mxu0
  %v889 = vpop.f32.mrb[0].mxu0
  %v890 = vpop.f32.mrb[0].mxu0
  %891 = vdwg.mxu0
  %v892 = vmul.f32 %v887, %v887
  %v893 = vsel %vm106, %v887, 0.0
  %894 = vadd.xlane.f32.xlu0 %v893
  %v895 = vpop.xlane.xlu0 %894
  %v896 = vsel %vm106, %v892, 0.0
  %897 = vadd.xlane.f32.xlu0 %v896
  %v898 = vpop.xlane.xlu0 %897
  %v899 = vmul.f32 %v895, %v412
  %v900 = vmul.f32 %v898, %v412
  %v901 = vmul.f32 %v899, %v899
  %v902 = vsub.f32 %v900, %v901
  %v903 = vmax.f32 %v902, 0.0
  %v904 = vadd.f32 %v903, 1e-05
  %v905 = vrsqrt.pop %v904
  %v906 = vsub.f32 %v887, %v899
  %v907 = vmul.f32 %v906, %v905
  %v908 = vmul.f32 %v907, %v552
  %v909 = vadd.f32 %v908, %v557
  %v910 = vtanh.pop %v909
  %v911 = vsub.f32 %v910, %v737
  %v912 = vmul.f32 %v830, %v911
  %v913 = vadd.f32 %v737, %v912
  %s914 = scalar_lea.vmem %s7, 16
  %915 = vst.msk [vmem:[%s914] sm:$0xff] %vm106, %v913
  %v916 = vpack.c.bf16 %v913, %v913
  %s917 = scalar_lea.vmem [#allocation2], 24
  %v918 = vld [vmem:[%s917] sm:$0xff]
  %v920 = vsel %vm106, %v916, 0
  %922 = vmatprep.subr.bf16.mxu0 0
  %923 = vmatpush1.bf16.msra.mxu0 %v344
  %924 = vmatprep.subr.bf16.mxu0 0
  %925 = vmatpush1.bf16.msra.mxu0 %v345
  %926 = vmatprep.subr.bf16.mxu0 0
  %927 = vmatpush1.bf16.msra.mxu0 0
  %928 = vmatprep.subr.bf16.mxu0 0
  %929 = vmatpush1.bf16.msra.mxu0 0
  %930 = vmatprep.subr.bf16.mxu0 0
  %931 = vmatpush1.bf16.msra.mxu0 0
  %932 = vmatprep.subr.bf16.mxu0 0
  %933 = vmatpush1.bf16.msra.mxu0 0
  %934 = vmatprep.subr.bf16.mxu0 0
  %935 = vmatpush1.bf16.msra.mxu0 0
  %936 = vmatprep.subr.bf16.mxu0 0
  %937 = vmatpush1.bf16.msra.mxu0 0
  %938 = vmatprep.subr.bf16.mxu0 0
  %939 = vmatpush1.bf16.msra.mxu0 0
  %940 = vmatprep.subr.bf16.mxu0 0
  %941 = vmatpush1.bf16.msra.mxu0 0
  %942 = vmatprep.subr.bf16.mxu0 0
  %943 = vmatpush1.bf16.msra.mxu0 0
  %944 = vmatprep.subr.bf16.mxu0 0
  %945 = vmatpush1.bf16.msra.mxu0 0
  %946 = vmatprep.subr.bf16.mxu0 0
  %947 = vmatpush1.bf16.msra.mxu0 0
  %948 = vmatprep.subr.bf16.mxu0 0
  %949 = vmatpush1.bf16.msra.mxu0 0
  %950 = vmatprep.subr.bf16.mxu0 0
  %951 = vmatpush1.bf16.msra.mxu0 0
  %952 = vmatprep.subr.bf16.mxu0 0
  %953 = vmatpush1.bf16.msra.mxu0 0
  %954 = vmatprep.mubr.bf16.mxu0 0
  %955 = vmatmul.mubr.bf16.gmra.mrb[0].mxu0 %v920
  %v956 = vpop.f32.mrb[0].mxu0
  %v957 = vadd.f32 %v918, %v956
  %v958 = vpop.f32.mrb[0].mxu0
  %v959 = vpop.f32.mrb[0].mxu0
  %v960 = vpop.f32.mrb[0].mxu0
  %961 = vdwg.mxu0
  %v962 = vmul.f32 %v957, %v957
  %964 = vrot.lane.b32.xlu0 %v957, 96
  %v965 = vpop.permute.xlu0 %964
  %968 = vrot.lane.b32.xlu0 %v962, 96
  %v969 = vpop.permute.xlu0 %968
  %v971 = vsel %vm106, %v957, 0.0
  %972 = vadd.xlane.f32.xlu0 %v971
  %v973 = vpop.xlane.xlu0 %972
  %v974 = vsel %vm106, %v965, 0.0
  %975 = vadd.xlane.f32.xlu0 %v974
  %v976 = vpop.xlane.xlu0 %975
  %v977 = vsel %vm106, %v962, 0.0
  %978 = vadd.xlane.f32.xlu0 %v977
  %v979 = vpop.xlane.xlu0 %978
  %v980 = vsel %vm106, %v969, 0.0
  %981 = vadd.xlane.f32.xlu0 %v980
  %v982 = vpop.xlane.xlu0 %981
  %v983 = vmul.f32 %v973, %v412
  %v984 = vmul.f32 %v976, %v412
  %v985 = vmul.f32 %v979, %v412
  %v986 = vmul.f32 %v982, %v412
  %v987 = vmul.f32 %v983, %v983
  %v988 = vsub.f32 %v985, %v987
  %v989 = vmax.f32 %v988, 0.0
  %v990 = vadd.f32 %v989, 1e-05
  %v991 = vrsqrt.pop %v990
  %v992 = vmul.f32 %v984, %v984
  %v993 = vsub.f32 %v986, %v992
  %v994 = vmax.f32 %v993, 0.0
  %v995 = vadd.f32 %v994, 1e-05
  %v996 = vrsqrt.pop %v995
  %v997 = vsub.f32 %v957, %v983
  %v998 = vmul.f32 %v997, %v991
  %v999 = vmul.f32 %v998, %v432
  %v1000 = vadd.f32 %v999, %v437
  %v1001 = vxor.u32 %v1000, 2147483648
  %v1002 = vmul.f32 %v1001, 1.442695
  %v1003 = vpow.pop %v1002
  %v1004 = vadd.f32 %v1003, 1.0
  %v1005 = vrcp.pop %v1004
  %v1006 = vmul.f32 1.0, %v1005
  %v1007 = vsub.f32 %v957, %v984
  %v1008 = vmul.f32 %v1007, %v996
  %v1009 = vmul.f32 %v1008, %v453
  %v1010 = vadd.f32 %v1009, %v462
  %v1011 = vxor.u32 %v1010, 2147483648
  %v1012 = vmul.f32 %v1011, 1.442695
  %v1013 = vpow.pop %v1012
  %v1014 = vadd.f32 %v1013, 1.0
  %v1015 = vrcp.pop %v1014
  %v1016 = vmul.f32 1.0, %v1015
  %1018 = vrot.lane.b32.xlu0 %v1016, 96
  %v1019 = vpop.permute.xlu0 %1018
  %v1021 = vmul.f32 %v913, %v1019
  %v1022 = vpack.c.bf16 %v1021, %v1021
  %s1023 = scalar_lea.vmem [#allocation3], 24
  %v1024 = vld [vmem:[%s1023] sm:$0xff]
  %v1026 = vsel %vm106, %v1022, 0
  %1028 = vmatprep.subr.bf16.mxu0 0
  %1029 = vmatpush1.bf16.msra.mxu0 %v486
  %1030 = vmatprep.subr.bf16.mxu0 0
  %1031 = vmatpush1.bf16.msra.mxu0 %v487
  %1032 = vmatprep.subr.bf16.mxu0 0
  %1033 = vmatpush1.bf16.msra.mxu0 0
  %1034 = vmatprep.subr.bf16.mxu0 0
  %1035 = vmatpush1.bf16.msra.mxu0 0
  %1036 = vmatprep.subr.bf16.mxu0 0
  %1037 = vmatpush1.bf16.msra.mxu0 0
  %1038 = vmatprep.subr.bf16.mxu0 0
  %1039 = vmatpush1.bf16.msra.mxu0 0
  %1040 = vmatprep.subr.bf16.mxu0 0
  %1041 = vmatpush1.bf16.msra.mxu0 0
  %1042 = vmatprep.subr.bf16.mxu0 0
  %1043 = vmatpush1.bf16.msra.mxu0 0
  %1044 = vmatprep.subr.bf16.mxu0 0
  %1045 = vmatpush1.bf16.msra.mxu0 0
  %1046 = vmatprep.subr.bf16.mxu0 0
  %1047 = vmatpush1.bf16.msra.mxu0 0
  %1048 = vmatprep.subr.bf16.mxu0 0
  %1049 = vmatpush1.bf16.msra.mxu0 0
  %1050 = vmatprep.subr.bf16.mxu0 0
  %1051 = vmatpush1.bf16.msra.mxu0 0
  %1052 = vmatprep.subr.bf16.mxu0 0
  %1053 = vmatpush1.bf16.msra.mxu0 0
  %1054 = vmatprep.subr.bf16.mxu0 0
  %1055 = vmatpush1.bf16.msra.mxu0 0
  %1056 = vmatprep.subr.bf16.mxu0 0
  %1057 = vmatpush1.bf16.msra.mxu0 0
  %1058 = vmatprep.subr.bf16.mxu0 0
  %1059 = vmatpush1.bf16.msra.mxu0 0
  %1060 = vmatprep.mubr.bf16.mxu0 0
  %1061 = vmatmul.mubr.bf16.gmra.mrb[0].mxu0 %v1026
  %v1062 = vpop.f32.mrb[0].mxu0
  %v1063 = vadd.f32 %v1024, %v1062
  %v1064 = vpop.f32.mrb[0].mxu0
  %v1065 = vpop.f32.mrb[0].mxu0
  %v1066 = vpop.f32.mrb[0].mxu0
  %1067 = vdwg.mxu0
  %v1068 = vmul.f32 %v1063, %v1063
  %v1069 = vsel %vm106, %v1063, 0.0
  %1070 = vadd.xlane.f32.xlu0 %v1069
  %v1071 = vpop.xlane.xlu0 %1070
  %v1072 = vsel %vm106, %v1068, 0.0
  %1073 = vadd.xlane.f32.xlu0 %v1072
  %v1074 = vpop.xlane.xlu0 %1073
  %v1075 = vmul.f32 %v1071, %v412
  %v1076 = vmul.f32 %v1074, %v412
  %v1077 = vmul.f32 %v1075, %v1075
  %v1078 = vsub.f32 %v1076, %v1077
  %v1079 = vmax.f32 %v1078, 0.0
  %v1080 = vadd.f32 %v1079, 1e-05
  %v1081 = vrsqrt.pop %v1080
  %v1082 = vsub.f32 %v1063, %v1075
  %v1083 = vmul.f32 %v1082, %v1081
  %v1084 = vmul.f32 %v1083, %v552
  %v1085 = vadd.f32 %v1084, %v557
  %v1086 = vtanh.pop %v1085
  %v1087 = vsub.f32 %v1086, %v913
  %v1088 = vmul.f32 %v1006, %v1087
  %v1089 = vadd.f32 %v913, %v1088
  %s1090 = scalar_lea.vmem %s7, 24
  %1091 = vst.msk [vmem:[%s1090] sm:$0xff] %vm106, %v1089
  %v1092 = vpack.c.bf16 %v1089, %v1089
  %s1093 = scalar_lea.vmem [#allocation2], 32
  %v1094 = vld [vmem:[%s1093] sm:$0xff]
  %v1096 = vsel %vm106, %v1092, 0
  %1098 = vmatprep.subr.bf16.mxu0 0
  %1099 = vmatpush1.bf16.msra.mxu0 %v344
  %1100 = vmatprep.subr.bf16.mxu0 0
  %1101 = vmatpush1.bf16.msra.mxu0 %v345
  %1102 = vmatprep.subr.bf16.mxu0 0
  %1103 = vmatpush1.bf16.msra.mxu0 0
  %1104 = vmatprep.subr.bf16.mxu0 0
  %1105 = vmatpush1.bf16.msra.mxu0 0
  %1106 = vmatprep.subr.bf16.mxu0 0
  %1107 = vmatpush1.bf16.msra.mxu0 0
  %1108 = vmatprep.subr.bf16.mxu0 0
  %1109 = vmatpush1.bf16.msra.mxu0 0
  %1110 = vmatprep.subr.bf16.mxu0 0
  %1111 = vmatpush1.bf16.msra.mxu0 0
  %1112 = vmatprep.subr.bf16.mxu0 0
  %1113 = vmatpush1.bf16.msra.mxu0 0
  %1114 = vmatprep.subr.bf16.mxu0 0
  %1115 = vmatpush1.bf16.msra.mxu0 0
  %1116 = vmatprep.subr.bf16.mxu0 0
  %1117 = vmatpush1.bf16.msra.mxu0 0
  %1118 = vmatprep.subr.bf16.mxu0 0
  %1119 = vmatpush1.bf16.msra.mxu0 0
  %1120 = vmatprep.subr.bf16.mxu0 0
  %1121 = vmatpush1.bf16.msra.mxu0 0
  %1122 = vmatprep.subr.bf16.mxu0 0
  %1123 = vmatpush1.bf16.msra.mxu0 0
  %1124 = vmatprep.subr.bf16.mxu0 0
  %1125 = vmatpush1.bf16.msra.mxu0 0
  %1126 = vmatprep.subr.bf16.mxu0 0
  %1127 = vmatpush1.bf16.msra.mxu0 0
  %1128 = vmatprep.subr.bf16.mxu0 0
  %1129 = vmatpush1.bf16.msra.mxu0 0
  %1130 = vmatprep.mubr.bf16.mxu0 0
  %1131 = vmatmul.mubr.bf16.gmra.mrb[0].mxu0 %v1096
  %v1132 = vpop.f32.mrb[0].mxu0
  %v1133 = vadd.f32 %v1094, %v1132
  %v1134 = vpop.f32.mrb[0].mxu0
  %v1135 = vpop.f32.mrb[0].mxu0
  %v1136 = vpop.f32.mrb[0].mxu0
  %1137 = vdwg.mxu0
  %v1138 = vmul.f32 %v1133, %v1133
  %1140 = vrot.lane.b32.xlu0 %v1133, 96
  %v1141 = vpop.permute.xlu0 %1140
  %1144 = vrot.lane.b32.xlu0 %v1138, 96
  %v1145 = vpop.permute.xlu0 %1144
  %v1147 = vsel %vm106, %v1133, 0.0
  %1148 = vadd.xlane.f32.xlu0 %v1147
  %v1149 = vpop.xlane.xlu0 %1148
  %v1150 = vsel %vm106, %v1141, 0.0
  %1151 = vadd.xlane.f32.xlu0 %v1150
  %v1152 = vpop.xlane.xlu0 %1151
  %v1153 = vsel %vm106, %v1138, 0.0
  %1154 = vadd.xlane.f32.xlu0 %v1153
  %v1155 = vpop.xlane.xlu0 %1154
  %v1156 = vsel %vm106, %v1145, 0.0
  %1157 = vadd.xlane.f32.xlu0 %v1156
  %v1158 = vpop.xlane.xlu0 %1157
  %v1159 = vmul.f32 %v1149, %v412
  %v1160 = vmul.f32 %v1152, %v412
  %v1161 = vmul.f32 %v1155, %v412
  %v1162 = vmul.f32 %v1158, %v412
  %v1163 = vmul.f32 %v1159, %v1159
  %v1164 = vsub.f32 %v1161, %v1163
  %v1165 = vmax.f32 %v1164, 0.0
  %v1166 = vadd.f32 %v1165, 1e-05
  %v1167 = vrsqrt.pop %v1166
  %v1168 = vmul.f32 %v1160, %v1160
  %v1169 = vsub.f32 %v1162, %v1168
  %v1170 = vmax.f32 %v1169, 0.0
  %v1171 = vadd.f32 %v1170, 1e-05
  %v1172 = vrsqrt.pop %v1171
  %v1173 = vsub.f32 %v1133, %v1159
  %v1174 = vmul.f32 %v1173, %v1167
  %v1175 = vmul.f32 %v1174, %v432
  %v1176 = vadd.f32 %v1175, %v437
  %v1177 = vxor.u32 %v1176, 2147483648
  %v1178 = vmul.f32 %v1177, 1.442695
  %v1179 = vpow.pop %v1178
  %v1180 = vadd.f32 %v1179, 1.0
  %v1181 = vrcp.pop %v1180
  %v1182 = vmul.f32 1.0, %v1181
  %v1183 = vsub.f32 %v1133, %v1160
  %v1184 = vmul.f32 %v1183, %v1172
  %v1185 = vmul.f32 %v1184, %v453
  %v1186 = vadd.f32 %v1185, %v462
  %v1187 = vxor.u32 %v1186, 2147483648
  %v1188 = vmul.f32 %v1187, 1.442695
  %v1189 = vpow.pop %v1188
  %v1190 = vadd.f32 %v1189, 1.0
  %v1191 = vrcp.pop %v1190
  %v1192 = vmul.f32 1.0, %v1191
  %1194 = vrot.lane.b32.xlu0 %v1192, 96
  %v1195 = vpop.permute.xlu0 %1194
  %v1197 = vmul.f32 %v1089, %v1195
  %v1198 = vpack.c.bf16 %v1197, %v1197
  %s1199 = scalar_lea.vmem [#allocation3], 32
  %v1200 = vld [vmem:[%s1199] sm:$0xff]
  %v1202 = vsel %vm106, %v1198, 0
  %1204 = vmatprep.subr.bf16.mxu0 0
  %1205 = vmatpush1.bf16.msra.mxu0 %v486
  %1206 = vmatprep.subr.bf16.mxu0 0
  %1207 = vmatpush1.bf16.msra.mxu0 %v487
  %1208 = vmatprep.subr.bf16.mxu0 0
  %1209 = vmatpush1.bf16.msra.mxu0 0
  %1210 = vmatprep.subr.bf16.mxu0 0
  %1211 = vmatpush1.bf16.msra.mxu0 0
  %1212 = vmatprep.subr.bf16.mxu0 0
  %1213 = vmatpush1.bf16.msra.mxu0 0
  %1214 = vmatprep.subr.bf16.mxu0 0
  %1215 = vmatpush1.bf16.msra.mxu0 0
  %1216 = vmatprep.subr.bf16.mxu0 0
  %1217 = vmatpush1.bf16.msra.mxu0 0
  %1218 = vmatprep.subr.bf16.mxu0 0
  %1219 = vmatpush1.bf16.msra.mxu0 0
  %1220 = vmatprep.subr.bf16.mxu0 0
  %1221 = vmatpush1.bf16.msra.mxu0 0
  %1222 = vmatprep.subr.bf16.mxu0 0
  %1223 = vmatpush1.bf16.msra.mxu0 0
  %1224 = vmatprep.subr.bf16.mxu0 0
  %1225 = vmatpush1.bf16.msra.mxu0 0
  %1226 = vmatprep.subr.bf16.mxu0 0
  %1227 = vmatpush1.bf16.msra.mxu0 0
  %1228 = vmatprep.subr.bf16.mxu0 0
  %1229 = vmatpush1.bf16.msra.mxu0 0
  %1230 = vmatprep.subr.bf16.mxu0 0
  %1231 = vmatpush1.bf16.msra.mxu0 0
  %1232 = vmatprep.subr.bf16.mxu0 0
  %1233 = vmatpush1.bf16.msra.mxu0 0
  %1234 = vmatprep.subr.bf16.mxu0 0
  %1235 = vmatpush1.bf16.msra.mxu0 0
  %1236 = vmatprep.mubr.bf16.mxu0 0
  %1237 = vmatmul.mubr.bf16.gmra.mrb[0].mxu0 %v1202
  %v1238 = vpop.f32.mrb[0].mxu0
  %v1239 = vadd.f32 %v1200, %v1238
  %v1240 = vpop.f32.mrb[0].mxu0
  %v1241 = vpop.f32.mrb[0].mxu0
  %v1242 = vpop.f32.mrb[0].mxu0
  %1243 = vdwg.mxu0
  %v1244 = vmul.f32 %v1239, %v1239
  %v1245 = vsel %vm106, %v1239, 0.0
  %1246 = vadd.xlane.f32.xlu0 %v1245
  %v1247 = vpop.xlane.xlu0 %1246
  %v1248 = vsel %vm106, %v1244, 0.0
  %1249 = vadd.xlane.f32.xlu0 %v1248
  %v1250 = vpop.xlane.xlu0 %1249
  %v1251 = vmul.f32 %v1247, %v412
  %v1252 = vmul.f32 %v1250, %v412
  %v1253 = vmul.f32 %v1251, %v1251
  %v1254 = vsub.f32 %v1252, %v1253
  %v1255 = vmax.f32 %v1254, 0.0
  %v1256 = vadd.f32 %v1255, 1e-05
  %v1257 = vrsqrt.pop %v1256
  %v1258 = vsub.f32 %v1239, %v1251
  %v1259 = vmul.f32 %v1258, %v1257
  %v1260 = vmul.f32 %v1259, %v552
  %v1261 = vadd.f32 %v1260, %v557
  %v1262 = vtanh.pop %v1261
  %v1263 = vsub.f32 %v1262, %v1089
  %v1264 = vmul.f32 %v1182, %v1263
  %v1265 = vadd.f32 %v1089, %v1264
  %s1266 = scalar_lea.vmem %s7, 32
  %1267 = vst.msk [vmem:[%s1266] sm:$0xff] %vm106, %v1265
  %v1268 = vpack.c.bf16 %v1265, %v1265
  %s1269 = scalar_lea.vmem [#allocation2], 40
  %v1270 = vld [vmem:[%s1269] sm:$0xff]
  %v1272 = vsel %vm106, %v1268, 0
  %1274 = vmatprep.subr.bf16.mxu0 0
  %1275 = vmatpush1.bf16.msra.mxu0 %v344
  %1276 = vmatprep.subr.bf16.mxu0 0
  %1277 = vmatpush1.bf16.msra.mxu0 %v345
  %1278 = vmatprep.subr.bf16.mxu0 0
  %1279 = vmatpush1.bf16.msra.mxu0 0
  %1280 = vmatprep.subr.bf16.mxu0 0
  %1281 = vmatpush1.bf16.msra.mxu0 0
  %1282 = vmatprep.subr.bf16.mxu0 0
  %1283 = vmatpush1.bf16.msra.mxu0 0
  %1284 = vmatprep.subr.bf16.mxu0 0
  %1285 = vmatpush1.bf16.msra.mxu0 0
  %1286 = vmatprep.subr.bf16.mxu0 0
  %1287 = vmatpush1.bf16.msra.mxu0 0
  %1288 = vmatprep.subr.bf16.mxu0 0
  %1289 = vmatpush1.bf16.msra.mxu0 0
  %1290 = vmatprep.subr.bf16.mxu0 0
  %1291 = vmatpush1.bf16.msra.mxu0 0
  %1292 = vmatprep.subr.bf16.mxu0 0
  %1293 = vmatpush1.bf16.msra.mxu0 0
  %1294 = vmatprep.subr.bf16.mxu0 0
  %1295 = vmatpush1.bf16.msra.mxu0 0
  %1296 = vmatprep.subr.bf16.mxu0 0
  %1297 = vmatpush1.bf16.msra.mxu0 0
  %1298 = vmatprep.subr.bf16.mxu0 0
  %1299 = vmatpush1.bf16.msra.mxu0 0
  %1300 = vmatprep.subr.bf16.mxu0 0
  %1301 = vmatpush1.bf16.msra.mxu0 0
  %1302 = vmatprep.subr.bf16.mxu0 0
  %1303 = vmatpush1.bf16.msra.mxu0 0
  %1304 = vmatprep.subr.bf16.mxu0 0
  %1305 = vmatpush1.bf16.msra.mxu0 0
  %1306 = vmatprep.mubr.bf16.mxu0 0
  %1307 = vmatmul.mubr.bf16.gmra.mrb[0].mxu0 %v1272
  %v1308 = vpop.f32.mrb[0].mxu0
  %v1309 = vadd.f32 %v1270, %v1308
  %v1310 = vpop.f32.mrb[0].mxu0
  %v1311 = vpop.f32.mrb[0].mxu0
  %v1312 = vpop.f32.mrb[0].mxu0
  %1313 = vdwg.mxu0
  %v1314 = vmul.f32 %v1309, %v1309
  %1316 = vrot.lane.b32.xlu0 %v1309, 96
  %v1317 = vpop.permute.xlu0 %1316
  %1320 = vrot.lane.b32.xlu0 %v1314, 96
  %v1321 = vpop.permute.xlu0 %1320
  %v1323 = vsel %vm106, %v1309, 0.0
  %1324 = vadd.xlane.f32.xlu0 %v1323
  %v1325 = vpop.xlane.xlu0 %1324
  %v1326 = vsel %vm106, %v1317, 0.0
  %1327 = vadd.xlane.f32.xlu0 %v1326
  %v1328 = vpop.xlane.xlu0 %1327
  %v1329 = vsel %vm106, %v1314, 0.0
  %1330 = vadd.xlane.f32.xlu0 %v1329
  %v1331 = vpop.xlane.xlu0 %1330
  %v1332 = vsel %vm106, %v1321, 0.0
  %1333 = vadd.xlane.f32.xlu0 %v1332
  %v1334 = vpop.xlane.xlu0 %1333
  %v1335 = vmul.f32 %v1325, %v412
  %v1336 = vmul.f32 %v1328, %v412
  %v1337 = vmul.f32 %v1331, %v412
  %v1338 = vmul.f32 %v1334, %v412
  %v1339 = vmul.f32 %v1335, %v1335
  %v1340 = vsub.f32 %v1337, %v1339
  %v1341 = vmax.f32 %v1340, 0.0
  %v1342 = vadd.f32 %v1341, 1e-05
  %v1343 = vrsqrt.pop %v1342
  %v1344 = vmul.f32 %v1336, %v1336
  %v1345 = vsub.f32 %v1338, %v1344
  %v1346 = vmax.f32 %v1345, 0.0
  %v1347 = vadd.f32 %v1346, 1e-05
  %v1348 = vrsqrt.pop %v1347
  %v1349 = vsub.f32 %v1309, %v1335
  %v1350 = vmul.f32 %v1349, %v1343
  %v1351 = vmul.f32 %v1350, %v432
  %v1352 = vadd.f32 %v1351, %v437
  %v1353 = vxor.u32 %v1352, 2147483648
  %v1354 = vmul.f32 %v1353, 1.442695
  %v1355 = vpow.pop %v1354
  %v1356 = vadd.f32 %v1355, 1.0
  %v1357 = vrcp.pop %v1356
  %v1358 = vmul.f32 1.0, %v1357
  %v1359 = vsub.f32 %v1309, %v1336
  %v1360 = vmul.f32 %v1359, %v1348
  %v1361 = vmul.f32 %v1360, %v453
  %v1362 = vadd.f32 %v1361, %v462
  %v1363 = vxor.u32 %v1362, 2147483648
  %v1364 = vmul.f32 %v1363, 1.442695
  %v1365 = vpow.pop %v1364
  %v1366 = vadd.f32 %v1365, 1.0
  %v1367 = vrcp.pop %v1366
  %v1368 = vmul.f32 1.0, %v1367
  %1370 = vrot.lane.b32.xlu0 %v1368, 96
  %v1371 = vpop.permute.xlu0 %1370
  %v1373 = vmul.f32 %v1265, %v1371
  %v1374 = vpack.c.bf16 %v1373, %v1373
  %s1375 = scalar_lea.vmem [#allocation3], 40
  %v1376 = vld [vmem:[%s1375] sm:$0xff]
  %v1378 = vsel %vm106, %v1374, 0
  %1380 = vmatprep.subr.bf16.mxu0 0
  %1381 = vmatpush1.bf16.msra.mxu0 %v486
  %1382 = vmatprep.subr.bf16.mxu0 0
  %1383 = vmatpush1.bf16.msra.mxu0 %v487
  %1384 = vmatprep.subr.bf16.mxu0 0
  %1385 = vmatpush1.bf16.msra.mxu0 0
  %1386 = vmatprep.subr.bf16.mxu0 0
  %1387 = vmatpush1.bf16.msra.mxu0 0
  %1388 = vmatprep.subr.bf16.mxu0 0
  %1389 = vmatpush1.bf16.msra.mxu0 0
  %1390 = vmatprep.subr.bf16.mxu0 0
  %1391 = vmatpush1.bf16.msra.mxu0 0
  %1392 = vmatprep.subr.bf16.mxu0 0
  %1393 = vmatpush1.bf16.msra.mxu0 0
  %1394 = vmatprep.subr.bf16.mxu0 0
  %1395 = vmatpush1.bf16.msra.mxu0 0
  %1396 = vmatprep.subr.bf16.mxu0 0
  %1397 = vmatpush1.bf16.msra.mxu0 0
  %1398 = vmatprep.subr.bf16.mxu0 0
  %1399 = vmatpush1.bf16.msra.mxu0 0
  %1400 = vmatprep.subr.bf16.mxu0 0
  %1401 = vmatpush1.bf16.msra.mxu0 0
  %1402 = vmatprep.subr.bf16.mxu0 0
  %1403 = vmatpush1.bf16.msra.mxu0 0
  %1404 = vmatprep.subr.bf16.mxu0 0
  %1405 = vmatpush1.bf16.msra.mxu0 0
  %1406 = vmatprep.subr.bf16.mxu0 0
  %1407 = vmatpush1.bf16.msra.mxu0 0
  %1408 = vmatprep.subr.bf16.mxu0 0
  %1409 = vmatpush1.bf16.msra.mxu0 0
  %1410 = vmatprep.subr.bf16.mxu0 0
  %1411 = vmatpush1.bf16.msra.mxu0 0
  %1412 = vmatprep.mubr.bf16.mxu0 0
  %1413 = vmatmul.mubr.bf16.gmra.mrb[0].mxu0 %v1378
  %v1414 = vpop.f32.mrb[0].mxu0
  %v1415 = vadd.f32 %v1376, %v1414
  %v1416 = vpop.f32.mrb[0].mxu0
  %v1417 = vpop.f32.mrb[0].mxu0
  %v1418 = vpop.f32.mrb[0].mxu0
  %1419 = vdwg.mxu0
  %v1420 = vmul.f32 %v1415, %v1415
  %v1421 = vsel %vm106, %v1415, 0.0
  %1422 = vadd.xlane.f32.xlu0 %v1421
  %v1423 = vpop.xlane.xlu0 %1422
  %v1424 = vsel %vm106, %v1420, 0.0
  %1425 = vadd.xlane.f32.xlu0 %v1424
  %v1426 = vpop.xlane.xlu0 %1425
  %v1427 = vmul.f32 %v1423, %v412
  %v1428 = vmul.f32 %v1426, %v412
  %v1429 = vmul.f32 %v1427, %v1427
  %v1430 = vsub.f32 %v1428, %v1429
  %v1431 = vmax.f32 %v1430, 0.0
  %v1432 = vadd.f32 %v1431, 1e-05
  %v1433 = vrsqrt.pop %v1432
  %v1434 = vsub.f32 %v1415, %v1427
  %v1435 = vmul.f32 %v1434, %v1433
  %v1436 = vmul.f32 %v1435, %v552
  %v1437 = vadd.f32 %v1436, %v557
  %v1438 = vtanh.pop %v1437
  %v1439 = vsub.f32 %v1438, %v1265
  %v1440 = vmul.f32 %v1358, %v1439
  %v1441 = vadd.f32 %v1265, %v1440
  %s1442 = scalar_lea.vmem %s7, 40
  %1443 = vst.msk [vmem:[%s1442] sm:$0xff] %vm106, %v1441
  %v1444 = vpack.c.bf16 %v1441, %v1441
  %s1445 = scalar_lea.vmem [#allocation2], 48
  %v1446 = vld [vmem:[%s1445] sm:$0xff]
  %v1448 = vsel %vm106, %v1444, 0
  %1450 = vmatprep.subr.bf16.mxu0 0
  %1451 = vmatpush1.bf16.msra.mxu0 %v344
  %1452 = vmatprep.subr.bf16.mxu0 0
  %1453 = vmatpush1.bf16.msra.mxu0 %v345
  %1454 = vmatprep.subr.bf16.mxu0 0
  %1455 = vmatpush1.bf16.msra.mxu0 0
  %1456 = vmatprep.subr.bf16.mxu0 0
  %1457 = vmatpush1.bf16.msra.mxu0 0
  %1458 = vmatprep.subr.bf16.mxu0 0
  %1459 = vmatpush1.bf16.msra.mxu0 0
  %1460 = vmatprep.subr.bf16.mxu0 0
  %1461 = vmatpush1.bf16.msra.mxu0 0
  %1462 = vmatprep.subr.bf16.mxu0 0
  %1463 = vmatpush1.bf16.msra.mxu0 0
  %1464 = vmatprep.subr.bf16.mxu0 0
  %1465 = vmatpush1.bf16.msra.mxu0 0
  %1466 = vmatprep.subr.bf16.mxu0 0
  %1467 = vmatpush1.bf16.msra.mxu0 0
  %1468 = vmatprep.subr.bf16.mxu0 0
  %1469 = vmatpush1.bf16.msra.mxu0 0
  %1470 = vmatprep.subr.bf16.mxu0 0
  %1471 = vmatpush1.bf16.msra.mxu0 0
  %1472 = vmatprep.subr.bf16.mxu0 0
  %1473 = vmatpush1.bf16.msra.mxu0 0
  %1474 = vmatprep.subr.bf16.mxu0 0
  %1475 = vmatpush1.bf16.msra.mxu0 0
  %1476 = vmatprep.subr.bf16.mxu0 0
  %1477 = vmatpush1.bf16.msra.mxu0 0
  %1478 = vmatprep.subr.bf16.mxu0 0
  %1479 = vmatpush1.bf16.msra.mxu0 0
  %1480 = vmatprep.subr.bf16.mxu0 0
  %1481 = vmatpush1.bf16.msra.mxu0 0
  %1482 = vmatprep.mubr.bf16.mxu0 0
  %1483 = vmatmul.mubr.bf16.gmra.mrb[0].mxu0 %v1448
  %v1484 = vpop.f32.mrb[0].mxu0
  %v1485 = vadd.f32 %v1446, %v1484
  %v1486 = vpop.f32.mrb[0].mxu0
  %v1487 = vpop.f32.mrb[0].mxu0
  %v1488 = vpop.f32.mrb[0].mxu0
  %1489 = vdwg.mxu0
  %v1490 = vmul.f32 %v1485, %v1485
  %1492 = vrot.lane.b32.xlu0 %v1485, 96
  %v1493 = vpop.permute.xlu0 %1492
  %1496 = vrot.lane.b32.xlu0 %v1490, 96
  %v1497 = vpop.permute.xlu0 %1496
  %v1499 = vsel %vm106, %v1485, 0.0
  %1500 = vadd.xlane.f32.xlu0 %v1499
  %v1501 = vpop.xlane.xlu0 %1500
  %v1502 = vsel %vm106, %v1493, 0.0
  %1503 = vadd.xlane.f32.xlu0 %v1502
  %v1504 = vpop.xlane.xlu0 %1503
  %v1505 = vsel %vm106, %v1490, 0.0
  %1506 = vadd.xlane.f32.xlu0 %v1505
  %v1507 = vpop.xlane.xlu0 %1506
  %v1508 = vsel %vm106, %v1497, 0.0
  %1509 = vadd.xlane.f32.xlu0 %v1508
  %v1510 = vpop.xlane.xlu0 %1509
  %v1511 = vmul.f32 %v1501, %v412
  %v1512 = vmul.f32 %v1504, %v412
  %v1513 = vmul.f32 %v1507, %v412
  %v1514 = vmul.f32 %v1510, %v412
  %v1515 = vmul.f32 %v1511, %v1511
  %v1516 = vsub.f32 %v1513, %v1515
  %v1517 = vmax.f32 %v1516, 0.0
  %v1518 = vadd.f32 %v1517, 1e-05
  %v1519 = vrsqrt.pop %v1518
  %v1520 = vmul.f32 %v1512, %v1512
  %v1521 = vsub.f32 %v1514, %v1520
  %v1522 = vmax.f32 %v1521, 0.0
  %v1523 = vadd.f32 %v1522, 1e-05
  %v1524 = vrsqrt.pop %v1523
  %v1525 = vsub.f32 %v1485, %v1511
  %v1526 = vmul.f32 %v1525, %v1519
  %v1527 = vmul.f32 %v1526, %v432
  %v1528 = vadd.f32 %v1527, %v437
  %v1529 = vxor.u32 %v1528, 2147483648
  %v1530 = vmul.f32 %v1529, 1.442695
  %v1531 = vpow.pop %v1530
  %v1532 = vadd.f32 %v1531, 1.0
  %v1533 = vrcp.pop %v1532
  %v1534 = vmul.f32 1.0, %v1533
  %v1535 = vsub.f32 %v1485, %v1512
  %v1536 = vmul.f32 %v1535, %v1524
  %v1537 = vmul.f32 %v1536, %v453
  %v1538 = vadd.f32 %v1537, %v462
  %v1539 = vxor.u32 %v1538, 2147483648
  %v1540 = vmul.f32 %v1539, 1.442695
  %v1541 = vpow.pop %v1540
  %v1542 = vadd.f32 %v1541, 1.0
  %v1543 = vrcp.pop %v1542
  %v1544 = vmul.f32 1.0, %v1543
  %1546 = vrot.lane.b32.xlu0 %v1544, 96
  %v1547 = vpop.permute.xlu0 %1546
  %v1549 = vmul.f32 %v1441, %v1547
  %v1550 = vpack.c.bf16 %v1549, %v1549
  %s1551 = scalar_lea.vmem [#allocation3], 48
  %v1552 = vld [vmem:[%s1551] sm:$0xff]
  %v1554 = vsel %vm106, %v1550, 0
  %1556 = vmatprep.subr.bf16.mxu0 0
  %1557 = vmatpush1.bf16.msra.mxu0 %v486
  %1558 = vmatprep.subr.bf16.mxu0 0
  %1559 = vmatpush1.bf16.msra.mxu0 %v487
  %1560 = vmatprep.subr.bf16.mxu0 0
  %1561 = vmatpush1.bf16.msra.mxu0 0
  %1562 = vmatprep.subr.bf16.mxu0 0
  %1563 = vmatpush1.bf16.msra.mxu0 0
  %1564 = vmatprep.subr.bf16.mxu0 0
  %1565 = vmatpush1.bf16.msra.mxu0 0
  %1566 = vmatprep.subr.bf16.mxu0 0
  %1567 = vmatpush1.bf16.msra.mxu0 0
  %1568 = vmatprep.subr.bf16.mxu0 0
  %1569 = vmatpush1.bf16.msra.mxu0 0
  %1570 = vmatprep.subr.bf16.mxu0 0
  %1571 = vmatpush1.bf16.msra.mxu0 0
  %1572 = vmatprep.subr.bf16.mxu0 0
  %1573 = vmatpush1.bf16.msra.mxu0 0
  %1574 = vmatprep.subr.bf16.mxu0 0
  %1575 = vmatpush1.bf16.msra.mxu0 0
  %1576 = vmatprep.subr.bf16.mxu0 0
  %1577 = vmatpush1.bf16.msra.mxu0 0
  %1578 = vmatprep.subr.bf16.mxu0 0
  %1579 = vmatpush1.bf16.msra.mxu0 0
  %1580 = vmatprep.subr.bf16.mxu0 0
  %1581 = vmatpush1.bf16.msra.mxu0 0
  %1582 = vmatprep.subr.bf16.mxu0 0
  %1583 = vmatpush1.bf16.msra.mxu0 0
  %1584 = vmatprep.subr.bf16.mxu0 0
  %1585 = vmatpush1.bf16.msra.mxu0 0
  %1586 = vmatprep.subr.bf16.mxu0 0
  %1587 = vmatpush1.bf16.msra.mxu0 0
  %1588 = vmatprep.mubr.bf16.mxu0 0
  %1589 = vmatmul.mubr.bf16.gmra.mrb[0].mxu0 %v1554
  %v1590 = vpop.f32.mrb[0].mxu0
  %v1591 = vadd.f32 %v1552, %v1590
  %v1592 = vpop.f32.mrb[0].mxu0
  %v1593 = vpop.f32.mrb[0].mxu0
  %v1594 = vpop.f32.mrb[0].mxu0
  %1595 = vdwg.mxu0
  %v1596 = vmul.f32 %v1591, %v1591
  %v1597 = vsel %vm106, %v1591, 0.0
  %1598 = vadd.xlane.f32.xlu0 %v1597
  %v1599 = vpop.xlane.xlu0 %1598
  %v1600 = vsel %vm106, %v1596, 0.0
  %1601 = vadd.xlane.f32.xlu0 %v1600
  %v1602 = vpop.xlane.xlu0 %1601
  %v1603 = vmul.f32 %v1599, %v412
  %v1604 = vmul.f32 %v1602, %v412
  %v1605 = vmul.f32 %v1603, %v1603
  %v1606 = vsub.f32 %v1604, %v1605
  %v1607 = vmax.f32 %v1606, 0.0
  %v1608 = vadd.f32 %v1607, 1e-05
  %v1609 = vrsqrt.pop %v1608
  %v1610 = vsub.f32 %v1591, %v1603
  %v1611 = vmul.f32 %v1610, %v1609
  %v1612 = vmul.f32 %v1611, %v552
  %v1613 = vadd.f32 %v1612, %v557
  %v1614 = vtanh.pop %v1613
  %v1615 = vsub.f32 %v1614, %v1441
  %v1616 = vmul.f32 %v1534, %v1615
  %v1617 = vadd.f32 %v1441, %v1616
  %s1618 = scalar_lea.vmem %s7, 48
  %1619 = vst.msk [vmem:[%s1618] sm:$0xff] %vm106, %v1617
  %v1620 = vpack.c.bf16 %v1617, %v1617
  %s1621 = scalar_lea.vmem [#allocation2], 56
  %v1622 = vld [vmem:[%s1621] sm:$0xff]
  %v1624 = vsel %vm106, %v1620, 0
  %1626 = vmatprep.subr.bf16.mxu0 0
  %1627 = vmatpush1.bf16.msra.mxu0 %v344
  %1628 = vmatprep.subr.bf16.mxu0 0
  %1629 = vmatpush1.bf16.msra.mxu0 %v345
  %1630 = vmatprep.subr.bf16.mxu0 0
  %1631 = vmatpush1.bf16.msra.mxu0 0
  %1632 = vmatprep.subr.bf16.mxu0 0
  %1633 = vmatpush1.bf16.msra.mxu0 0
  %1634 = vmatprep.subr.bf16.mxu0 0
  %1635 = vmatpush1.bf16.msra.mxu0 0
  %1636 = vmatprep.subr.bf16.mxu0 0
  %1637 = vmatpush1.bf16.msra.mxu0 0
  %1638 = vmatprep.subr.bf16.mxu0 0
  %1639 = vmatpush1.bf16.msra.mxu0 0
  %1640 = vmatprep.subr.bf16.mxu0 0
  %1641 = vmatpush1.bf16.msra.mxu0 0
  %1642 = vmatprep.subr.bf16.mxu0 0
  %1643 = vmatpush1.bf16.msra.mxu0 0
  %1644 = vmatprep.subr.bf16.mxu0 0
  %1645 = vmatpush1.bf16.msra.mxu0 0
  %1646 = vmatprep.subr.bf16.mxu0 0
  %1647 = vmatpush1.bf16.msra.mxu0 0
  %1648 = vmatprep.subr.bf16.mxu0 0
  %1649 = vmatpush1.bf16.msra.mxu0 0
  %1650 = vmatprep.subr.bf16.mxu0 0
  %1651 = vmatpush1.bf16.msra.mxu0 0
  %1652 = vmatprep.subr.bf16.mxu0 0
  %1653 = vmatpush1.bf16.msra.mxu0 0
  %1654 = vmatprep.subr.bf16.mxu0 0
  %1655 = vmatpush1.bf16.msra.mxu0 0
  %1656 = vmatprep.subr.bf16.mxu0 0
  %1657 = vmatpush1.bf16.msra.mxu0 0
  %1658 = vmatprep.mubr.bf16.mxu0 0
  %1659 = vmatmul.mubr.bf16.gmra.mrb[0].mxu0 %v1624
  %v1660 = vpop.f32.mrb[0].mxu0
  %v1661 = vadd.f32 %v1622, %v1660
  %v1662 = vpop.f32.mrb[0].mxu0
  %v1663 = vpop.f32.mrb[0].mxu0
  %v1664 = vpop.f32.mrb[0].mxu0
  %1665 = vdwg.mxu0
  %v1666 = vmul.f32 %v1661, %v1661
  %1668 = vrot.lane.b32.xlu0 %v1661, 96
  %v1669 = vpop.permute.xlu0 %1668
  %1672 = vrot.lane.b32.xlu0 %v1666, 96
  %v1673 = vpop.permute.xlu0 %1672
  %v1675 = vsel %vm106, %v1661, 0.0
  %1676 = vadd.xlane.f32.xlu0 %v1675
  %v1677 = vpop.xlane.xlu0 %1676
  %v1678 = vsel %vm106, %v1669, 0.0
  %1679 = vadd.xlane.f32.xlu0 %v1678
  %v1680 = vpop.xlane.xlu0 %1679
  %v1681 = vsel %vm106, %v1666, 0.0
  %1682 = vadd.xlane.f32.xlu0 %v1681
  %v1683 = vpop.xlane.xlu0 %1682
  %v1684 = vsel %vm106, %v1673, 0.0
  %1685 = vadd.xlane.f32.xlu0 %v1684
  %v1686 = vpop.xlane.xlu0 %1685
  %v1687 = vmul.f32 %v1677, %v412
  %v1688 = vmul.f32 %v1680, %v412
  %v1689 = vmul.f32 %v1683, %v412
  %v1690 = vmul.f32 %v1686, %v412
  %v1691 = vmul.f32 %v1687, %v1687
  %v1692 = vsub.f32 %v1689, %v1691
  %v1693 = vmax.f32 %v1692, 0.0
  %v1694 = vadd.f32 %v1693, 1e-05
  %v1695 = vrsqrt.pop %v1694
  %v1696 = vmul.f32 %v1688, %v1688
  %v1697 = vsub.f32 %v1690, %v1696
  %v1698 = vmax.f32 %v1697, 0.0
  %v1699 = vadd.f32 %v1698, 1e-05
  %v1700 = vrsqrt.pop %v1699
  %v1701 = vsub.f32 %v1661, %v1687
  %v1702 = vmul.f32 %v1701, %v1695
  %v1703 = vmul.f32 %v1702, %v432
  %v1704 = vadd.f32 %v1703, %v437
  %v1705 = vxor.u32 %v1704, 2147483648
  %v1706 = vmul.f32 %v1705, 1.442695
  %v1707 = vpow.pop %v1706
  %v1708 = vadd.f32 %v1707, 1.0
  %v1709 = vrcp.pop %v1708
  %v1710 = vmul.f32 1.0, %v1709
  %v1711 = vsub.f32 %v1661, %v1688
  %v1712 = vmul.f32 %v1711, %v1700
  %v1713 = vmul.f32 %v1712, %v453
  %v1714 = vadd.f32 %v1713, %v462
  %v1715 = vxor.u32 %v1714, 2147483648
  %v1716 = vmul.f32 %v1715, 1.442695
  %v1717 = vpow.pop %v1716
  %v1718 = vadd.f32 %v1717, 1.0
  %v1719 = vrcp.pop %v1718
  %v1720 = vmul.f32 1.0, %v1719
  %1722 = vrot.lane.b32.xlu0 %v1720, 96
  %v1723 = vpop.permute.xlu0 %1722
  %v1725 = vmul.f32 %v1617, %v1723
  %v1726 = vpack.c.bf16 %v1725, %v1725
  %s1727 = scalar_lea.vmem [#allocation3], 56
  %v1728 = vld [vmem:[%s1727] sm:$0xff]
  %v1730 = vsel %vm106, %v1726, 0
  %1732 = vmatprep.subr.bf16.mxu0 0
  %1733 = vmatpush1.bf16.msra.mxu0 %v486
  %1734 = vmatprep.subr.bf16.mxu0 0
  %1735 = vmatpush1.bf16.msra.mxu0 %v487
  %1736 = vmatprep.subr.bf16.mxu0 0
  %1737 = vmatpush1.bf16.msra.mxu0 0
  %1738 = vmatprep.subr.bf16.mxu0 0
  %1739 = vmatpush1.bf16.msra.mxu0 0
  %1740 = vmatprep.subr.bf16.mxu0 0
  %1741 = vmatpush1.bf16.msra.mxu0 0
  %1742 = vmatprep.subr.bf16.mxu0 0
  %1743 = vmatpush1.bf16.msra.mxu0 0
  %1744 = vmatprep.subr.bf16.mxu0 0
  %1745 = vmatpush1.bf16.msra.mxu0 0
  %1746 = vmatprep.subr.bf16.mxu0 0
  %1747 = vmatpush1.bf16.msra.mxu0 0
  %1748 = vmatprep.subr.bf16.mxu0 0
  %1749 = vmatpush1.bf16.msra.mxu0 0
  %1750 = vmatprep.subr.bf16.mxu0 0
  %1751 = vmatpush1.bf16.msra.mxu0 0
  %1752 = vmatprep.subr.bf16.mxu0 0
  %1753 = vmatpush1.bf16.msra.mxu0 0
  %1754 = vmatprep.subr.bf16.mxu0 0
  %1755 = vmatpush1.bf16.msra.mxu0 0
  %1756 = vmatprep.subr.bf16.mxu0 0
  %1757 = vmatpush1.bf16.msra.mxu0 0
  %1758 = vmatprep.subr.bf16.mxu0 0
  %1759 = vmatpush1.bf16.msra.mxu0 0
  %1760 = vmatprep.subr.bf16.mxu0 0
  %1761 = vmatpush1.bf16.msra.mxu0 0
  %1762 = vmatprep.subr.bf16.mxu0 0
  %1763 = vmatpush1.bf16.msra.mxu0 0
  %1764 = vmatprep.mubr.bf16.mxu0 0
  %1765 = vmatmul.mubr.bf16.gmra.mrb[0].mxu0 %v1730
  %v1766 = vpop.f32.mrb[0].mxu0
  %v1767 = vadd.f32 %v1728, %v1766
  %v1768 = vpop.f32.mrb[0].mxu0
  %v1769 = vpop.f32.mrb[0].mxu0
  %v1770 = vpop.f32.mrb[0].mxu0
  %1771 = vdwg.mxu0
  %v1772 = vmul.f32 %v1767, %v1767
  %v1773 = vsel %vm106, %v1767, 0.0
  %1774 = vadd.xlane.f32.xlu0 %v1773
  %v1775 = vpop.xlane.xlu0 %1774
  %v1776 = vsel %vm106, %v1772, 0.0
  %1777 = vadd.xlane.f32.xlu0 %v1776
  %v1778 = vpop.xlane.xlu0 %1777
  %v1779 = vmul.f32 %v1775, %v412
  %v1780 = vmul.f32 %v1778, %v412
  %v1781 = vmul.f32 %v1779, %v1779
  %v1782 = vsub.f32 %v1780, %v1781
  %v1783 = vmax.f32 %v1782, 0.0
  %v1784 = vadd.f32 %v1783, 1e-05
  %v1785 = vrsqrt.pop %v1784
  %v1786 = vsub.f32 %v1767, %v1779
  %v1787 = vmul.f32 %v1786, %v1785
  %v1788 = vmul.f32 %v1787, %v552
  %v1789 = vadd.f32 %v1788, %v557
  %v1790 = vtanh.pop %v1789
  %v1791 = vsub.f32 %v1790, %v1617
  %v1792 = vmul.f32 %v1710, %v1791
  %v1793 = vadd.f32 %v1617, %v1792
  %s1794 = scalar_lea.vmem %s7, 56
  %1795 = vst.msk [vmem:[%s1794] sm:$0xff] %vm106, %v1793
  %v1796 = vpack.c.bf16 %v1793, %v1793
  %s1797 = scalar_lea.vmem [#allocation2], 64
  %v1798 = vld [vmem:[%s1797] sm:$0xff]
  %v1800 = vsel %vm106, %v1796, 0
  %1802 = vmatprep.subr.bf16.mxu0 0
  %1803 = vmatpush1.bf16.msra.mxu0 %v344
  %1804 = vmatprep.subr.bf16.mxu0 0
  %1805 = vmatpush1.bf16.msra.mxu0 %v345
  %1806 = vmatprep.subr.bf16.mxu0 0
  %1807 = vmatpush1.bf16.msra.mxu0 0
  %1808 = vmatprep.subr.bf16.mxu0 0
  %1809 = vmatpush1.bf16.msra.mxu0 0
  %1810 = vmatprep.subr.bf16.mxu0 0
  %1811 = vmatpush1.bf16.msra.mxu0 0
  %1812 = vmatprep.subr.bf16.mxu0 0
  %1813 = vmatpush1.bf16.msra.mxu0 0
  %1814 = vmatprep.subr.bf16.mxu0 0
  %1815 = vmatpush1.bf16.msra.mxu0 0
  %1816 = vmatprep.subr.bf16.mxu0 0
  %1817 = vmatpush1.bf16.msra.mxu0 0
  %1818 = vmatprep.subr.bf16.mxu0 0
  %1819 = vmatpush1.bf16.msra.mxu0 0
  %1820 = vmatprep.subr.bf16.mxu0 0
  %1821 = vmatpush1.bf16.msra.mxu0 0
  %1822 = vmatprep.subr.bf16.mxu0 0
  %1823 = vmatpush1.bf16.msra.mxu0 0
  %1824 = vmatprep.subr.bf16.mxu0 0
  %1825 = vmatpush1.bf16.msra.mxu0 0
  %1826 = vmatprep.subr.bf16.mxu0 0
  %1827 = vmatpush1.bf16.msra.mxu0 0
  %1828 = vmatprep.subr.bf16.mxu0 0
  %1829 = vmatpush1.bf16.msra.mxu0 0
  %1830 = vmatprep.subr.bf16.mxu0 0
  %1831 = vmatpush1.bf16.msra.mxu0 0
  %1832 = vmatprep.subr.bf16.mxu0 0
  %1833 = vmatpush1.bf16.msra.mxu0 0
  %1834 = vmatprep.mubr.bf16.mxu0 0
  %1835 = vmatmul.mubr.bf16.gmra.mrb[0].mxu0 %v1800
  %v1836 = vpop.f32.mrb[0].mxu0
  %v1837 = vadd.f32 %v1798, %v1836
  %v1838 = vpop.f32.mrb[0].mxu0
  %v1839 = vpop.f32.mrb[0].mxu0
  %v1840 = vpop.f32.mrb[0].mxu0
  %1841 = vdwg.mxu0
  %v1842 = vmul.f32 %v1837, %v1837
  %1844 = vrot.lane.b32.xlu0 %v1837, 96
  %v1845 = vpop.permute.xlu0 %1844
  %1848 = vrot.lane.b32.xlu0 %v1842, 96
  %v1849 = vpop.permute.xlu0 %1848
  %v1851 = vsel %vm106, %v1837, 0.0
  %1852 = vadd.xlane.f32.xlu0 %v1851
  %v1853 = vpop.xlane.xlu0 %1852
  %v1854 = vsel %vm106, %v1845, 0.0
  %1855 = vadd.xlane.f32.xlu0 %v1854
  %v1856 = vpop.xlane.xlu0 %1855
  %v1857 = vsel %vm106, %v1842, 0.0
  %1858 = vadd.xlane.f32.xlu0 %v1857
  %v1859 = vpop.xlane.xlu0 %1858
  %v1860 = vsel %vm106, %v1849, 0.0
  %1861 = vadd.xlane.f32.xlu0 %v1860
  %v1862 = vpop.xlane.xlu0 %1861
  %v1863 = vmul.f32 %v1853, %v412
  %v1864 = vmul.f32 %v1856, %v412
  %v1865 = vmul.f32 %v1859, %v412
  %v1866 = vmul.f32 %v1862, %v412
  %v1867 = vmul.f32 %v1863, %v1863
  %v1868 = vsub.f32 %v1865, %v1867
  %v1869 = vmax.f32 %v1868, 0.0
  %v1870 = vadd.f32 %v1869, 1e-05
  %v1871 = vrsqrt.pop %v1870
  %v1872 = vmul.f32 %v1864, %v1864
  %v1873 = vsub.f32 %v1866, %v1872
  %v1874 = vmax.f32 %v1873, 0.0
  %v1875 = vadd.f32 %v1874, 1e-05
  %v1876 = vrsqrt.pop %v1875
  %v1877 = vsub.f32 %v1837, %v1863
  %v1878 = vmul.f32 %v1877, %v1871
  %v1879 = vmul.f32 %v1878, %v432
  %v1880 = vadd.f32 %v1879, %v437
  %v1881 = vxor.u32 %v1880, 2147483648
  %v1882 = vmul.f32 %v1881, 1.442695
  %v1883 = vpow.pop %v1882
  %v1884 = vadd.f32 %v1883, 1.0
  %v1885 = vrcp.pop %v1884
  %v1886 = vmul.f32 1.0, %v1885
  %v1887 = vsub.f32 %v1837, %v1864
  %v1888 = vmul.f32 %v1887, %v1876
  %v1889 = vmul.f32 %v1888, %v453
  %v1890 = vadd.f32 %v1889, %v462
  %v1891 = vxor.u32 %v1890, 2147483648
  %v1892 = vmul.f32 %v1891, 1.442695
  %v1893 = vpow.pop %v1892
  %v1894 = vadd.f32 %v1893, 1.0
  %v1895 = vrcp.pop %v1894
  %v1896 = vmul.f32 1.0, %v1895
  %1898 = vrot.lane.b32.xlu0 %v1896, 96
  %v1899 = vpop.permute.xlu0 %1898
  %v1901 = vmul.f32 %v1793, %v1899
  %v1902 = vpack.c.bf16 %v1901, %v1901
  %s1903 = scalar_lea.vmem [#allocation3], 64
  %v1904 = vld [vmem:[%s1903] sm:$0xff]
  %v1906 = vsel %vm106, %v1902, 0
  %1908 = vmatprep.subr.bf16.mxu0 0
  %1909 = vmatpush1.bf16.msra.mxu0 %v486
  %1910 = vmatprep.subr.bf16.mxu0 0
  %1911 = vmatpush1.bf16.msra.mxu0 %v487
  %1912 = vmatprep.subr.bf16.mxu0 0
  %1913 = vmatpush1.bf16.msra.mxu0 0
  %1914 = vmatprep.subr.bf16.mxu0 0
  %1915 = vmatpush1.bf16.msra.mxu0 0
  %1916 = vmatprep.subr.bf16.mxu0 0
  %1917 = vmatpush1.bf16.msra.mxu0 0
  %1918 = vmatprep.subr.bf16.mxu0 0
  %1919 = vmatpush1.bf16.msra.mxu0 0
  %1920 = vmatprep.subr.bf16.mxu0 0
  %1921 = vmatpush1.bf16.msra.mxu0 0
  %1922 = vmatprep.subr.bf16.mxu0 0
  %1923 = vmatpush1.bf16.msra.mxu0 0
  %1924 = vmatprep.subr.bf16.mxu0 0
  %1925 = vmatpush1.bf16.msra.mxu0 0
  %1926 = vmatprep.subr.bf16.mxu0 0
  %1927 = vmatpush1.bf16.msra.mxu0 0
  %1928 = vmatprep.subr.bf16.mxu0 0
  %1929 = vmatpush1.bf16.msra.mxu0 0
  %1930 = vmatprep.subr.bf16.mxu0 0
  %1931 = vmatpush1.bf16.msra.mxu0 0
  %1932 = vmatprep.subr.bf16.mxu0 0
  %1933 = vmatpush1.bf16.msra.mxu0 0
  %1934 = vmatprep.subr.bf16.mxu0 0
  %1935 = vmatpush1.bf16.msra.mxu0 0
  %1936 = vmatprep.subr.bf16.mxu0 0
  %1937 = vmatpush1.bf16.msra.mxu0 0
  %1938 = vmatprep.subr.bf16.mxu0 0
  %1939 = vmatpush1.bf16.msra.mxu0 0
  %1940 = vmatprep.mubr.bf16.mxu0 0
  %1941 = vmatmul.mubr.bf16.gmra.mrb[0].mxu0 %v1906
  %v1942 = vpop.f32.mrb[0].mxu0
  %v1943 = vadd.f32 %v1904, %v1942
  %v1944 = vpop.f32.mrb[0].mxu0
  %v1945 = vpop.f32.mrb[0].mxu0
  %v1946 = vpop.f32.mrb[0].mxu0
  %1947 = vdwg.mxu0
  %v1948 = vmul.f32 %v1943, %v1943
  %v1949 = vsel %vm106, %v1943, 0.0
  %1950 = vadd.xlane.f32.xlu0 %v1949
  %v1951 = vpop.xlane.xlu0 %1950
  %v1952 = vsel %vm106, %v1948, 0.0
  %1953 = vadd.xlane.f32.xlu0 %v1952
  %v1954 = vpop.xlane.xlu0 %1953
  %v1955 = vmul.f32 %v1951, %v412
  %v1956 = vmul.f32 %v1954, %v412
  %v1957 = vmul.f32 %v1955, %v1955
  %v1958 = vsub.f32 %v1956, %v1957
  %v1959 = vmax.f32 %v1958, 0.0
  %v1960 = vadd.f32 %v1959, 1e-05
  %v1961 = vrsqrt.pop %v1960
  %v1962 = vsub.f32 %v1943, %v1955
  %v1963 = vmul.f32 %v1962, %v1961
  %v1964 = vmul.f32 %v1963, %v552
  %v1965 = vadd.f32 %v1964, %v557
  %v1966 = vtanh.pop %v1965
  %v1967 = vsub.f32 %v1966, %v1793
  %v1968 = vmul.f32 %v1886, %v1967
  %v1969 = vadd.f32 %v1793, %v1968
  %s1970 = scalar_lea.vmem %s7, 64
  %1971 = vst.msk [vmem:[%s1970] sm:$0xff] %vm106, %v1969
  %v1972 = vpack.c.bf16 %v1969, %v1969
  %s1973 = scalar_lea.vmem [#allocation2], 72
  %v1974 = vld [vmem:[%s1973] sm:$0xff]
  %v1976 = vsel %vm106, %v1972, 0
  %1978 = vmatprep.subr.bf16.mxu0 0
  %1979 = vmatpush1.bf16.msra.mxu0 %v344
  %1980 = vmatprep.subr.bf16.mxu0 0
  %1981 = vmatpush1.bf16.msra.mxu0 %v345
  %1982 = vmatprep.subr.bf16.mxu0 0
  %1983 = vmatpush1.bf16.msra.mxu0 0
  %1984 = vmatprep.subr.bf16.mxu0 0
  %1985 = vmatpush1.bf16.msra.mxu0 0
  %1986 = vmatprep.subr.bf16.mxu0 0
  %1987 = vmatpush1.bf16.msra.mxu0 0
  %1988 = vmatprep.subr.bf16.mxu0 0
  %1989 = vmatpush1.bf16.msra.mxu0 0
  %1990 = vmatprep.subr.bf16.mxu0 0
  %1991 = vmatpush1.bf16.msra.mxu0 0
  %1992 = vmatprep.subr.bf16.mxu0 0
  %1993 = vmatpush1.bf16.msra.mxu0 0
  %1994 = vmatprep.subr.bf16.mxu0 0
  %1995 = vmatpush1.bf16.msra.mxu0 0
  %1996 = vmatprep.subr.bf16.mxu0 0
  %1997 = vmatpush1.bf16.msra.mxu0 0
  %1998 = vmatprep.subr.bf16.mxu0 0
  %1999 = vmatpush1.bf16.msra.mxu0 0
  %2000 = vmatprep.subr.bf16.mxu0 0
  %2001 = vmatpush1.bf16.msra.mxu0 0
  %2002 = vmatprep.subr.bf16.mxu0 0
  %2003 = vmatpush1.bf16.msra.mxu0 0
  %2004 = vmatprep.subr.bf16.mxu0 0
  %2005 = vmatpush1.bf16.msra.mxu0 0
  %2006 = vmatprep.subr.bf16.mxu0 0
  %2007 = vmatpush1.bf16.msra.mxu0 0
  %2008 = vmatprep.subr.bf16.mxu0 0
  %2009 = vmatpush1.bf16.msra.mxu0 0
  %2010 = vmatprep.mubr.bf16.mxu0 0
  %2011 = vmatmul.mubr.bf16.gmra.mrb[0].mxu0 %v1976
  %v2012 = vpop.f32.mrb[0].mxu0
  %v2013 = vadd.f32 %v1974, %v2012
  %v2014 = vpop.f32.mrb[0].mxu0
  %v2015 = vpop.f32.mrb[0].mxu0
  %v2016 = vpop.f32.mrb[0].mxu0
  %2017 = vdwg.mxu0
  %v2018 = vmul.f32 %v2013, %v2013
  %2020 = vrot.lane.b32.xlu0 %v2013, 96
  %v2021 = vpop.permute.xlu0 %2020
  %2024 = vrot.lane.b32.xlu0 %v2018, 96
  %v2025 = vpop.permute.xlu0 %2024
  %v2027 = vsel %vm106, %v2013, 0.0
  %2028 = vadd.xlane.f32.xlu0 %v2027
  %v2029 = vpop.xlane.xlu0 %2028
  %v2030 = vsel %vm106, %v2021, 0.0
  %2031 = vadd.xlane.f32.xlu0 %v2030
  %v2032 = vpop.xlane.xlu0 %2031
  %v2033 = vsel %vm106, %v2018, 0.0
  %2034 = vadd.xlane.f32.xlu0 %v2033
  %v2035 = vpop.xlane.xlu0 %2034
  %v2036 = vsel %vm106, %v2025, 0.0
  %2037 = vadd.xlane.f32.xlu0 %v2036
  %v2038 = vpop.xlane.xlu0 %2037
  %v2039 = vmul.f32 %v2029, %v412
  %v2040 = vmul.f32 %v2032, %v412
  %v2041 = vmul.f32 %v2035, %v412
  %v2042 = vmul.f32 %v2038, %v412
  %v2043 = vmul.f32 %v2039, %v2039
  %v2044 = vsub.f32 %v2041, %v2043
  %v2045 = vmax.f32 %v2044, 0.0
  %v2046 = vadd.f32 %v2045, 1e-05
  %v2047 = vrsqrt.pop %v2046
  %v2048 = vmul.f32 %v2040, %v2040
  %v2049 = vsub.f32 %v2042, %v2048
  %v2050 = vmax.f32 %v2049, 0.0
  %v2051 = vadd.f32 %v2050, 1e-05
  %v2052 = vrsqrt.pop %v2051
  %v2053 = vsub.f32 %v2013, %v2039
  %v2054 = vmul.f32 %v2053, %v2047
  %v2055 = vmul.f32 %v2054, %v432
  %v2056 = vadd.f32 %v2055, %v437
  %v2057 = vxor.u32 %v2056, 2147483648
  %v2058 = vmul.f32 %v2057, 1.442695
  %v2059 = vpow.pop %v2058
  %v2060 = vadd.f32 %v2059, 1.0
  %v2061 = vrcp.pop %v2060
  %v2062 = vmul.f32 1.0, %v2061
  %v2063 = vsub.f32 %v2013, %v2040
  %v2064 = vmul.f32 %v2063, %v2052
  %v2065 = vmul.f32 %v2064, %v453
  %v2066 = vadd.f32 %v2065, %v462
  %v2067 = vxor.u32 %v2066, 2147483648
  %v2068 = vmul.f32 %v2067, 1.442695
  %v2069 = vpow.pop %v2068
  %v2070 = vadd.f32 %v2069, 1.0
  %v2071 = vrcp.pop %v2070
  %v2072 = vmul.f32 1.0, %v2071
  %2074 = vrot.lane.b32.xlu0 %v2072, 96
  %v2075 = vpop.permute.xlu0 %2074
  %v2077 = vmul.f32 %v1969, %v2075
  %v2078 = vpack.c.bf16 %v2077, %v2077
  %s2079 = scalar_lea.vmem [#allocation3], 72
  %v2080 = vld [vmem:[%s2079] sm:$0xff]
  %v2082 = vsel %vm106, %v2078, 0
  %2084 = vmatprep.subr.bf16.mxu0 0
  %2085 = vmatpush1.bf16.msra.mxu0 %v486
  %2086 = vmatprep.subr.bf16.mxu0 0
  %2087 = vmatpush1.bf16.msra.mxu0 %v487
  %2088 = vmatprep.subr.bf16.mxu0 0
  %2089 = vmatpush1.bf16.msra.mxu0 0
  %2090 = vmatprep.subr.bf16.mxu0 0
  %2091 = vmatpush1.bf16.msra.mxu0 0
  %2092 = vmatprep.subr.bf16.mxu0 0
  %2093 = vmatpush1.bf16.msra.mxu0 0
  %2094 = vmatprep.subr.bf16.mxu0 0
  %2095 = vmatpush1.bf16.msra.mxu0 0
  %2096 = vmatprep.subr.bf16.mxu0 0
  %2097 = vmatpush1.bf16.msra.mxu0 0
  %2098 = vmatprep.subr.bf16.mxu0 0
  %2099 = vmatpush1.bf16.msra.mxu0 0
  %2100 = vmatprep.subr.bf16.mxu0 0
  %2101 = vmatpush1.bf16.msra.mxu0 0
  %2102 = vmatprep.subr.bf16.mxu0 0
  %2103 = vmatpush1.bf16.msra.mxu0 0
  %2104 = vmatprep.subr.bf16.mxu0 0
  %2105 = vmatpush1.bf16.msra.mxu0 0
  %2106 = vmatprep.subr.bf16.mxu0 0
  %2107 = vmatpush1.bf16.msra.mxu0 0
  %2108 = vmatprep.subr.bf16.mxu0 0
  %2109 = vmatpush1.bf16.msra.mxu0 0
  %2110 = vmatprep.subr.bf16.mxu0 0
  %2111 = vmatpush1.bf16.msra.mxu0 0
  %2112 = vmatprep.subr.bf16.mxu0 0
  %2113 = vmatpush1.bf16.msra.mxu0 0
  %2114 = vmatprep.subr.bf16.mxu0 0
  %2115 = vmatpush1.bf16.msra.mxu0 0
  %2116 = vmatprep.mubr.bf16.mxu0 0
  %2117 = vmatmul.mubr.bf16.gmra.mrb[0].mxu0 %v2082
  %v2118 = vpop.f32.mrb[0].mxu0
  %v2119 = vadd.f32 %v2080, %v2118
  %v2120 = vpop.f32.mrb[0].mxu0
  %v2121 = vpop.f32.mrb[0].mxu0
  %v2122 = vpop.f32.mrb[0].mxu0
  %2123 = vdwg.mxu0
  %v2124 = vmul.f32 %v2119, %v2119
  %v2125 = vsel %vm106, %v2119, 0.0
  %2126 = vadd.xlane.f32.xlu0 %v2125
  %v2127 = vpop.xlane.xlu0 %2126
  %v2128 = vsel %vm106, %v2124, 0.0
  %2129 = vadd.xlane.f32.xlu0 %v2128
  %v2130 = vpop.xlane.xlu0 %2129
  %v2131 = vmul.f32 %v2127, %v412
  %v2132 = vmul.f32 %v2130, %v412
  %v2133 = vmul.f32 %v2131, %v2131
  %v2134 = vsub.f32 %v2132, %v2133
  %v2135 = vmax.f32 %v2134, 0.0
  %v2136 = vadd.f32 %v2135, 1e-05
  %v2137 = vrsqrt.pop %v2136
  %v2138 = vsub.f32 %v2119, %v2131
  %v2139 = vmul.f32 %v2138, %v2137
  %v2140 = vmul.f32 %v2139, %v552
  %v2141 = vadd.f32 %v2140, %v557
  %v2142 = vtanh.pop %v2141
  %v2143 = vsub.f32 %v2142, %v1969
  %v2144 = vmul.f32 %v2062, %v2143
  %v2145 = vadd.f32 %v1969, %v2144
  %s2146 = scalar_lea.vmem %s7, 72
  %2147 = vst.msk [vmem:[%s2146] sm:$0xff] %vm106, %v2145
  %v2148 = vpack.c.bf16 %v2145, %v2145
  %s2149 = scalar_lea.vmem [#allocation2], 80
  %v2150 = vld [vmem:[%s2149] sm:$0xff]
  %v2152 = vsel %vm106, %v2148, 0
  %2154 = vmatprep.subr.bf16.mxu0 0
  %2155 = vmatpush1.bf16.msra.mxu0 %v344
  %2156 = vmatprep.subr.bf16.mxu0 0
  %2157 = vmatpush1.bf16.msra.mxu0 %v345
  %2158 = vmatprep.subr.bf16.mxu0 0
  %2159 = vmatpush1.bf16.msra.mxu0 0
  %2160 = vmatprep.subr.bf16.mxu0 0
  %2161 = vmatpush1.bf16.msra.mxu0 0
  %2162 = vmatprep.subr.bf16.mxu0 0
  %2163 = vmatpush1.bf16.msra.mxu0 0
  %2164 = vmatprep.subr.bf16.mxu0 0
  %2165 = vmatpush1.bf16.msra.mxu0 0
  %2166 = vmatprep.subr.bf16.mxu0 0
  %2167 = vmatpush1.bf16.msra.mxu0 0
  %2168 = vmatprep.subr.bf16.mxu0 0
  %2169 = vmatpush1.bf16.msra.mxu0 0
  %2170 = vmatprep.subr.bf16.mxu0 0
  %2171 = vmatpush1.bf16.msra.mxu0 0
  %2172 = vmatprep.subr.bf16.mxu0 0
  %2173 = vmatpush1.bf16.msra.mxu0 0
  %2174 = vmatprep.subr.bf16.mxu0 0
  %2175 = vmatpush1.bf16.msra.mxu0 0
  %2176 = vmatprep.subr.bf16.mxu0 0
  %2177 = vmatpush1.bf16.msra.mxu0 0
  %2178 = vmatprep.subr.bf16.mxu0 0
  %2179 = vmatpush1.bf16.msra.mxu0 0
  %2180 = vmatprep.subr.bf16.mxu0 0
  %2181 = vmatpush1.bf16.msra.mxu0 0
  %2182 = vmatprep.subr.bf16.mxu0 0
  %2183 = vmatpush1.bf16.msra.mxu0 0
  %2184 = vmatprep.subr.bf16.mxu0 0
  %2185 = vmatpush1.bf16.msra.mxu0 0
  %2186 = vmatprep.mubr.bf16.mxu0 0
  %2187 = vmatmul.mubr.bf16.gmra.mrb[0].mxu0 %v2152
  %v2188 = vpop.f32.mrb[0].mxu0
  %v2189 = vadd.f32 %v2150, %v2188
  %v2190 = vpop.f32.mrb[0].mxu0
  %v2191 = vpop.f32.mrb[0].mxu0
  %v2192 = vpop.f32.mrb[0].mxu0
  %2193 = vdwg.mxu0
  %v2194 = vmul.f32 %v2189, %v2189
  %2196 = vrot.lane.b32.xlu0 %v2189, 96
  %v2197 = vpop.permute.xlu0 %2196
  %2200 = vrot.lane.b32.xlu0 %v2194, 96
  %v2201 = vpop.permute.xlu0 %2200
  %v2203 = vsel %vm106, %v2189, 0.0
  %2204 = vadd.xlane.f32.xlu0 %v2203
  %v2205 = vpop.xlane.xlu0 %2204
  %v2206 = vsel %vm106, %v2197, 0.0
  %2207 = vadd.xlane.f32.xlu0 %v2206
  %v2208 = vpop.xlane.xlu0 %2207
  %v2209 = vsel %vm106, %v2194, 0.0
  %2210 = vadd.xlane.f32.xlu0 %v2209
  %v2211 = vpop.xlane.xlu0 %2210
  %v2212 = vsel %vm106, %v2201, 0.0
  %2213 = vadd.xlane.f32.xlu0 %v2212
  %v2214 = vpop.xlane.xlu0 %2213
  %v2215 = vmul.f32 %v2205, %v412
  %v2216 = vmul.f32 %v2208, %v412
  %v2217 = vmul.f32 %v2211, %v412
  %v2218 = vmul.f32 %v2214, %v412
  %v2219 = vmul.f32 %v2215, %v2215
  %v2220 = vsub.f32 %v2217, %v2219
  %v2221 = vmax.f32 %v2220, 0.0
  %v2222 = vadd.f32 %v2221, 1e-05
  %v2223 = vrsqrt.pop %v2222
  %v2224 = vmul.f32 %v2216, %v2216
  %v2225 = vsub.f32 %v2218, %v2224
  %v2226 = vmax.f32 %v2225, 0.0
  %v2227 = vadd.f32 %v2226, 1e-05
  %v2228 = vrsqrt.pop %v2227
  %v2229 = vsub.f32 %v2189, %v2215
  %v2230 = vmul.f32 %v2229, %v2223
  %v2231 = vmul.f32 %v2230, %v432
  %v2232 = vadd.f32 %v2231, %v437
  %v2233 = vxor.u32 %v2232, 2147483648
  %v2234 = vmul.f32 %v2233, 1.442695
  %v2235 = vpow.pop %v2234
  %v2236 = vadd.f32 %v2235, 1.0
  %v2237 = vrcp.pop %v2236
  %v2238 = vmul.f32 1.0, %v2237
  %v2239 = vsub.f32 %v2189, %v2216
  %v2240 = vmul.f32 %v2239, %v2228
  %v2241 = vmul.f32 %v2240, %v453
  %v2242 = vadd.f32 %v2241, %v462
  %v2243 = vxor.u32 %v2242, 2147483648
  %v2244 = vmul.f32 %v2243, 1.442695
  %v2245 = vpow.pop %v2244
  %v2246 = vadd.f32 %v2245, 1.0
  %v2247 = vrcp.pop %v2246
  %v2248 = vmul.f32 1.0, %v2247
  %2250 = vrot.lane.b32.xlu0 %v2248, 96
  %v2251 = vpop.permute.xlu0 %2250
  %v2253 = vmul.f32 %v2145, %v2251
  %v2254 = vpack.c.bf16 %v2253, %v2253
  %s2255 = scalar_lea.vmem [#allocation3], 80
  %v2256 = vld [vmem:[%s2255] sm:$0xff]
  %v2258 = vsel %vm106, %v2254, 0
  %2260 = vmatprep.subr.bf16.mxu0 0
  %2261 = vmatpush1.bf16.msra.mxu0 %v486
  %2262 = vmatprep.subr.bf16.mxu0 0
  %2263 = vmatpush1.bf16.msra.mxu0 %v487
  %2264 = vmatprep.subr.bf16.mxu0 0
  %2265 = vmatpush1.bf16.msra.mxu0 0
  %2266 = vmatprep.subr.bf16.mxu0 0
  %2267 = vmatpush1.bf16.msra.mxu0 0
  %2268 = vmatprep.subr.bf16.mxu0 0
  %2269 = vmatpush1.bf16.msra.mxu0 0
  %2270 = vmatprep.subr.bf16.mxu0 0
  %2271 = vmatpush1.bf16.msra.mxu0 0
  %2272 = vmatprep.subr.bf16.mxu0 0
  %2273 = vmatpush1.bf16.msra.mxu0 0
  %2274 = vmatprep.subr.bf16.mxu0 0
  %2275 = vmatpush1.bf16.msra.mxu0 0
  %2276 = vmatprep.subr.bf16.mxu0 0
  %2277 = vmatpush1.bf16.msra.mxu0 0
  %2278 = vmatprep.subr.bf16.mxu0 0
  %2279 = vmatpush1.bf16.msra.mxu0 0
  %2280 = vmatprep.subr.bf16.mxu0 0
  %2281 = vmatpush1.bf16.msra.mxu0 0
  %2282 = vmatprep.subr.bf16.mxu0 0
  %2283 = vmatpush1.bf16.msra.mxu0 0
  %2284 = vmatprep.subr.bf16.mxu0 0
  %2285 = vmatpush1.bf16.msra.mxu0 0
  %2286 = vmatprep.subr.bf16.mxu0 0
  %2287 = vmatpush1.bf16.msra.mxu0 0
  %2288 = vmatprep.subr.bf16.mxu0 0
  %2289 = vmatpush1.bf16.msra.mxu0 0
  %2290 = vmatprep.subr.bf16.mxu0 0
  %2291 = vmatpush1.bf16.msra.mxu0 0
  %2292 = vmatprep.mubr.bf16.mxu0 0
  %2293 = vmatmul.mubr.bf16.gmra.mrb[0].mxu0 %v2258
  %v2294 = vpop.f32.mrb[0].mxu0
  %v2295 = vadd.f32 %v2256, %v2294
  %v2296 = vpop.f32.mrb[0].mxu0
  %v2297 = vpop.f32.mrb[0].mxu0
  %v2298 = vpop.f32.mrb[0].mxu0
  %2299 = vdwg.mxu0
  %v2300 = vmul.f32 %v2295, %v2295
  %v2301 = vsel %vm106, %v2295, 0.0
  %2302 = vadd.xlane.f32.xlu0 %v2301
  %v2303 = vpop.xlane.xlu0 %2302
  %v2304 = vsel %vm106, %v2300, 0.0
  %2305 = vadd.xlane.f32.xlu0 %v2304
  %v2306 = vpop.xlane.xlu0 %2305
  %v2307 = vmul.f32 %v2303, %v412
  %v2308 = vmul.f32 %v2306, %v412
  %v2309 = vmul.f32 %v2307, %v2307
  %v2310 = vsub.f32 %v2308, %v2309
  %v2311 = vmax.f32 %v2310, 0.0
  %v2312 = vadd.f32 %v2311, 1e-05
  %v2313 = vrsqrt.pop %v2312
  %v2314 = vsub.f32 %v2295, %v2307
  %v2315 = vmul.f32 %v2314, %v2313
  %v2316 = vmul.f32 %v2315, %v552
  %v2317 = vadd.f32 %v2316, %v557
  %v2318 = vtanh.pop %v2317
  %v2319 = vsub.f32 %v2318, %v2145
  %v2320 = vmul.f32 %v2238, %v2319
  %v2321 = vadd.f32 %v2145, %v2320
  %s2322 = scalar_lea.vmem %s7, 80
  %2323 = vst.msk [vmem:[%s2322] sm:$0xff] %vm106, %v2321
  %v2324 = vpack.c.bf16 %v2321, %v2321
  %s2325 = scalar_lea.vmem [#allocation2], 88
  %v2326 = vld [vmem:[%s2325] sm:$0xff]
  %v2328 = vsel %vm106, %v2324, 0
  %2330 = vmatprep.subr.bf16.mxu0 0
  %2331 = vmatpush1.bf16.msra.mxu0 %v344
  %2332 = vmatprep.subr.bf16.mxu0 0
  %2333 = vmatpush1.bf16.msra.mxu0 %v345
  %2334 = vmatprep.subr.bf16.mxu0 0
  %2335 = vmatpush1.bf16.msra.mxu0 0
  %2336 = vmatprep.subr.bf16.mxu0 0
  %2337 = vmatpush1.bf16.msra.mxu0 0
  %2338 = vmatprep.subr.bf16.mxu0 0
  %2339 = vmatpush1.bf16.msra.mxu0 0
  %2340 = vmatprep.subr.bf16.mxu0 0
  %2341 = vmatpush1.bf16.msra.mxu0 0
  %2342 = vmatprep.subr.bf16.mxu0 0
  %2343 = vmatpush1.bf16.msra.mxu0 0
  %2344 = vmatprep.subr.bf16.mxu0 0
  %2345 = vmatpush1.bf16.msra.mxu0 0
  %2346 = vmatprep.subr.bf16.mxu0 0
  %2347 = vmatpush1.bf16.msra.mxu0 0
  %2348 = vmatprep.subr.bf16.mxu0 0
  %2349 = vmatpush1.bf16.msra.mxu0 0
  %2350 = vmatprep.subr.bf16.mxu0 0
  %2351 = vmatpush1.bf16.msra.mxu0 0
  %2352 = vmatprep.subr.bf16.mxu0 0
  %2353 = vmatpush1.bf16.msra.mxu0 0
  %2354 = vmatprep.subr.bf16.mxu0 0
  %2355 = vmatpush1.bf16.msra.mxu0 0
  %2356 = vmatprep.subr.bf16.mxu0 0
  %2357 = vmatpush1.bf16.msra.mxu0 0
  %2358 = vmatprep.subr.bf16.mxu0 0
  %2359 = vmatpush1.bf16.msra.mxu0 0
  %2360 = vmatprep.subr.bf16.mxu0 0
  %2361 = vmatpush1.bf16.msra.mxu0 0
  %2362 = vmatprep.mubr.bf16.mxu0 0
  %2363 = vmatmul.mubr.bf16.gmra.mrb[0].mxu0 %v2328
  %v2364 = vpop.f32.mrb[0].mxu0
  %v2365 = vadd.f32 %v2326, %v2364
  %v2366 = vpop.f32.mrb[0].mxu0
  %v2367 = vpop.f32.mrb[0].mxu0
  %v2368 = vpop.f32.mrb[0].mxu0
  %2369 = vdwg.mxu0
  %v2370 = vmul.f32 %v2365, %v2365
  %2372 = vrot.lane.b32.xlu0 %v2365, 96
  %v2373 = vpop.permute.xlu0 %2372
  %2376 = vrot.lane.b32.xlu0 %v2370, 96
  %v2377 = vpop.permute.xlu0 %2376
  %v2379 = vsel %vm106, %v2365, 0.0
  %2380 = vadd.xlane.f32.xlu0 %v2379
  %v2381 = vpop.xlane.xlu0 %2380
  %v2382 = vsel %vm106, %v2373, 0.0
  %2383 = vadd.xlane.f32.xlu0 %v2382
  %v2384 = vpop.xlane.xlu0 %2383
  %v2385 = vsel %vm106, %v2370, 0.0
  %2386 = vadd.xlane.f32.xlu0 %v2385
  %v2387 = vpop.xlane.xlu0 %2386
  %v2388 = vsel %vm106, %v2377, 0.0
  %2389 = vadd.xlane.f32.xlu0 %v2388
  %v2390 = vpop.xlane.xlu0 %2389
  %v2391 = vmul.f32 %v2381, %v412
  %v2392 = vmul.f32 %v2384, %v412
  %v2393 = vmul.f32 %v2387, %v412
  %v2394 = vmul.f32 %v2390, %v412
  %v2395 = vmul.f32 %v2391, %v2391
  %v2396 = vsub.f32 %v2393, %v2395
  %v2397 = vmax.f32 %v2396, 0.0
  %v2398 = vadd.f32 %v2397, 1e-05
  %v2399 = vrsqrt.pop %v2398
  %v2400 = vmul.f32 %v2392, %v2392
  %v2401 = vsub.f32 %v2394, %v2400
  %v2402 = vmax.f32 %v2401, 0.0
  %v2403 = vadd.f32 %v2402, 1e-05
  %v2404 = vrsqrt.pop %v2403
  %v2405 = vsub.f32 %v2365, %v2391
  %v2406 = vmul.f32 %v2405, %v2399
  %v2407 = vmul.f32 %v2406, %v432
  %v2408 = vadd.f32 %v2407, %v437
  %v2409 = vxor.u32 %v2408, 2147483648
  %v2410 = vmul.f32 %v2409, 1.442695
  %v2411 = vpow.pop %v2410
  %v2412 = vadd.f32 %v2411, 1.0
  %v2413 = vrcp.pop %v2412
  %v2414 = vmul.f32 1.0, %v2413
  %v2415 = vsub.f32 %v2365, %v2392
  %v2416 = vmul.f32 %v2415, %v2404
  %v2417 = vmul.f32 %v2416, %v453
  %v2418 = vadd.f32 %v2417, %v462
  %v2419 = vxor.u32 %v2418, 2147483648
  %v2420 = vmul.f32 %v2419, 1.442695
  %v2421 = vpow.pop %v2420
  %v2422 = vadd.f32 %v2421, 1.0
  %v2423 = vrcp.pop %v2422
  %v2424 = vmul.f32 1.0, %v2423
  %2426 = vrot.lane.b32.xlu0 %v2424, 96
  %v2427 = vpop.permute.xlu0 %2426
  %v2429 = vmul.f32 %v2321, %v2427
  %v2430 = vpack.c.bf16 %v2429, %v2429
  %s2431 = scalar_lea.vmem [#allocation3], 88
  %v2432 = vld [vmem:[%s2431] sm:$0xff]
  %v2434 = vsel %vm106, %v2430, 0
  %2436 = vmatprep.subr.bf16.mxu0 0
  %2437 = vmatpush1.bf16.msra.mxu0 %v486
  %2438 = vmatprep.subr.bf16.mxu0 0
  %2439 = vmatpush1.bf16.msra.mxu0 %v487
  %2440 = vmatprep.subr.bf16.mxu0 0
  %2441 = vmatpush1.bf16.msra.mxu0 0
  %2442 = vmatprep.subr.bf16.mxu0 0
  %2443 = vmatpush1.bf16.msra.mxu0 0
  %2444 = vmatprep.subr.bf16.mxu0 0
  %2445 = vmatpush1.bf16.msra.mxu0 0
  %2446 = vmatprep.subr.bf16.mxu0 0
  %2447 = vmatpush1.bf16.msra.mxu0 0
  %2448 = vmatprep.subr.bf16.mxu0 0
  %2449 = vmatpush1.bf16.msra.mxu0 0
  %2450 = vmatprep.subr.bf16.mxu0 0
  %2451 = vmatpush1.bf16.msra.mxu0 0
  %2452 = vmatprep.subr.bf16.mxu0 0
  %2453 = vmatpush1.bf16.msra.mxu0 0
  %2454 = vmatprep.subr.bf16.mxu0 0
  %2455 = vmatpush1.bf16.msra.mxu0 0
  %2456 = vmatprep.subr.bf16.mxu0 0
  %2457 = vmatpush1.bf16.msra.mxu0 0
  %2458 = vmatprep.subr.bf16.mxu0 0
  %2459 = vmatpush1.bf16.msra.mxu0 0
  %2460 = vmatprep.subr.bf16.mxu0 0
  %2461 = vmatpush1.bf16.msra.mxu0 0
  %2462 = vmatprep.subr.bf16.mxu0 0
  %2463 = vmatpush1.bf16.msra.mxu0 0
  %2464 = vmatprep.subr.bf16.mxu0 0
  %2465 = vmatpush1.bf16.msra.mxu0 0
  %2466 = vmatprep.subr.bf16.mxu0 0
  %2467 = vmatpush1.bf16.msra.mxu0 0
  %2468 = vmatprep.mubr.bf16.mxu0 0
  %2469 = vmatmul.mubr.bf16.gmra.mrb[0].mxu0 %v2434
  %v2470 = vpop.f32.mrb[0].mxu0
  %v2471 = vadd.f32 %v2432, %v2470
  %v2472 = vpop.f32.mrb[0].mxu0
  %v2473 = vpop.f32.mrb[0].mxu0
  %v2474 = vpop.f32.mrb[0].mxu0
  %2475 = vdwg.mxu0
  %v2476 = vmul.f32 %v2471, %v2471
  %v2477 = vsel %vm106, %v2471, 0.0
  %2478 = vadd.xlane.f32.xlu0 %v2477
  %v2479 = vpop.xlane.xlu0 %2478
  %v2480 = vsel %vm106, %v2476, 0.0
  %2481 = vadd.xlane.f32.xlu0 %v2480
  %v2482 = vpop.xlane.xlu0 %2481
  %v2483 = vmul.f32 %v2479, %v412
  %v2484 = vmul.f32 %v2482, %v412
  %v2485 = vmul.f32 %v2483, %v2483
  %v2486 = vsub.f32 %v2484, %v2485
  %v2487 = vmax.f32 %v2486, 0.0
  %v2488 = vadd.f32 %v2487, 1e-05
  %v2489 = vrsqrt.pop %v2488
  %v2490 = vsub.f32 %v2471, %v2483
  %v2491 = vmul.f32 %v2490, %v2489
  %v2492 = vmul.f32 %v2491, %v552
  %v2493 = vadd.f32 %v2492, %v557
  %v2494 = vtanh.pop %v2493
  %v2495 = vsub.f32 %v2494, %v2321
  %v2496 = vmul.f32 %v2414, %v2495
  %v2497 = vadd.f32 %v2321, %v2496
  %s2498 = scalar_lea.vmem %s7, 88
  %2499 = vst.msk [vmem:[%s2498] sm:$0xff] %vm106, %v2497
  %v2500 = vpack.c.bf16 %v2497, %v2497
  %s2501 = scalar_lea.vmem [#allocation2], 96
  %v2502 = vld [vmem:[%s2501] sm:$0xff]
  %v2504 = vsel %vm106, %v2500, 0
  %2506 = vmatprep.subr.bf16.mxu0 0
  %2507 = vmatpush1.bf16.msra.mxu0 %v344
  %2508 = vmatprep.subr.bf16.mxu0 0
  %2509 = vmatpush1.bf16.msra.mxu0 %v345
  %2510 = vmatprep.subr.bf16.mxu0 0
  %2511 = vmatpush1.bf16.msra.mxu0 0
  %2512 = vmatprep.subr.bf16.mxu0 0
  %2513 = vmatpush1.bf16.msra.mxu0 0
  %2514 = vmatprep.subr.bf16.mxu0 0
  %2515 = vmatpush1.bf16.msra.mxu0 0
  %2516 = vmatprep.subr.bf16.mxu0 0
  %2517 = vmatpush1.bf16.msra.mxu0 0
  %2518 = vmatprep.subr.bf16.mxu0 0
  %2519 = vmatpush1.bf16.msra.mxu0 0
  %2520 = vmatprep.subr.bf16.mxu0 0
  %2521 = vmatpush1.bf16.msra.mxu0 0
  %2522 = vmatprep.subr.bf16.mxu0 0
  %2523 = vmatpush1.bf16.msra.mxu0 0
  %2524 = vmatprep.subr.bf16.mxu0 0
  %2525 = vmatpush1.bf16.msra.mxu0 0
  %2526 = vmatprep.subr.bf16.mxu0 0
  %2527 = vmatpush1.bf16.msra.mxu0 0
  %2528 = vmatprep.subr.bf16.mxu0 0
  %2529 = vmatpush1.bf16.msra.mxu0 0
  %2530 = vmatprep.subr.bf16.mxu0 0
  %2531 = vmatpush1.bf16.msra.mxu0 0
  %2532 = vmatprep.subr.bf16.mxu0 0
  %2533 = vmatpush1.bf16.msra.mxu0 0
  %2534 = vmatprep.subr.bf16.mxu0 0
  %2535 = vmatpush1.bf16.msra.mxu0 0
  %2536 = vmatprep.subr.bf16.mxu0 0
  %2537 = vmatpush1.bf16.msra.mxu0 0
  %2538 = vmatprep.mubr.bf16.mxu0 0
  %2539 = vmatmul.mubr.bf16.gmra.mrb[0].mxu0 %v2504
  %v2540 = vpop.f32.mrb[0].mxu0
  %v2541 = vadd.f32 %v2502, %v2540
  %v2542 = vpop.f32.mrb[0].mxu0
  %v2543 = vpop.f32.mrb[0].mxu0
  %v2544 = vpop.f32.mrb[0].mxu0
  %2545 = vdwg.mxu0
  %v2546 = vmul.f32 %v2541, %v2541
  %2548 = vrot.lane.b32.xlu0 %v2541, 96
  %v2549 = vpop.permute.xlu0 %2548
  %2552 = vrot.lane.b32.xlu0 %v2546, 96
  %v2553 = vpop.permute.xlu0 %2552
  %v2555 = vsel %vm106, %v2541, 0.0
  %2556 = vadd.xlane.f32.xlu0 %v2555
  %v2557 = vpop.xlane.xlu0 %2556
  %v2558 = vsel %vm106, %v2549, 0.0
  %2559 = vadd.xlane.f32.xlu0 %v2558
  %v2560 = vpop.xlane.xlu0 %2559
  %v2561 = vsel %vm106, %v2546, 0.0
  %2562 = vadd.xlane.f32.xlu0 %v2561
  %v2563 = vpop.xlane.xlu0 %2562
  %v2564 = vsel %vm106, %v2553, 0.0
  %2565 = vadd.xlane.f32.xlu0 %v2564
  %v2566 = vpop.xlane.xlu0 %2565
  %v2567 = vmul.f32 %v2557, %v412
  %v2568 = vmul.f32 %v2560, %v412
  %v2569 = vmul.f32 %v2563, %v412
  %v2570 = vmul.f32 %v2566, %v412
  %v2571 = vmul.f32 %v2567, %v2567
  %v2572 = vsub.f32 %v2569, %v2571
  %v2573 = vmax.f32 %v2572, 0.0
  %v2574 = vadd.f32 %v2573, 1e-05
  %v2575 = vrsqrt.pop %v2574
  %v2576 = vmul.f32 %v2568, %v2568
  %v2577 = vsub.f32 %v2570, %v2576
  %v2578 = vmax.f32 %v2577, 0.0
  %v2579 = vadd.f32 %v2578, 1e-05
  %v2580 = vrsqrt.pop %v2579
  %v2581 = vsub.f32 %v2541, %v2567
  %v2582 = vmul.f32 %v2581, %v2575
  %v2583 = vmul.f32 %v2582, %v432
  %v2584 = vadd.f32 %v2583, %v437
  %v2585 = vxor.u32 %v2584, 2147483648
  %v2586 = vmul.f32 %v2585, 1.442695
  %v2587 = vpow.pop %v2586
  %v2588 = vadd.f32 %v2587, 1.0
  %v2589 = vrcp.pop %v2588
  %v2590 = vmul.f32 1.0, %v2589
  %v2591 = vsub.f32 %v2541, %v2568
  %v2592 = vmul.f32 %v2591, %v2580
  %v2593 = vmul.f32 %v2592, %v453
  %v2594 = vadd.f32 %v2593, %v462
  %v2595 = vxor.u32 %v2594, 2147483648
  %v2596 = vmul.f32 %v2595, 1.442695
  %v2597 = vpow.pop %v2596
  %v2598 = vadd.f32 %v2597, 1.0
  %v2599 = vrcp.pop %v2598
  %v2600 = vmul.f32 1.0, %v2599
  %2602 = vrot.lane.b32.xlu0 %v2600, 96
  %v2603 = vpop.permute.xlu0 %2602
  %v2605 = vmul.f32 %v2497, %v2603
  %v2606 = vpack.c.bf16 %v2605, %v2605
  %s2607 = scalar_lea.vmem [#allocation3], 96
  %v2608 = vld [vmem:[%s2607] sm:$0xff]
  %v2610 = vsel %vm106, %v2606, 0
  %2612 = vmatprep.subr.bf16.mxu0 0
  %2613 = vmatpush1.bf16.msra.mxu0 %v486
  %2614 = vmatprep.subr.bf16.mxu0 0
  %2615 = vmatpush1.bf16.msra.mxu0 %v487
  %2616 = vmatprep.subr.bf16.mxu0 0
  %2617 = vmatpush1.bf16.msra.mxu0 0
  %2618 = vmatprep.subr.bf16.mxu0 0
  %2619 = vmatpush1.bf16.msra.mxu0 0
  %2620 = vmatprep.subr.bf16.mxu0 0
  %2621 = vmatpush1.bf16.msra.mxu0 0
  %2622 = vmatprep.subr.bf16.mxu0 0
  %2623 = vmatpush1.bf16.msra.mxu0 0
  %2624 = vmatprep.subr.bf16.mxu0 0
  %2625 = vmatpush1.bf16.msra.mxu0 0
  %2626 = vmatprep.subr.bf16.mxu0 0
  %2627 = vmatpush1.bf16.msra.mxu0 0
  %2628 = vmatprep.subr.bf16.mxu0 0
  %2629 = vmatpush1.bf16.msra.mxu0 0
  %2630 = vmatprep.subr.bf16.mxu0 0
  %2631 = vmatpush1.bf16.msra.mxu0 0
  %2632 = vmatprep.subr.bf16.mxu0 0
  %2633 = vmatpush1.bf16.msra.mxu0 0
  %2634 = vmatprep.subr.bf16.mxu0 0
  %2635 = vmatpush1.bf16.msra.mxu0 0
  %2636 = vmatprep.subr.bf16.mxu0 0
  %2637 = vmatpush1.bf16.msra.mxu0 0
  %2638 = vmatprep.subr.bf16.mxu0 0
  %2639 = vmatpush1.bf16.msra.mxu0 0
  %2640 = vmatprep.subr.bf16.mxu0 0
  %2641 = vmatpush1.bf16.msra.mxu0 0
  %2642 = vmatprep.subr.bf16.mxu0 0
  %2643 = vmatpush1.bf16.msra.mxu0 0
  %2644 = vmatprep.mubr.bf16.mxu0 0
  %2645 = vmatmul.mubr.bf16.gmra.mrb[0].mxu0 %v2610
  %v2646 = vpop.f32.mrb[0].mxu0
  %v2647 = vadd.f32 %v2608, %v2646
  %v2648 = vpop.f32.mrb[0].mxu0
  %v2649 = vpop.f32.mrb[0].mxu0
  %v2650 = vpop.f32.mrb[0].mxu0
  %2651 = vdwg.mxu0
  %v2652 = vmul.f32 %v2647, %v2647
  %v2653 = vsel %vm106, %v2647, 0.0
  %2654 = vadd.xlane.f32.xlu0 %v2653
  %v2655 = vpop.xlane.xlu0 %2654
  %v2656 = vsel %vm106, %v2652, 0.0
  %2657 = vadd.xlane.f32.xlu0 %v2656
  %v2658 = vpop.xlane.xlu0 %2657
  %v2659 = vmul.f32 %v2655, %v412
  %v2660 = vmul.f32 %v2658, %v412
  %v2661 = vmul.f32 %v2659, %v2659
  %v2662 = vsub.f32 %v2660, %v2661
  %v2663 = vmax.f32 %v2662, 0.0
  %v2664 = vadd.f32 %v2663, 1e-05
  %v2665 = vrsqrt.pop %v2664
  %v2666 = vsub.f32 %v2647, %v2659
  %v2667 = vmul.f32 %v2666, %v2665
  %v2668 = vmul.f32 %v2667, %v552
  %v2669 = vadd.f32 %v2668, %v557
  %v2670 = vtanh.pop %v2669
  %v2671 = vsub.f32 %v2670, %v2497
  %v2672 = vmul.f32 %v2590, %v2671
  %v2673 = vadd.f32 %v2497, %v2672
  %s2674 = scalar_lea.vmem %s7, 96
  %2675 = vst.msk [vmem:[%s2674] sm:$0xff] %vm106, %v2673
  %v2676 = vpack.c.bf16 %v2673, %v2673
  %s2677 = scalar_lea.vmem [#allocation2], 104
  %v2678 = vld [vmem:[%s2677] sm:$0xff]
  %v2680 = vsel %vm106, %v2676, 0
  %2682 = vmatprep.subr.bf16.mxu0 0
  %2683 = vmatpush1.bf16.msra.mxu0 %v344
  %2684 = vmatprep.subr.bf16.mxu0 0
  %2685 = vmatpush1.bf16.msra.mxu0 %v345
  %2686 = vmatprep.subr.bf16.mxu0 0
  %2687 = vmatpush1.bf16.msra.mxu0 0
  %2688 = vmatprep.subr.bf16.mxu0 0
  %2689 = vmatpush1.bf16.msra.mxu0 0
  %2690 = vmatprep.subr.bf16.mxu0 0
  %2691 = vmatpush1.bf16.msra.mxu0 0
  %2692 = vmatprep.subr.bf16.mxu0 0
  %2693 = vmatpush1.bf16.msra.mxu0 0
  %2694 = vmatprep.subr.bf16.mxu0 0
  %2695 = vmatpush1.bf16.msra.mxu0 0
  %2696 = vmatprep.subr.bf16.mxu0 0
  %2697 = vmatpush1.bf16.msra.mxu0 0
  %2698 = vmatprep.subr.bf16.mxu0 0
  %2699 = vmatpush1.bf16.msra.mxu0 0
  %2700 = vmatprep.subr.bf16.mxu0 0
  %2701 = vmatpush1.bf16.msra.mxu0 0
  %2702 = vmatprep.subr.bf16.mxu0 0
  %2703 = vmatpush1.bf16.msra.mxu0 0
  %2704 = vmatprep.subr.bf16.mxu0 0
  %2705 = vmatpush1.bf16.msra.mxu0 0
  %2706 = vmatprep.subr.bf16.mxu0 0
  %2707 = vmatpush1.bf16.msra.mxu0 0
  %2708 = vmatprep.subr.bf16.mxu0 0
  %2709 = vmatpush1.bf16.msra.mxu0 0
  %2710 = vmatprep.subr.bf16.mxu0 0
  %2711 = vmatpush1.bf16.msra.mxu0 0
  %2712 = vmatprep.subr.bf16.mxu0 0
  %2713 = vmatpush1.bf16.msra.mxu0 0
  %2714 = vmatprep.mubr.bf16.mxu0 0
  %2715 = vmatmul.mubr.bf16.gmra.mrb[0].mxu0 %v2680
  %v2716 = vpop.f32.mrb[0].mxu0
  %v2717 = vadd.f32 %v2678, %v2716
  %v2718 = vpop.f32.mrb[0].mxu0
  %v2719 = vpop.f32.mrb[0].mxu0
  %v2720 = vpop.f32.mrb[0].mxu0
  %2721 = vdwg.mxu0
  %v2722 = vmul.f32 %v2717, %v2717
  %2724 = vrot.lane.b32.xlu0 %v2717, 96
  %v2725 = vpop.permute.xlu0 %2724
  %2728 = vrot.lane.b32.xlu0 %v2722, 96
  %v2729 = vpop.permute.xlu0 %2728
  %v2731 = vsel %vm106, %v2717, 0.0
  %2732 = vadd.xlane.f32.xlu0 %v2731
  %v2733 = vpop.xlane.xlu0 %2732
  %v2734 = vsel %vm106, %v2725, 0.0
  %2735 = vadd.xlane.f32.xlu0 %v2734
  %v2736 = vpop.xlane.xlu0 %2735
  %v2737 = vsel %vm106, %v2722, 0.0
  %2738 = vadd.xlane.f32.xlu0 %v2737
  %v2739 = vpop.xlane.xlu0 %2738
  %v2740 = vsel %vm106, %v2729, 0.0
  %2741 = vadd.xlane.f32.xlu0 %v2740
  %v2742 = vpop.xlane.xlu0 %2741
  %v2743 = vmul.f32 %v2733, %v412
  %v2744 = vmul.f32 %v2736, %v412
  %v2745 = vmul.f32 %v2739, %v412
  %v2746 = vmul.f32 %v2742, %v412
  %v2747 = vmul.f32 %v2743, %v2743
  %v2748 = vsub.f32 %v2745, %v2747
  %v2749 = vmax.f32 %v2748, 0.0
  %v2750 = vadd.f32 %v2749, 1e-05
  %v2751 = vrsqrt.pop %v2750
  %v2752 = vmul.f32 %v2744, %v2744
  %v2753 = vsub.f32 %v2746, %v2752
  %v2754 = vmax.f32 %v2753, 0.0
  %v2755 = vadd.f32 %v2754, 1e-05
  %v2756 = vrsqrt.pop %v2755
  %v2757 = vsub.f32 %v2717, %v2743
  %v2758 = vmul.f32 %v2757, %v2751
  %v2759 = vmul.f32 %v2758, %v432
  %v2760 = vadd.f32 %v2759, %v437
  %v2761 = vxor.u32 %v2760, 2147483648
  %v2762 = vmul.f32 %v2761, 1.442695
  %v2763 = vpow.pop %v2762
  %v2764 = vadd.f32 %v2763, 1.0
  %v2765 = vrcp.pop %v2764
  %v2766 = vmul.f32 1.0, %v2765
  %v2767 = vsub.f32 %v2717, %v2744
  %v2768 = vmul.f32 %v2767, %v2756
  %v2769 = vmul.f32 %v2768, %v453
  %v2770 = vadd.f32 %v2769, %v462
  %v2771 = vxor.u32 %v2770, 2147483648
  %v2772 = vmul.f32 %v2771, 1.442695
  %v2773 = vpow.pop %v2772
  %v2774 = vadd.f32 %v2773, 1.0
  %v2775 = vrcp.pop %v2774
  %v2776 = vmul.f32 1.0, %v2775
  %2778 = vrot.lane.b32.xlu0 %v2776, 96
  %v2779 = vpop.permute.xlu0 %2778
  %v2781 = vmul.f32 %v2673, %v2779
  %v2782 = vpack.c.bf16 %v2781, %v2781
  %s2783 = scalar_lea.vmem [#allocation3], 104
  %v2784 = vld [vmem:[%s2783] sm:$0xff]
  %v2786 = vsel %vm106, %v2782, 0
  %2788 = vmatprep.subr.bf16.mxu0 0
  %2789 = vmatpush1.bf16.msra.mxu0 %v486
  %2790 = vmatprep.subr.bf16.mxu0 0
  %2791 = vmatpush1.bf16.msra.mxu0 %v487
  %2792 = vmatprep.subr.bf16.mxu0 0
  %2793 = vmatpush1.bf16.msra.mxu0 0
  %2794 = vmatprep.subr.bf16.mxu0 0
  %2795 = vmatpush1.bf16.msra.mxu0 0
  %2796 = vmatprep.subr.bf16.mxu0 0
  %2797 = vmatpush1.bf16.msra.mxu0 0
  %2798 = vmatprep.subr.bf16.mxu0 0
  %2799 = vmatpush1.bf16.msra.mxu0 0
  %2800 = vmatprep.subr.bf16.mxu0 0
  %2801 = vmatpush1.bf16.msra.mxu0 0
  %2802 = vmatprep.subr.bf16.mxu0 0
  %2803 = vmatpush1.bf16.msra.mxu0 0
  %2804 = vmatprep.subr.bf16.mxu0 0
  %2805 = vmatpush1.bf16.msra.mxu0 0
  %2806 = vmatprep.subr.bf16.mxu0 0
  %2807 = vmatpush1.bf16.msra.mxu0 0
  %2808 = vmatprep.subr.bf16.mxu0 0
  %2809 = vmatpush1.bf16.msra.mxu0 0
  %2810 = vmatprep.subr.bf16.mxu0 0
  %2811 = vmatpush1.bf16.msra.mxu0 0
  %2812 = vmatprep.subr.bf16.mxu0 0
  %2813 = vmatpush1.bf16.msra.mxu0 0
  %2814 = vmatprep.subr.bf16.mxu0 0
  %2815 = vmatpush1.bf16.msra.mxu0 0
  %2816 = vmatprep.subr.bf16.mxu0 0
  %2817 = vmatpush1.bf16.msra.mxu0 0
  %2818 = vmatprep.subr.bf16.mxu0 0
  %2819 = vmatpush1.bf16.msra.mxu0 0
  %2820 = vmatprep.mubr.bf16.mxu0 0
  %2821 = vmatmul.mubr.bf16.gmra.mrb[0].mxu0 %v2786
  %v2822 = vpop.f32.mrb[0].mxu0
  %v2823 = vadd.f32 %v2784, %v2822
  %v2824 = vpop.f32.mrb[0].mxu0
  %v2825 = vpop.f32.mrb[0].mxu0
  %v2826 = vpop.f32.mrb[0].mxu0
  %2827 = vdwg.mxu0
  %v2828 = vmul.f32 %v2823, %v2823
  %v2829 = vsel %vm106, %v2823, 0.0
  %2830 = vadd.xlane.f32.xlu0 %v2829
  %v2831 = vpop.xlane.xlu0 %2830
  %v2832 = vsel %vm106, %v2828, 0.0
  %2833 = vadd.xlane.f32.xlu0 %v2832
  %v2834 = vpop.xlane.xlu0 %2833
  %v2835 = vmul.f32 %v2831, %v412
  %v2836 = vmul.f32 %v2834, %v412
  %v2837 = vmul.f32 %v2835, %v2835
  %v2838 = vsub.f32 %v2836, %v2837
  %v2839 = vmax.f32 %v2838, 0.0
  %v2840 = vadd.f32 %v2839, 1e-05
  %v2841 = vrsqrt.pop %v2840
  %v2842 = vsub.f32 %v2823, %v2835
  %v2843 = vmul.f32 %v2842, %v2841
  %v2844 = vmul.f32 %v2843, %v552
  %v2845 = vadd.f32 %v2844, %v557
  %v2846 = vtanh.pop %v2845
  %v2847 = vsub.f32 %v2846, %v2673
  %v2848 = vmul.f32 %v2766, %v2847
  %v2849 = vadd.f32 %v2673, %v2848
  %s2850 = scalar_lea.vmem %s7, 104
  %2851 = vst.msk [vmem:[%s2850] sm:$0xff] %vm106, %v2849
  %v2852 = vpack.c.bf16 %v2849, %v2849
  %s2853 = scalar_lea.vmem [#allocation2], 112
  %v2854 = vld [vmem:[%s2853] sm:$0xff]
  %v2856 = vsel %vm106, %v2852, 0
  %2858 = vmatprep.subr.bf16.mxu0 0
  %2859 = vmatpush1.bf16.msra.mxu0 %v344
  %2860 = vmatprep.subr.bf16.mxu0 0
  %2861 = vmatpush1.bf16.msra.mxu0 %v345
  %2862 = vmatprep.subr.bf16.mxu0 0
  %2863 = vmatpush1.bf16.msra.mxu0 0
  %2864 = vmatprep.subr.bf16.mxu0 0
  %2865 = vmatpush1.bf16.msra.mxu0 0
  %2866 = vmatprep.subr.bf16.mxu0 0
  %2867 = vmatpush1.bf16.msra.mxu0 0
  %2868 = vmatprep.subr.bf16.mxu0 0
  %2869 = vmatpush1.bf16.msra.mxu0 0
  %2870 = vmatprep.subr.bf16.mxu0 0
  %2871 = vmatpush1.bf16.msra.mxu0 0
  %2872 = vmatprep.subr.bf16.mxu0 0
  %2873 = vmatpush1.bf16.msra.mxu0 0
  %2874 = vmatprep.subr.bf16.mxu0 0
  %2875 = vmatpush1.bf16.msra.mxu0 0
  %2876 = vmatprep.subr.bf16.mxu0 0
  %2877 = vmatpush1.bf16.msra.mxu0 0
  %2878 = vmatprep.subr.bf16.mxu0 0
  %2879 = vmatpush1.bf16.msra.mxu0 0
  %2880 = vmatprep.subr.bf16.mxu0 0
  %2881 = vmatpush1.bf16.msra.mxu0 0
  %2882 = vmatprep.subr.bf16.mxu0 0
  %2883 = vmatpush1.bf16.msra.mxu0 0
  %2884 = vmatprep.subr.bf16.mxu0 0
  %2885 = vmatpush1.bf16.msra.mxu0 0
  %2886 = vmatprep.subr.bf16.mxu0 0
  %2887 = vmatpush1.bf16.msra.mxu0 0
  %2888 = vmatprep.subr.bf16.mxu0 0
  %2889 = vmatpush1.bf16.msra.mxu0 0
  %2890 = vmatprep.mubr.bf16.mxu0 0
  %2891 = vmatmul.mubr.bf16.gmra.mrb[0].mxu0 %v2856
  %v2892 = vpop.f32.mrb[0].mxu0
  %v2893 = vadd.f32 %v2854, %v2892
  %v2894 = vpop.f32.mrb[0].mxu0
  %v2895 = vpop.f32.mrb[0].mxu0
  %v2896 = vpop.f32.mrb[0].mxu0
  %2897 = vdwg.mxu0
  %v2898 = vmul.f32 %v2893, %v2893
  %2900 = vrot.lane.b32.xlu0 %v2893, 96
  %v2901 = vpop.permute.xlu0 %2900
  %2904 = vrot.lane.b32.xlu0 %v2898, 96
  %v2905 = vpop.permute.xlu0 %2904
  %v2907 = vsel %vm106, %v2893, 0.0
  %2908 = vadd.xlane.f32.xlu0 %v2907
  %v2909 = vpop.xlane.xlu0 %2908
  %v2910 = vsel %vm106, %v2901, 0.0
  %2911 = vadd.xlane.f32.xlu0 %v2910
  %v2912 = vpop.xlane.xlu0 %2911
  %v2913 = vsel %vm106, %v2898, 0.0
  %2914 = vadd.xlane.f32.xlu0 %v2913
  %v2915 = vpop.xlane.xlu0 %2914
  %v2916 = vsel %vm106, %v2905, 0.0
  %2917 = vadd.xlane.f32.xlu0 %v2916
  %v2918 = vpop.xlane.xlu0 %2917
  %v2919 = vmul.f32 %v2909, %v412
  %v2920 = vmul.f32 %v2912, %v412
  %v2921 = vmul.f32 %v2915, %v412
  %v2922 = vmul.f32 %v2918, %v412
  %v2923 = vmul.f32 %v2919, %v2919
  %v2924 = vsub.f32 %v2921, %v2923
  %v2925 = vmax.f32 %v2924, 0.0
  %v2926 = vadd.f32 %v2925, 1e-05
  %v2927 = vrsqrt.pop %v2926
  %v2928 = vmul.f32 %v2920, %v2920
  %v2929 = vsub.f32 %v2922, %v2928
  %v2930 = vmax.f32 %v2929, 0.0
  %v2931 = vadd.f32 %v2930, 1e-05
  %v2932 = vrsqrt.pop %v2931
  %v2933 = vsub.f32 %v2893, %v2919
  %v2934 = vmul.f32 %v2933, %v2927
  %v2935 = vmul.f32 %v2934, %v432
  %v2936 = vadd.f32 %v2935, %v437
  %v2937 = vxor.u32 %v2936, 2147483648
  %v2938 = vmul.f32 %v2937, 1.442695
  %v2939 = vpow.pop %v2938
  %v2940 = vadd.f32 %v2939, 1.0
  %v2941 = vrcp.pop %v2940
  %v2942 = vmul.f32 1.0, %v2941
  %v2943 = vsub.f32 %v2893, %v2920
  %v2944 = vmul.f32 %v2943, %v2932
  %v2945 = vmul.f32 %v2944, %v453
  %v2946 = vadd.f32 %v2945, %v462
  %v2947 = vxor.u32 %v2946, 2147483648
  %v2948 = vmul.f32 %v2947, 1.442695
  %v2949 = vpow.pop %v2948
  %v2950 = vadd.f32 %v2949, 1.0
  %v2951 = vrcp.pop %v2950
  %v2952 = vmul.f32 1.0, %v2951
  %2954 = vrot.lane.b32.xlu0 %v2952, 96
  %v2955 = vpop.permute.xlu0 %2954
  %v2957 = vmul.f32 %v2849, %v2955
  %v2958 = vpack.c.bf16 %v2957, %v2957
  %s2959 = scalar_lea.vmem [#allocation3], 112
  %v2960 = vld [vmem:[%s2959] sm:$0xff]
  %v2962 = vsel %vm106, %v2958, 0
  %2964 = vmatprep.subr.bf16.mxu0 0
  %2965 = vmatpush1.bf16.msra.mxu0 %v486
  %2966 = vmatprep.subr.bf16.mxu0 0
  %2967 = vmatpush1.bf16.msra.mxu0 %v487
  %2968 = vmatprep.subr.bf16.mxu0 0
  %2969 = vmatpush1.bf16.msra.mxu0 0
  %2970 = vmatprep.subr.bf16.mxu0 0
  %2971 = vmatpush1.bf16.msra.mxu0 0
  %2972 = vmatprep.subr.bf16.mxu0 0
  %2973 = vmatpush1.bf16.msra.mxu0 0
  %2974 = vmatprep.subr.bf16.mxu0 0
  %2975 = vmatpush1.bf16.msra.mxu0 0
  %2976 = vmatprep.subr.bf16.mxu0 0
  %2977 = vmatpush1.bf16.msra.mxu0 0
  %2978 = vmatprep.subr.bf16.mxu0 0
  %2979 = vmatpush1.bf16.msra.mxu0 0
  %2980 = vmatprep.subr.bf16.mxu0 0
  %2981 = vmatpush1.bf16.msra.mxu0 0
  %2982 = vmatprep.subr.bf16.mxu0 0
  %2983 = vmatpush1.bf16.msra.mxu0 0
  %2984 = vmatprep.subr.bf16.mxu0 0
  %2985 = vmatpush1.bf16.msra.mxu0 0
  %2986 = vmatprep.subr.bf16.mxu0 0
  %2987 = vmatpush1.bf16.msra.mxu0 0
  %2988 = vmatprep.subr.bf16.mxu0 0
  %2989 = vmatpush1.bf16.msra.mxu0 0
  %2990 = vmatprep.subr.bf16.mxu0 0
  %2991 = vmatpush1.bf16.msra.mxu0 0
  %2992 = vmatprep.subr.bf16.mxu0 0
  %2993 = vmatpush1.bf16.msra.mxu0 0
  %2994 = vmatprep.subr.bf16.mxu0 0
  %2995 = vmatpush1.bf16.msra.mxu0 0
  %2996 = vmatprep.mubr.bf16.mxu0 0
  %2997 = vmatmul.mubr.bf16.gmra.mrb[0].mxu0 %v2962
  %v2998 = vpop.f32.mrb[0].mxu0
  %v2999 = vadd.f32 %v2960, %v2998
  %v3000 = vpop.f32.mrb[0].mxu0
  %v3001 = vpop.f32.mrb[0].mxu0
  %v3002 = vpop.f32.mrb[0].mxu0
  %3003 = vdwg.mxu0
  %v3004 = vmul.f32 %v2999, %v2999
  %v3005 = vsel %vm106, %v2999, 0.0
  %3006 = vadd.xlane.f32.xlu0 %v3005
  %v3007 = vpop.xlane.xlu0 %3006
  %v3008 = vsel %vm106, %v3004, 0.0
  %3009 = vadd.xlane.f32.xlu0 %v3008
  %v3010 = vpop.xlane.xlu0 %3009
  %v3011 = vmul.f32 %v3007, %v412
  %v3012 = vmul.f32 %v3010, %v412
  %v3013 = vmul.f32 %v3011, %v3011
  %v3014 = vsub.f32 %v3012, %v3013
  %v3015 = vmax.f32 %v3014, 0.0
  %v3016 = vadd.f32 %v3015, 1e-05
  %v3017 = vrsqrt.pop %v3016
  %v3018 = vsub.f32 %v2999, %v3011
  %v3019 = vmul.f32 %v3018, %v3017
  %v3020 = vmul.f32 %v3019, %v552
  %v3021 = vadd.f32 %v3020, %v557
  %v3022 = vtanh.pop %v3021
  %v3023 = vsub.f32 %v3022, %v2849
  %v3024 = vmul.f32 %v2942, %v3023
  %v3025 = vadd.f32 %v2849, %v3024
  %s3026 = scalar_lea.vmem %s7, 112
  %3027 = vst.msk [vmem:[%s3026] sm:$0xff] %vm106, %v3025
  %v3028 = vpack.c.bf16 %v3025, %v3025
  %s3029 = scalar_lea.vmem [#allocation2], 120
  %v3030 = vld [vmem:[%s3029] sm:$0xff]
  %v3032 = vsel %vm106, %v3028, 0
  %3034 = vmatprep.subr.bf16.mxu0 0
  %3035 = vmatpush1.bf16.msra.mxu0 %v344
  %3036 = vmatprep.subr.bf16.mxu0 0
  %3037 = vmatpush1.bf16.msra.mxu0 %v345
  %3038 = vmatprep.subr.bf16.mxu0 0
  %3039 = vmatpush1.bf16.msra.mxu0 0
  %3040 = vmatprep.subr.bf16.mxu0 0
  %3041 = vmatpush1.bf16.msra.mxu0 0
  %3042 = vmatprep.subr.bf16.mxu0 0
  %3043 = vmatpush1.bf16.msra.mxu0 0
  %3044 = vmatprep.subr.bf16.mxu0 0
  %3045 = vmatpush1.bf16.msra.mxu0 0
  %3046 = vmatprep.subr.bf16.mxu0 0
  %3047 = vmatpush1.bf16.msra.mxu0 0
  %3048 = vmatprep.subr.bf16.mxu0 0
  %3049 = vmatpush1.bf16.msra.mxu0 0
  %3050 = vmatprep.subr.bf16.mxu0 0
  %3051 = vmatpush1.bf16.msra.mxu0 0
  %3052 = vmatprep.subr.bf16.mxu0 0
  %3053 = vmatpush1.bf16.msra.mxu0 0
  %3054 = vmatprep.subr.bf16.mxu0 0
  %3055 = vmatpush1.bf16.msra.mxu0 0
  %3056 = vmatprep.subr.bf16.mxu0 0
  %3057 = vmatpush1.bf16.msra.mxu0 0
  %3058 = vmatprep.subr.bf16.mxu0 0
  %3059 = vmatpush1.bf16.msra.mxu0 0
  %3060 = vmatprep.subr.bf16.mxu0 0
  %3061 = vmatpush1.bf16.msra.mxu0 0
  %3062 = vmatprep.subr.bf16.mxu0 0
  %3063 = vmatpush1.bf16.msra.mxu0 0
  %3064 = vmatprep.subr.bf16.mxu0 0
  %3065 = vmatpush1.bf16.msra.mxu0 0
  %3066 = vmatprep.mubr.bf16.mxu0 0
  %3067 = vmatmul.mubr.bf16.gmra.mrb[0].mxu0 %v3032
  %v3068 = vpop.f32.mrb[0].mxu0
  %v3069 = vadd.f32 %v3030, %v3068
  %v3070 = vpop.f32.mrb[0].mxu0
  %v3071 = vpop.f32.mrb[0].mxu0
  %v3072 = vpop.f32.mrb[0].mxu0
  %3073 = vdwg.mxu0
  %v3074 = vmul.f32 %v3069, %v3069
  %3076 = vrot.lane.b32.xlu0 %v3069, 96
  %v3077 = vpop.permute.xlu0 %3076
  %3080 = vrot.lane.b32.xlu0 %v3074, 96
  %v3081 = vpop.permute.xlu0 %3080
  %v3083 = vsel %vm106, %v3069, 0.0
  %3084 = vadd.xlane.f32.xlu0 %v3083
  %v3085 = vpop.xlane.xlu0 %3084
  %v3086 = vsel %vm106, %v3077, 0.0
  %3087 = vadd.xlane.f32.xlu0 %v3086
  %v3088 = vpop.xlane.xlu0 %3087
  %v3089 = vsel %vm106, %v3074, 0.0
  %3090 = vadd.xlane.f32.xlu0 %v3089
  %v3091 = vpop.xlane.xlu0 %3090
  %v3092 = vsel %vm106, %v3081, 0.0
  %3093 = vadd.xlane.f32.xlu0 %v3092
  %v3094 = vpop.xlane.xlu0 %3093
  %v3095 = vmul.f32 %v3085, %v412
  %v3096 = vmul.f32 %v3088, %v412
  %v3097 = vmul.f32 %v3091, %v412
  %v3098 = vmul.f32 %v3094, %v412
  %v3099 = vmul.f32 %v3095, %v3095
  %v3100 = vsub.f32 %v3097, %v3099
  %v3101 = vmax.f32 %v3100, 0.0
  %v3102 = vadd.f32 %v3101, 1e-05
  %v3103 = vrsqrt.pop %v3102
  %v3104 = vmul.f32 %v3096, %v3096
  %v3105 = vsub.f32 %v3098, %v3104
  %v3106 = vmax.f32 %v3105, 0.0
  %v3107 = vadd.f32 %v3106, 1e-05
  %v3108 = vrsqrt.pop %v3107
  %v3109 = vsub.f32 %v3069, %v3095
  %v3110 = vmul.f32 %v3109, %v3103
  %v3111 = vmul.f32 %v3110, %v432
  %v3112 = vadd.f32 %v3111, %v437
  %v3113 = vxor.u32 %v3112, 2147483648
  %v3114 = vmul.f32 %v3113, 1.442695
  %v3115 = vpow.pop %v3114
  %v3116 = vadd.f32 %v3115, 1.0
  %v3117 = vrcp.pop %v3116
  %v3118 = vmul.f32 1.0, %v3117
  %v3119 = vsub.f32 %v3069, %v3096
  %v3120 = vmul.f32 %v3119, %v3108
  %v3121 = vmul.f32 %v3120, %v453
  %v3122 = vadd.f32 %v3121, %v462
  %v3123 = vxor.u32 %v3122, 2147483648
  %v3124 = vmul.f32 %v3123, 1.442695
  %v3125 = vpow.pop %v3124
  %v3126 = vadd.f32 %v3125, 1.0
  %v3127 = vrcp.pop %v3126
  %v3128 = vmul.f32 1.0, %v3127
  %3130 = vrot.lane.b32.xlu0 %v3128, 96
  %v3131 = vpop.permute.xlu0 %3130
  %v3133 = vmul.f32 %v3025, %v3131
  %v3134 = vpack.c.bf16 %v3133, %v3133
  %s3135 = scalar_lea.vmem [#allocation3], 120
  %v3136 = vld [vmem:[%s3135] sm:$0xff]
  %v3138 = vsel %vm106, %v3134, 0
  %3140 = vmatprep.subr.bf16.mxu0 0
  %3141 = vmatpush1.bf16.msra.mxu0 %v486
  %3142 = vmatprep.subr.bf16.mxu0 0
  %3143 = vmatpush1.bf16.msra.mxu0 %v487
  %3144 = vmatprep.subr.bf16.mxu0 0
  %3145 = vmatpush1.bf16.msra.mxu0 0
  %3146 = vmatprep.subr.bf16.mxu0 0
  %3147 = vmatpush1.bf16.msra.mxu0 0
  %3148 = vmatprep.subr.bf16.mxu0 0
  %3149 = vmatpush1.bf16.msra.mxu0 0
  %3150 = vmatprep.subr.bf16.mxu0 0
  %3151 = vmatpush1.bf16.msra.mxu0 0
  %3152 = vmatprep.subr.bf16.mxu0 0
  %3153 = vmatpush1.bf16.msra.mxu0 0
  %3154 = vmatprep.subr.bf16.mxu0 0
  %3155 = vmatpush1.bf16.msra.mxu0 0
  %3156 = vmatprep.subr.bf16.mxu0 0
  %3157 = vmatpush1.bf16.msra.mxu0 0
  %3158 = vmatprep.subr.bf16.mxu0 0
  %3159 = vmatpush1.bf16.msra.mxu0 0
  %3160 = vmatprep.subr.bf16.mxu0 0
  %3161 = vmatpush1.bf16.msra.mxu0 0
  %3162 = vmatprep.subr.bf16.mxu0 0
  %3163 = vmatpush1.bf16.msra.mxu0 0
  %3164 = vmatprep.subr.bf16.mxu0 0
  %3165 = vmatpush1.bf16.msra.mxu0 0
  %3166 = vmatprep.subr.bf16.mxu0 0
  %3167 = vmatpush1.bf16.msra.mxu0 0
  %3168 = vmatprep.subr.bf16.mxu0 0
  %3169 = vmatpush1.bf16.msra.mxu0 0
  %3170 = vmatprep.subr.bf16.mxu0 0
  %3171 = vmatpush1.bf16.msra.mxu0 0
  %3172 = vmatprep.mubr.bf16.mxu0 0
  %3173 = vmatmul.mubr.bf16.gmra.mrb[0].mxu0 %v3138
  %v3174 = vpop.f32.mrb[0].mxu0
  %v3175 = vadd.f32 %v3136, %v3174
  %v3176 = vpop.f32.mrb[0].mxu0
  %v3177 = vpop.f32.mrb[0].mxu0
  %v3178 = vpop.f32.mrb[0].mxu0
  %3179 = vdwg.mxu0
  %v3180 = vmul.f32 %v3175, %v3175
  %v3181 = vsel %vm106, %v3175, 0.0
  %3182 = vadd.xlane.f32.xlu0 %v3181
  %v3183 = vpop.xlane.xlu0 %3182
  %v3184 = vsel %vm106, %v3180, 0.0
  %3185 = vadd.xlane.f32.xlu0 %v3184
  %v3186 = vpop.xlane.xlu0 %3185
  %v3187 = vmul.f32 %v3183, %v412
  %v3188 = vmul.f32 %v3186, %v412
  %v3189 = vmul.f32 %v3187, %v3187
  %v3190 = vsub.f32 %v3188, %v3189
  %v3191 = vmax.f32 %v3190, 0.0
  %v3192 = vadd.f32 %v3191, 1e-05
  %v3193 = vrsqrt.pop %v3192
  %v3194 = vsub.f32 %v3175, %v3187
  %v3195 = vmul.f32 %v3194, %v3193
  %v3196 = vmul.f32 %v3195, %v552
  %v3197 = vadd.f32 %v3196, %v557
  %v3198 = vtanh.pop %v3197
  %v3199 = vsub.f32 %v3198, %v3025
  %v3200 = vmul.f32 %v3118, %v3199
  %v3201 = vadd.f32 %v3025, %v3200
  %s3202 = scalar_lea.vmem %s7, 120
  %3203 = vst.msk [vmem:[%s3202] sm:$0xff] %vm106, %v3201
  %v3204 = vld [vmem:[%s7] sm:$0xff]
  %v3205 = vld [vmem:[%s7 + $0x8] sm:$0xff]
  %v3206 = vld [vmem:[%s7 + $0x10] sm:$0xff]
  %v3207 = vld [vmem:[%s7 + $0x18] sm:$0xff]
  %v3208 = vld [vmem:[%s7 + $0x20] sm:$0xff]
  %v3209 = vld [vmem:[%s7 + $0x28] sm:$0xff]
  %v3210 = vld [vmem:[%s7 + $0x30] sm:$0xff]
  %v3211 = vld [vmem:[%s7 + $0x38] sm:$0xff]
  %v3212 = vld [vmem:[%s7 + $0x40] sm:$0xff]
  %v3213 = vld [vmem:[%s7 + $0x48] sm:$0xff]
  %v3214 = vld [vmem:[%s7 + $0x50] sm:$0xff]
  %v3215 = vld [vmem:[%s7 + $0x58] sm:$0xff]
  %v3216 = vld [vmem:[%s7 + $0x60] sm:$0xff]
  %v3217 = vld [vmem:[%s7 + $0x68] sm:$0xff]
  %v3218 = vld [vmem:[%s7 + $0x70] sm:$0xff]
  %v3219 = vld [vmem:[%s7 + $0x78] sm:$0xff]
  %v3220 = vpack.c.bf16 %v3205, %v3204
  %v3221 = vpack.c.bf16 %v3207, %v3206
  %v3222 = vpack.c.bf16 %v3209, %v3208
  %v3223 = vpack.c.bf16 %v3211, %v3210
  %v3224 = vpack.c.bf16 %v3213, %v3212
  %v3225 = vpack.c.bf16 %v3215, %v3214
  %v3226 = vpack.c.bf16 %v3217, %v3216
  %v3227 = vpack.c.bf16 %v3219, %v3218
  %v3228 = vld [vmem:[%s5] sm:$0xf]
  %v3229 = vld [vmem:[%s5 + $0x4] sm:$0xf]
  %v3230 = vld [vmem:[%s5 + $0x8] sm:$0xf]
  %v3231 = vld [vmem:[%s5 + $0xc] sm:$0xf]
  %v3232 = vlaneseq
  %v3233 = vshrl.u32 %v3232, 7
  %v3234 = vsub.s32 6, %v3233
  %v3235 = vrot.slane %v29, %v3234
  %v3240 = vunpack.c.l.b16 %v3228
  %v3241 = vunpack.c.l.b16 %v3229
  %v3242 = vunpack.c.l.b16 %v3230
  %v3243 = vunpack.c.l.b16 %v3231
  %v3244 = vpack.c.b16 %v3241, %v3240
  %v3245 = vpack.c.b16 %v3243, %v3242
  %v3249 = vsel %vm106, %v3220, 0
  %v3252 = vsel %vm106, %v3221, 0
  %v3255 = vsel %vm106, %v3222, 0
  %v3258 = vsel %vm106, %v3223, 0
  %v3261 = vsel %vm106, %v3224, 0
  %v3264 = vsel %vm106, %v3225, 0
  %v3267 = vsel %vm106, %v3226, 0
  %v3270 = vsel %vm106, %v3227, 0
  %3272 = vmatprep.subr.bf16.mxu0 0
  %3273 = vmatpush1.bf16.msra.mxu0 %v3244
  %3274 = vmatprep.subr.bf16.mxu0 0
  %3275 = vmatpush1.bf16.msra.mxu0 %v3245
  %3276 = vmatprep.subr.bf16.mxu0 0
  %3277 = vmatpush1.bf16.msra.mxu0 0
  %3278 = vmatprep.subr.bf16.mxu0 0
  %3279 = vmatpush1.bf16.msra.mxu0 0
  %3280 = vmatprep.subr.bf16.mxu0 0
  %3281 = vmatpush1.bf16.msra.mxu0 0
  %3282 = vmatprep.subr.bf16.mxu0 0
  %3283 = vmatpush1.bf16.msra.mxu0 0
  %3284 = vmatprep.subr.bf16.mxu0 0
  %3285 = vmatpush1.bf16.msra.mxu0 0
  %3286 = vmatprep.subr.bf16.mxu0 0
  %3287 = vmatpush1.bf16.msra.mxu0 0
  %3288 = vmatprep.subr.bf16.mxu0 0
  %3289 = vmatpush1.bf16.msra.mxu0 0
  %3290 = vmatprep.subr.bf16.mxu0 0
  %3291 = vmatpush1.bf16.msra.mxu0 0
  %3292 = vmatprep.subr.bf16.mxu0 0
  %3293 = vmatpush1.bf16.msra.mxu0 0
  %3294 = vmatprep.subr.bf16.mxu0 0
  %3295 = vmatpush1.bf16.msra.mxu0 0
  %3296 = vmatprep.subr.bf16.mxu0 0
  %3297 = vmatpush1.bf16.msra.mxu0 0
  %3298 = vmatprep.subr.bf16.mxu0 0
  %3299 = vmatpush1.bf16.msra.mxu0 0
  %3300 = vmatprep.subr.bf16.mxu0 0
  %3301 = vmatpush1.bf16.msra.mxu0 0
  %3302 = vmatprep.subr.bf16.mxu0 0
  %3303 = vmatpush1.bf16.msra.mxu0 0
  %3304 = vmatprep.mubr.bf16.mxu0 0
  %3305 = vmatmul.mubr.bf16.gmra.mrb[0].mxu0 %v3249
  %v3306 = vpop.f32.mrb[0].mxu0
  %v3307 = vadd.f32 %v3235, %v3306
  %v3308 = vpop.f32.mrb[0].mxu0
  %v3309 = vpop.f32.mrb[0].mxu0
  %v3310 = vadd.f32 %v3235, %v3309
  %v3311 = vpop.f32.mrb[0].mxu0
  %3312 = vmatprep.mubr.bf16.mxu0 0
  %3313 = vmatmul.mubr.bf16.gmra.mrb[0].mxu0 %v3252
  %v3314 = vpop.f32.mrb[0].mxu0
  %v3315 = vadd.f32 %v3235, %v3314
  %v3316 = vpop.f32.mrb[0].mxu0
  %v3317 = vpop.f32.mrb[0].mxu0
  %v3318 = vadd.f32 %v3235, %v3317
  %v3319 = vpop.f32.mrb[0].mxu0
  %3320 = vmatprep.mubr.bf16.mxu0 0
  %3321 = vmatmul.mubr.bf16.gmra.mrb[0].mxu0 %v3255
  %v3322 = vpop.f32.mrb[0].mxu0
  %v3323 = vadd.f32 %v3235, %v3322
  %v3324 = vpop.f32.mrb[0].mxu0
  %v3325 = vpop.f32.mrb[0].mxu0
  %v3326 = vadd.f32 %v3235, %v3325
  %v3327 = vpop.f32.mrb[0].mxu0
  %3328 = vmatprep.mubr.bf16.mxu0 0
  %3329 = vmatmul.mubr.bf16.gmra.mrb[0].mxu0 %v3258
  %v3330 = vpop.f32.mrb[0].mxu0
  %v3331 = vadd.f32 %v3235, %v3330
  %v3332 = vpop.f32.mrb[0].mxu0
  %v3333 = vpop.f32.mrb[0].mxu0
  %v3334 = vadd.f32 %v3235, %v3333
  %v3335 = vpop.f32.mrb[0].mxu0
  %3336 = vmatprep.mubr.bf16.mxu0 0
  %3337 = vmatmul.mubr.bf16.gmra.mrb[0].mxu0 %v3261
  %v3338 = vpop.f32.mrb[0].mxu0
  %v3339 = vadd.f32 %v3235, %v3338
  %v3340 = vpop.f32.mrb[0].mxu0
  %v3341 = vpop.f32.mrb[0].mxu0
  %v3342 = vadd.f32 %v3235, %v3341
  %v3343 = vpop.f32.mrb[0].mxu0
  %3344 = vmatprep.mubr.bf16.mxu0 0
  %3345 = vmatmul.mubr.bf16.gmra.mrb[0].mxu0 %v3264
  %v3346 = vpop.f32.mrb[0].mxu0
  %v3347 = vadd.f32 %v3235, %v3346
  %v3348 = vpop.f32.mrb[0].mxu0
  %v3349 = vpop.f32.mrb[0].mxu0
  %v3350 = vadd.f32 %v3235, %v3349
  %v3351 = vpop.f32.mrb[0].mxu0
  %3352 = vmatprep.mubr.bf16.mxu0 0
  %3353 = vmatmul.mubr.bf16.gmra.mrb[0].mxu0 %v3267
  %v3354 = vpop.f32.mrb[0].mxu0
  %v3355 = vadd.f32 %v3235, %v3354
  %v3356 = vpop.f32.mrb[0].mxu0
  %v3357 = vpop.f32.mrb[0].mxu0
  %v3358 = vadd.f32 %v3235, %v3357
  %v3359 = vpop.f32.mrb[0].mxu0
  %3360 = vmatprep.mubr.bf16.mxu0 0
  %3361 = vmatmul.mubr.bf16.gmra.mrb[0].mxu0 %v3270
  %v3362 = vpop.f32.mrb[0].mxu0
  %v3363 = vadd.f32 %v3235, %v3362
  %v3364 = vpop.f32.mrb[0].mxu0
  %v3365 = vpop.f32.mrb[0].mxu0
  %v3366 = vadd.f32 %v3235, %v3365
  %v3367 = vpop.f32.mrb[0].mxu0
  %3368 = vdwg.mxu0
  %3369 = vst [vmem:[%s8] sm:$0xff] %v3307
  %3370 = vst [vmem:[%s8 + $0x8] sm:$0xff] %v3310
  %3371 = vst [vmem:[%s8 + $0x10] sm:$0xff] %v3315
  %3372 = vst [vmem:[%s8 + $0x18] sm:$0xff] %v3318
  %3373 = vst [vmem:[%s8 + $0x20] sm:$0xff] %v3323
  %3374 = vst [vmem:[%s8 + $0x28] sm:$0xff] %v3326
  %3375 = vst [vmem:[%s8 + $0x30] sm:$0xff] %v3331
  %3376 = vst [vmem:[%s8 + $0x38] sm:$0xff] %v3334
  %3377 = vst [vmem:[%s8 + $0x40] sm:$0xff] %v3339
  %3378 = vst [vmem:[%s8 + $0x48] sm:$0xff] %v3342
  %3379 = vst [vmem:[%s8 + $0x50] sm:$0xff] %v3347
  %3380 = vst [vmem:[%s8 + $0x58] sm:$0xff] %v3350
  %3381 = vst [vmem:[%s8 + $0x60] sm:$0xff] %v3355
  %3382 = vst [vmem:[%s8 + $0x68] sm:$0xff] %v3358
  %3383 = vst [vmem:[%s8 + $0x70] sm:$0xff] %v3363
  %3384 = vst [vmem:[%s8 + $0x78] sm:$0xff] %v3366
  // Predicated region
  $region30: #{gru_forward.1} parent=0 // pred_check
    _
  $region31: #{gru_forward.1} parent=0 // pred_check_branch
    %3386 = sbr.rel (0) target = $region33
  $region32: #{gru_forward.1} parent=0 // pred_region
    _
  $region33: #{gru_forward.1} parent=0 // pred_fallthru
    _
  // Predicated region
  $region34: #{gru_forward.1} parent=0 // pred_check
    _
  $region35: #{gru_forward.1} parent=0 // pred_check_branch
    %3388 = sbr.rel (0) target = $region37
  $region36: #{gru_forward.1} parent=0 // pred_region
    _
  $region37: #{gru_forward.1} parent=0 // pred_fallthru
    _
  // Predicated region
  $region38: #{gru_forward.1} parent=0 // pred_check
    _
  $region39: #{gru_forward.1} parent=0 // pred_check_branch
    %3390 = sbr.rel (0) target = $region41
  $region40: #{gru_forward.1} parent=0 // pred_region
    _
  $region41: #{gru_forward.1} parent=0 // pred_fallthru
    _
  // Predicated region
  $region42: #{gru_forward.1} parent=0 // pred_check
    _
  $region43: #{gru_forward.1} parent=0 // pred_check_branch
    %3392 = sbr.rel (0) target = $region45
  $region44: #{gru_forward.1} parent=0 // pred_region
    _
  $region45: #{gru_forward.1} parent=0 // pred_fallthru
    _

</llo_original>
